<compile_context>
chip_gen: v5e
topology: v5e:2x2
jax: 0.10.0
libtpu: 0.0.40
codegen_flags: <defaults>
</compile_context>

<pallas_src>
import functools

import jax
import jax.numpy as jnp
from jax import lax
from jax.experimental import pallas as pl
from jax.experimental.pallas import tpu as pltpu


def attention_kernel(enc_ref, dec_ref, we_ref, be_ref, wd_ref, bd_ref, wf_ref,
                     awe_ref, alpha_ref, *, valid_p, approx_recip):
    Bt, Pp, E = enc_ref.shape
    A = we_ref.shape[1]

    enc = enc_ref[...]                                        # (Bt, Pp, E), maybe bf16

    # Encoder projection on the MXU with M = Bt*Pp rows, f32 accumulation.
    # Pp is a multiple of 8 (wrapper pads), so this reshape is layout-preserving.
    att1 = jnp.dot(enc.reshape(Bt * Pp, E), we_ref[...],
                   preferred_element_type=jnp.float32)        # (Bt*Pp, A) f32

    # Decoder projection; fold both linear biases into the (Bt, A) term once.
    att2 = jnp.dot(dec_ref[...], wd_ref[...],
                   preferred_element_type=jnp.float32)
    att2 = att2 + (be_ref[...] + bd_ref[...])                 # (Bt, A) f32

    # relu(att1 + att2.unsqueeze(1)) — all f32 elementwise.
    h = jnp.maximum(att1.reshape(Bt, Pp, A) + att2[:, None, :], 0.0)

    # full_att (out_features = 1): VPU multiply + lane reduce instead of an
    # N=1 MXU matmul; its scalar bias is dropped (softmax shift-invariance).
    scores = jnp.sum(h * wf_ref[...], axis=-1)                # (Bt, Pp) f32

    # Mask padded pixels (zero-padded enc rows) to -inf so alpha there is 0.
    if valid_p < Pp:
        pix = lax.broadcasted_iota(jnp.int32, (Bt, Pp), 1)
        scores = jnp.where(pix < valid_p, scores, -jnp.inf)

    # Numerically-stable softmax over the pixel axis.
    m = jnp.max(scores, axis=-1, keepdims=True)               # (Bt, 1)
    e = jnp.exp(scores - m)                                    # (Bt, Pp)
    denom = jnp.sum(e, axis=-1, keepdims=True)                 # (Bt, 1)
    if approx_recip:
        alpha = e * pl.reciprocal(denom, approx=True)          # EUP slot
    else:
        alpha = e / denom                                      # exact f32 path

    # Attention-weighted encoding: sum_p alpha[b,p] * enc[b,p,:]  (f32 math).
    # TODO(synk): for very large Bt*Pp*E (v7x, real SAT sizes) accumulate awe
    # per-P-chunk into a (Bt,E) scratch instead of this full broadcast temp.
    awe_ref[...] = jnp.sum(enc.astype(jnp.float32) * alpha[:, :, None], axis=1)
    alpha_ref[...] = alpha                                     # lane-dense (Bt, Pp)


def _tpu_generation_config():
    """Generation-aware MXU fill target, VMEM limit and min parallel steps."""
    kind = ""
    try:
        kind = jax.devices()[0].device_kind.lower()
    except Exception:
        pass
    if "v7" in kind:                       # 64 MiB VMEM, 2 TensorCores/chip
        cfg = dict(target_rows=256, vmem_limit=48 << 20, min_grid_steps=2)
    elif "v6" in kind:                     # 128 MiB VMEM, 1 TC
        cfg = dict(target_rows=256, vmem_limit=64 << 20, min_grid_steps=1)
    elif "v5" in kind:                     # 128 MiB VMEM, 128-wide MXU, 1 TC
        cfg = dict(target_rows=128, vmem_limit=48 << 20, min_grid_steps=1)
    else:                                  # unknown: conservative, assume 2 TCs
        cfg = dict(target_rows=256, vmem_limit=48 << 20, min_grid_steps=2)
    # Never request more scoped VMEM than ~75% of physical capacity.
    try:
        cap = pltpu.get_tpu_info().vmem_capacity_bytes
        cfg["vmem_limit"] = min(cfg["vmem_limit"], int(cap * 0.75))
    except Exception:
        pass
    return cfg


def _choose_batch_tile(B, P_pad, E, D, A, *, item_bytes, target_rows,
                       budget_bytes, max_bt, buffered_weights):
    """Pick a batch tile Bt that divides B, keeps block sublane sizes legal
    (Bt % 8 == 0 or Bt == B), fills the MXU M dimension (Bt*P_pad >=
    target_rows when possible), keeps >= `min_grid_steps` grid steps, and whose
    full per-step VMEM footprint fits the budget."""

    def legal(bt):
        return B % bt == 0 and (bt % 8 == 0 or bt == B)

    w_bufs = 1 if buffered_weights else 2
    const_bytes = w_bufs * ((E * A + D * A) * item_bytes + 3 * A * 4)

    def footprint(bt):
        enc_blocks = 2 * bt * P_pad * E * item_bytes          # double-buffered input
        dec_blocks = 2 * bt * D * item_bytes
        out_blocks = 2 * (bt * E + bt * P_pad) * 4            # awe + alpha blocks
        acts = (2 * bt * P_pad * A                            # att1 + h (f32)
                + 2 * bt * P_pad * E                          # enc f32 + enc*alpha temp
                + bt * (E + A + 4 * P_pad)) * 4               # small temps
        return const_bytes + enc_blocks + dec_blocks + out_blocks + acts

    max_bt = max(1, min(B, max_bt))
    cands = [bt for bt in range(1, max_bt + 1)
             if legal(bt) and footprint(bt) <= budget_bytes]
    if not cands:
        legal_all = [bt for bt in range(1, B + 1) if legal(bt)]  # always has B
        small = [bt for bt in legal_all if bt <= max_bt]
        return min(small) if small else min(legal_all)
    filling = [bt for bt in cands if bt * P_pad >= target_rows]
    return min(filling) if filling else max(cands)


def _build_attention_call(*, B, P_pad, E, D, A, Bt, valid_p, approx_recip,
                          buffered_weights, vmem_limit, cost):
    kernel = functools.partial(attention_kernel, valid_p=valid_p,
                               approx_recip=approx_recip)

    def wspec(shape):
        imap = lambda b, _n=len(shape): (0,) * _n
        if buffered_weights:
            # Constant index map => single-buffered residency is enough.
            return pl.BlockSpec(shape, imap,
                                pipeline_mode=pl.Buffered(buffer_count=1))
        return pl.BlockSpec(shape, imap)

    return pl.pallas_call(
        kernel,
        out_shape=(
            jax.ShapeDtypeStruct((B, E), jnp.float32),
            jax.ShapeDtypeStruct((B, P_pad), jnp.float32),
        ),
        grid_spec=pltpu.PrefetchScalarGridSpec(
            num_scalar_prefetch=0,
            grid=(B // Bt,),
            in_specs=[
                pl.BlockSpec((Bt, P_pad, E), lambda b: (b, 0, 0)),  # encoder_out
                pl.BlockSpec((Bt, D), lambda b: (b, 0)),            # decoder_hidden
                wspec((E, A)),                                       # W_enc^T
                wspec((1, A)),                                       # b_enc
                wspec((D, A)),                                       # W_dec^T
                wspec((1, A)),                                       # b_dec
                wspec((1, A)),                                       # W_full (row)
            ],
            out_specs=[
                pl.BlockSpec((Bt, E), lambda b: (b, 0)),             # weighted enc
                pl.BlockSpec((Bt, P_pad), lambda b: (b, 0)),         # alpha
            ],
        ),
        compiler_params=pltpu.CompilerParams(
            dimension_semantics=("parallel",),
            vmem_limit_bytes=vmem_limit),
        cost_estimate=cost,
    )


def attention_forward(encoder_out, decoder_hidden, params, *,
                      batch_tile=None, mxu_dtype=jnp.bfloat16):
    """encoder_out: (B, P, E) f32, decoder_hidden: (B, D) f32.

    mxu_dtype: dtype for MXU operands (bf16 default for throughput, None/f32
    for exact-f32 semantics).  Accumulation and elementwise math are f32 either
    way.  Returns (awe (B,E) f32, alpha (B,P) f32)."""
    B, P, E = encoder_out.shape
    D = decoder_hidden.shape[1]
    we_t, be, wd_t, bd, wf, bf = params   # bf unused: softmax shift-invariance
    A = we_t.shape[1]

    cfg = _tpu_generation_config()

    if mxu_dtype is None:
        mxu_dtype = encoder_out.dtype
    mxu_dtype = jnp.dtype(mxu_dtype)
    approx_recip = (mxu_dtype == jnp.dtype(jnp.bfloat16))

    enc_in = encoder_out.astype(mxu_dtype)
    dec_in = decoder_hidden.astype(mxu_dtype)
    we_in = we_t.astype(mxu_dtype)
    wd_in = wd_t.astype(mxu_dtype)

    # Pad pixel axis to a multiple of 8 so in-kernel reshapes stay layout-
    # preserving (real SAT P=196); padded rows are masked out in-kernel.
    P_pad = ((P + 7) // 8) * 8
    if P_pad != P:
        enc_in = jnp.pad(enc_in, ((0, 0), (0, P_pad - P), (0, 0)))

    item = mxu_dtype.itemsize
    budget = int(cfg["vmem_limit"] * 0.8)
    max_bt = max(1, B // cfg["min_grid_steps"])

    if batch_tile is not None:
        Bt = batch_tile
    else:
        Bt = _choose_batch_tile(B, P_pad, E, D, A, item_bytes=item,
                                target_rows=cfg["target_rows"],
                                budget_bytes=budget, max_bt=max_bt,
                                buffered_weights=True)
    assert B % Bt == 0

    cost = pl.CostEstimate(
        flops=2 * B * P_pad * E * A + 2 * B * D * A
              + 2 * B * P_pad * A + 2 * B * P_pad * E,
        transcendentals=B * P_pad,
        bytes_accessed=(B * P_pad * E + B * D + E * A + D * A) * item
                       + 3 * A * 4 + (B * E + B * P_pad) * 4,
    )

    args = (enc_in, dec_in, we_in, be, wd_in, bd, wf)
    common = dict(B=B, P_pad=P_pad, E=E, D=D, A=A, Bt=Bt, valid_p=P,
                  approx_recip=approx_recip, vmem_limit=cfg["vmem_limit"],
                  cost=cost)
    try:
        awe, alpha = _build_attention_call(buffered_weights=True, **common)(*args)
    except Exception:
        # Fallback if this JAX/Mosaic build rejects Buffered(1) block specs.
        awe, alpha = _build_attention_call(buffered_weights=False, **common)(*args)

    if P_pad != P:
        alpha = alpha[:, :P]
    return awe, alpha


def attention_reference(encoder_out, decoder_hidden, params):
    we_t, be, wd_t, bd, wf, bf = params
    att1 = encoder_out @ we_t + be                      # (B, P, A)
    att2 = decoder_hidden @ wd_t + bd                   # (B, A)
    h = jnp.maximum(att1 + att2[:, None, :], 0.0)
    att = jnp.einsum("bpa,a->bp", h, wf[0]) + bf[0, 0]  # (B, P)
    alpha = jax.nn.softmax(att, axis=1)
    awe = jnp.sum(encoder_out * alpha[:, :, None], axis=1)
    return awe, alpha


def init_params(key, encoder_dim, decoder_dim, attention_dim):
    k1, k2, k3, k4, k5, k6 = jax.random.split(key, 6)
    we_t = 0.1 * jax.random.normal(k1, (encoder_dim, attention_dim), jnp.float32)
    be = 0.1 * jax.random.normal(k2, (1, attention_dim), jnp.float32)
    wd_t = 0.1 * jax.random.normal(k3, (decoder_dim, attention_dim), jnp.float32)
    bd = 0.1 * jax.random.normal(k4, (1, attention_dim), jnp.float32)
    wf = 0.1 * jax.random.normal(k5, (1, attention_dim), jnp.float32)   # full_att weight row
    bf = 0.1 * jax.random.normal(k6, (1, 1), jnp.float32)               # full_att bias (no-op for alpha)
    return we_t, be, wd_t, bd, wf, bf


if __name__ == "__main__":
    # TODO(synk): the ResNet-101 Encoder, the embedding lookup and the
    # sequential LSTMCell decode loop / beam search of DecoderWithAttention are
    # left to standard JAX/XLA; only the Attention core is a Pallas kernel.
    B, P = 32, 16                # batch, num_pixels (enc_image_size=4 -> P=16)
    E, D, A = 32, 32, 32         # encoder_dim, decoder_dim, attention_dim

    key = jax.random.PRNGKey(0)
    k_enc, k_dec, k_par = jax.random.split(key, 3)
    encoder_out = jax.random.normal(k_enc, (B, P, E), jnp.float32)
    decoder_hidden = jax.random.normal(k_dec, (B, D), jnp.float32)
    params = init_params(k_par, E, D, A)

    awe_ref, alpha_ref = attention_reference(encoder_out, decoder_hidden, params)

    # Exact f32 path: must match reference semantics tightly.
    awe32, alpha32 = attention_forward(encoder_out, decoder_hidden, params,
                                       mxu_dtype=None)
    jax.block_until_ready((awe32, alpha32))
    assert awe32.shape == (B, E) and alpha32.shape == (B, P)
    assert jnp.allclose(awe32, awe_ref, atol=1e-5, rtol=1e-5)
    assert jnp.allclose(alpha32, alpha_ref, atol=1e-5, rtol=1e-5)

    # Default fast path: bf16 MXU operands, f32 accumulation/softmax.
    awe, alpha = attention_forward(encoder_out, decoder_hidden, params)
    jax.block_until_ready((awe, alpha))
    assert awe.shape == (B, E) and alpha.shape == (B, P)
    assert jnp.allclose(awe, awe_ref, atol=5e-2, rtol=5e-2)
    assert jnp.allclose(alpha, alpha_ref, atol=5e-2, rtol=5e-2)

    print("KERNEL_OK")
</pallas_src>

<mosaic_0001>
module attributes {stable_mosaic.version = 11 : i64} {
  func.func @attention_kernel(%arg0: i32, %arg1: memref<16x16x32xf32, #tpu.memory_space<vmem>>, %arg2: memref<16x32xf32, #tpu.memory_space<vmem>>, %arg3: memref<32x32xf32, #tpu.memory_space<vmem>>, %arg4: memref<1x32xf32, #tpu.memory_space<vmem>>, %arg5: memref<32x32xf32, #tpu.memory_space<vmem>>, %arg6: memref<1x32xf32, #tpu.memory_space<vmem>>, %arg7: memref<1x32xf32, #tpu.memory_space<vmem>>, %arg8: memref<16x32xf32, #tpu.memory_space<vmem>>, %arg9: memref<16x16xf32, #tpu.memory_space<vmem>>) attributes {dimension_semantics = [#tpu.dimension_semantics<parallel>], iteration_bounds = array<i64: 2>, scalar_prefetch = 0 : i64, scratch_operands = 0 : i64, tpu.core_type = #tpu.core_type<tc>, window_params = [{transform_indices = @transform_0, window_bounds = array<i64: 16, 16, 32>}, {transform_indices = @transform_1, window_bounds = array<i64: 16, 32>}, {pipeline_mode = #tpu.pipeline_mode<synchronous>, transform_indices = @transform_2, window_bounds = array<i64: 32, 32>}, {pipeline_mode = #tpu.pipeline_mode<synchronous>, transform_indices = @transform_3, window_bounds = array<i64: 1, 32>}, {pipeline_mode = #tpu.pipeline_mode<synchronous>, transform_indices = @transform_4, window_bounds = array<i64: 32, 32>}, {pipeline_mode = #tpu.pipeline_mode<synchronous>, transform_indices = @transform_5, window_bounds = array<i64: 1, 32>}, {pipeline_mode = #tpu.pipeline_mode<synchronous>, transform_indices = @transform_6, window_bounds = array<i64: 1, 32>}, {transform_indices = @transform_7, window_bounds = array<i64: 16, 32>}, {transform_indices = @transform_8, window_bounds = array<i64: 16, 16>}]} {
    %c0 = arith.constant 0 : index
    %c0_0 = arith.constant 0 : index
    %c0_1 = arith.constant 0 : index
    %0 = vector.load %arg1[%c0, %c0_0, %c0_1] : memref<16x16x32xf32, #tpu.memory_space<vmem>>, vector<16x16x32xf32>
    %1 = vector.shape_cast %0 : vector<16x16x32xf32> to vector<256x32xf32>
    %c0_2 = arith.constant 0 : index
    %c0_3 = arith.constant 0 : index
    %2 = vector.load %arg3[%c0_2, %c0_3] : memref<32x32xf32, #tpu.memory_space<vmem>>, vector<32x32xf32>
    %cst = arith.constant dense<0.000000e+00> : vector<256x32xf32>
    %3 = tpu.matmul %1, %2, %cst {dimension_numbers = #tpu.dot_dimension_numbers<[1], [0], [0], [1], [0, 0, 1, 1], [], []>} : vector<256x32xf32>, vector<32x32xf32>, vector<256x32xf32> -> vector<256x32xf32>
    %c0_4 = arith.constant 0 : index
    %c0_5 = arith.constant 0 : index
    %4 = vector.load %arg2[%c0_4, %c0_5] : memref<16x32xf32, #tpu.memory_space<vmem>>, vector<16x32xf32>
    %c0_6 = arith.constant 0 : index
    %c0_7 = arith.constant 0 : index
    %5 = vector.load %arg5[%c0_6, %c0_7] : memref<32x32xf32, #tpu.memory_space<vmem>>, vector<32x32xf32>
    %cst_8 = arith.constant dense<0.000000e+00> : vector<16x32xf32>
    %6 = tpu.matmul %4, %5, %cst_8 {dimension_numbers = #tpu.dot_dimension_numbers<[1], [0], [0], [1], [0, 0, 1, 1], [], []>} : vector<16x32xf32>, vector<32x32xf32>, vector<16x32xf32> -> vector<16x32xf32>
    %c0_9 = arith.constant 0 : index
    %c0_10 = arith.constant 0 : index
    %7 = vector.load %arg4[%c0_9, %c0_10] : memref<1x32xf32, #tpu.memory_space<vmem>>, vector<1x32xf32>
    %c0_11 = arith.constant 0 : index
    %c0_12 = arith.constant 0 : index
    %8 = vector.load %arg6[%c0_11, %c0_12] : memref<1x32xf32, #tpu.memory_space<vmem>>, vector<1x32xf32>
    %9 = arith.addf %7, %8 : vector<1x32xf32>
    %10 = vector.broadcast %9 : vector<1x32xf32> to vector<16x32xf32>
    %11 = arith.addf %6, %10 : vector<16x32xf32>
    %12 = vector.shape_cast %3 : vector<256x32xf32> to vector<16x16x32xf32>
    %13 = vector.shape_cast %11 : vector<16x32xf32> to vector<16x1x32xf32>
    %14 = vector.broadcast %13 : vector<16x1x32xf32> to vector<16x16x32xf32>
    %15 = arith.addf %12, %14 : vector<16x16x32xf32>
    %cst_13 = arith.constant 0.000000e+00 : f32
    %16 = vector.broadcast %cst_13 : f32 to vector<16x16x32xf32>
    %17 = arith.maximumf %15, %16 : vector<16x16x32xf32>
    %c0_14 = arith.constant 0 : index
    %c0_15 = arith.constant 0 : index
    %18 = vector.load %arg7[%c0_14, %c0_15] : memref<1x32xf32, #tpu.memory_space<vmem>>, vector<1x32xf32>
    %19 = vector.shape_cast %18 : vector<1x32xf32> to vector<1x1x32xf32>
    %20 = vector.broadcast %19 : vector<1x1x32xf32> to vector<16x16x32xf32>
    %21 = arith.mulf %17, %20 : vector<16x16x32xf32>
    %cst_16 = arith.constant dense<0.000000e+00> : vector<16x16xf32>
    %22 = vector.multi_reduction <add>, %21, %cst_16 [2] : vector<16x16x32xf32> to vector<16x16xf32>
    %cst_17 = arith.constant dense<0xFF800000> : vector<16xf32>
    %23 = vector.multi_reduction <maximumf>, %22, %cst_17 [1] : vector<16x16xf32> to vector<16xf32>
    %24 = vector.shape_cast %23 : vector<16xf32> to vector<16x1xf32>
    %25 = vector.broadcast %24 : vector<16x1xf32> to vector<16x16xf32>
    %26 = arith.subf %22, %25 : vector<16x16xf32>
    %27 = math.exp %26 : vector<16x16xf32>
    %cst_18 = arith.constant dense<0.000000e+00> : vector<16xf32>
    %28 = vector.multi_reduction <add>, %27, %cst_18 [1] : vector<16x16xf32> to vector<16xf32>
    %29 = vector.shape_cast %28 : vector<16xf32> to vector<16x1xf32>
    %30 = vector.broadcast %29 : vector<16x1xf32> to vector<16x16xf32>
    %31 = arith.divf %27, %30 : vector<16x16xf32>
    %32 = vector.shape_cast %31 : vector<16x16xf32> to vector<16x16x1xf32>
    %33 = vector.broadcast %32 : vector<16x16x1xf32> to vector<16x16x32xf32>
    %34 = arith.mulf %0, %33 : vector<16x16x32xf32>
    %cst_19 = arith.constant dense<0.000000e+00> : vector<16x32xf32>
    %35 = vector.multi_reduction <add>, %34, %cst_19 [1] : vector<16x16x32xf32> to vector<16x32xf32>
    %c0_20 = arith.constant 0 : index
    %c0_21 = arith.constant 0 : index
    %36 = vector.load %arg8[%c0_20, %c0_21] : memref<16x32xf32, #tpu.memory_space<vmem>>, vector<16x32xf32>
    tpu.vector_store %arg8[%c0_20, %c0_21], %35 {strides = array<i32>} : memref<16x32xf32, #tpu.memory_space<vmem>>, vector<16x32xf32>,
    %c0_22 = arith.constant 0 : index
    %c0_23 = arith.constant 0 : index
    %37 = vector.load %arg9[%c0_22, %c0_23] : memref<16x16xf32, #tpu.memory_space<vmem>>, vector<16x16xf32>
    tpu.vector_store %arg9[%c0_22, %c0_23], %31 {strides = array<i32>} : memref<16x16xf32, #tpu.memory_space<vmem>>, vector<16x16xf32>,
    return
  }
  func.func @transform_0(%arg0: i32) -> (i32, i32, i32) {
    %c0_i32 = arith.constant 0 : i32
    %c0_i32_0 = arith.constant 0 : i32
    %c0_i32_1 = arith.constant 0 : i32
    return %arg0, %c0_i32, %c0_i32_0 : i32, i32, i32
  }
  func.func @transform_1(%arg0: i32) -> (i32, i32) {
    %c0_i32 = arith.constant 0 : i32
    %c0_i32_0 = arith.constant 0 : i32
    return %arg0, %c0_i32 : i32, i32
  }
  func.func @transform_2(%arg0: i32) -> (i32, i32) {
    %c0_i32 = arith.constant 0 : i32
    %c0_i32_0 = arith.constant 0 : i32
    %c0_i32_1 = arith.constant 0 : i32
    return %c0_i32, %c0_i32_0 : i32, i32
  }
  func.func @transform_3(%arg0: i32) -> (i32, i32) {
    %c0_i32 = arith.constant 0 : i32
    %c0_i32_0 = arith.constant 0 : i32
    %c0_i32_1 = arith.constant 0 : i32
    return %c0_i32, %c0_i32_0 : i32, i32
  }
  func.func @transform_4(%arg0: i32) -> (i32, i32) {
    %c0_i32 = arith.constant 0 : i32
    %c0_i32_0 = arith.constant 0 : i32
    %c0_i32_1 = arith.constant 0 : i32
    return %c0_i32, %c0_i32_0 : i32, i32
  }
  func.func @transform_5(%arg0: i32) -> (i32, i32) {
    %c0_i32 = arith.constant 0 : i32
    %c0_i32_0 = arith.constant 0 : i32
    %c0_i32_1 = arith.constant 0 : i32
    return %c0_i32, %c0_i32_0 : i32, i32
  }
  func.func @transform_6(%arg0: i32) -> (i32, i32) {
    %c0_i32 = arith.constant 0 : i32
    %c0_i32_0 = arith.constant 0 : i32
    %c0_i32_1 = arith.constant 0 : i32
    return %c0_i32, %c0_i32_0 : i32, i32
  }
  func.func @transform_7(%arg0: i32) -> (i32, i32) {
    %c0_i32 = arith.constant 0 : i32
    %c0_i32_0 = arith.constant 0 : i32
    return %arg0, %c0_i32 : i32, i32
  }
  func.func @transform_8(%arg0: i32) -> (i32, i32) {
    %c0_i32 = arith.constant 0 : i32
    %c0_i32_0 = arith.constant 0 : i32
    return %arg0, %c0_i32 : i32, i32
  }
}

module attributes {stable_mosaic.version = 11 : i64} {
  func.func @attention_kernel(%arg0: i32, %arg1: memref<16x16x32xf32, #tpu.memory_space<vmem>>, %arg2: memref<16x32xf32, #tpu.memory_space<vmem>>, %arg3: memref<32x32xf32, #tpu.memory_space<vmem>>, %arg4: memref<1x32xf32, #tpu.memory_space<vmem>>, %arg5: memref<32x32xf32, #tpu.memory_space<vmem>>, %arg6: memref<1x32xf32, #tpu.memory_space<vmem>>, %arg7: memref<1x32xf32, #tpu.memory_space<vmem>>, %arg8: memref<16x32xf32, #tpu.memory_space<vmem>>, %arg9: memref<16x16xf32, #tpu.memory_space<vmem>>) attributes {dimension_semantics = [#tpu.dimension_semantics<parallel>], iteration_bounds = array<i64: 2>, scalar_prefetch = 0 : i64, scratch_operands = 0 : i64, tpu.core_type = #tpu.core_type<tc>, window_params = [{transform_indices = @transform_0, window_bounds = array<i64: 16, 16, 32>}, {transform_indices = @transform_1, window_bounds = array<i64: 16, 32>}, {pipeline_mode = #tpu.pipeline_mode<synchronous>, transform_indices = @transform_2, window_bounds = array<i64: 32, 32>}, {pipeline_mode = #tpu.pipeline_mode<synchronous>, transform_indices = @transform_3, window_bounds = array<i64: 1, 32>}, {pipeline_mode = #tpu.pipeline_mode<synchronous>, transform_indices = @transform_4, window_bounds = array<i64: 32, 32>}, {pipeline_mode = #tpu.pipeline_mode<synchronous>, transform_indices = @transform_5, window_bounds = array<i64: 1, 32>}, {pipeline_mode = #tpu.pipeline_mode<synchronous>, transform_indices = @transform_6, window_bounds = array<i64: 1, 32>}, {transform_indices = @transform_7, window_bounds = array<i64: 16, 32>}, {transform_indices = @transform_8, window_bounds = array<i64: 16, 16>}]} {
    %c0 = arith.constant 0 : index
    %c0_0 = arith.constant 0 : index
    %c0_1 = arith.constant 0 : index
    %0 = vector.load %arg1[%c0, %c0_0, %c0_1] : memref<16x16x32xf32, #tpu.memory_space<vmem>>, vector<16x16x32xf32>
    %1 = vector.shape_cast %0 : vector<16x16x32xf32> to vector<256x32xf32>
    %c0_2 = arith.constant 0 : index
    %c0_3 = arith.constant 0 : index
    %2 = vector.load %arg3[%c0_2, %c0_3] : memref<32x32xf32, #tpu.memory_space<vmem>>, vector<32x32xf32>
    %cst = arith.constant dense<0.000000e+00> : vector<256x32xf32>
    %3 = tpu.matmul %1, %2, %cst {dimension_numbers = #tpu.dot_dimension_numbers<[1], [0], [0], [1], [0, 0, 1, 1], [], []>} : vector<256x32xf32>, vector<32x32xf32>, vector<256x32xf32> -> vector<256x32xf32>
    %c0_4 = arith.constant 0 : index
    %c0_5 = arith.constant 0 : index
    %4 = vector.load %arg2[%c0_4, %c0_5] : memref<16x32xf32, #tpu.memory_space<vmem>>, vector<16x32xf32>
    %c0_6 = arith.constant 0 : index
    %c0_7 = arith.constant 0 : index
    %5 = vector.load %arg5[%c0_6, %c0_7] : memref<32x32xf32, #tpu.memory_space<vmem>>, vector<32x32xf32>
    %cst_8 = arith.constant dense<0.000000e+00> : vector<16x32xf32>
    %6 = tpu.matmul %4, %5, %cst_8 {dimension_numbers = #tpu.dot_dimension_numbers<[1], [0], [0], [1], [0, 0, 1, 1], [], []>} : vector<16x32xf32>, vector<32x32xf32>, vector<16x32xf32> -> vector<16x32xf32>
    %c0_9 = arith.constant 0 : index
    %c0_10 = arith.constant 0 : index
    %7 = vector.load %arg4[%c0_9, %c0_10] : memref<1x32xf32, #tpu.memory_space<vmem>>, vector<1x32xf32>
    %c0_11 = arith.constant 0 : index
    %c0_12 = arith.constant 0 : index
    %8 = vector.load %arg6[%c0_11, %c0_12] : memref<1x32xf32, #tpu.memory_space<vmem>>, vector<1x32xf32>
    %9 = arith.addf %7, %8 : vector<1x32xf32>
    %10 = vector.broadcast %9 : vector<1x32xf32> to vector<16x32xf32>
    %11 = arith.addf %6, %10 : vector<16x32xf32>
    %12 = vector.shape_cast %3 : vector<256x32xf32> to vector<16x16x32xf32>
    %13 = vector.shape_cast %11 : vector<16x32xf32> to vector<16x1x32xf32>
    %14 = vector.broadcast %13 : vector<16x1x32xf32> to vector<16x16x32xf32>
    %15 = arith.addf %12, %14 : vector<16x16x32xf32>
    %cst_13 = arith.constant 0.000000e+00 : f32
    %16 = vector.broadcast %cst_13 : f32 to vector<16x16x32xf32>
    %17 = arith.maximumf %15, %16 : vector<16x16x32xf32>
    %c0_14 = arith.constant 0 : index
    %c0_15 = arith.constant 0 : index
    %18 = vector.load %arg7[%c0_14, %c0_15] : memref<1x32xf32, #tpu.memory_space<vmem>>, vector<1x32xf32>
    %19 = vector.shape_cast %18 : vector<1x32xf32> to vector<1x1x32xf32>
    %20 = vector.broadcast %19 : vector<1x1x32xf32> to vector<16x16x32xf32>
    %21 = arith.mulf %17, %20 : vector<16x16x32xf32>
    %cst_16 = arith.constant dense<0.000000e+00> : vector<16x16xf32>
    %22 = vector.multi_reduction <add>, %21, %cst_16 [2] : vector<16x16x32xf32> to vector<16x16xf32>
    %cst_17 = arith.constant dense<0xFF800000> : vector<16xf32>
    %23 = vector.multi_reduction <maximumf>, %22, %cst_17 [1] : vector<16x16xf32> to vector<16xf32>
    %24 = vector.shape_cast %23 : vector<16xf32> to vector<16x1xf32>
    %25 = vector.broadcast %24 : vector<16x1xf32> to vector<16x16xf32>
    %26 = arith.subf %22, %25 : vector<16x16xf32>
    %27 = math.exp %26 : vector<16x16xf32>
    %cst_18 = arith.constant dense<0.000000e+00> : vector<16xf32>
    %28 = vector.multi_reduction <add>, %27, %cst_18 [1] : vector<16x16xf32> to vector<16xf32>
    %29 = vector.shape_cast %28 : vector<16xf32> to vector<16x1xf32>
    %30 = vector.broadcast %29 : vector<16x1xf32> to vector<16x16xf32>
    %31 = arith.divf %27, %30 : vector<16x16xf32>
    %32 = vector.shape_cast %31 : vector<16x16xf32> to vector<16x16x1xf32>
    %33 = vector.broadcast %32 : vector<16x16x1xf32> to vector<16x16x32xf32>
    %34 = arith.mulf %0, %33 : vector<16x16x32xf32>
    %cst_19 = arith.constant dense<0.000000e+00> : vector<16x32xf32>
    %35 = vector.multi_reduction <add>, %34, %cst_19 [1] : vector<16x16x32xf32> to vector<16x32xf32>
    %c0_20 = arith.constant 0 : index
    %c0_21 = arith.constant 0 : index
    %36 = vector.load %arg8[%c0_20, %c0_21] : memref<16x32xf32, #tpu.memory_space<vmem>>, vector<16x32xf32>
    tpu.vector_store %arg8[%c0_20, %c0_21], %35 {strides = array<i32>} : memref<16x32xf32, #tpu.memory_space<vmem>>, vector<16x32xf32>,
    %c0_22 = arith.constant 0 : index
    %c0_23 = arith.constant 0 : index
    %37 = vector.load %arg9[%c0_22, %c0_23] : memref<16x16xf32, #tpu.memory_space<vmem>>, vector<16x16xf32>
    tpu.vector_store %arg9[%c0_22, %c0_23], %31 {strides = array<i32>} : memref<16x16xf32, #tpu.memory_space<vmem>>, vector<16x16xf32>,
    return
  }
  func.func @transform_0(%arg0: i32) -> (i32, i32, i32) {
    %c0_i32 = arith.constant 0 : i32
    %c0_i32_0 = arith.constant 0 : i32
    %c0_i32_1 = arith.constant 0 : i32
    return %arg0, %c0_i32, %c0_i32_0 : i32, i32, i32
  }
  func.func @transform_1(%arg0: i32) -> (i32, i32) {
    %c0_i32 = arith.constant 0 : i32
    %c0_i32_0 = arith.constant 0 : i32
    return %arg0, %c0_i32 : i32, i32
  }
  func.func @transform_2(%arg0: i32) -> (i32, i32) {
    %c0_i32 = arith.constant 0 : i32
    %c0_i32_0 = arith.constant 0 : i32
    %c0_i32_1 = arith.constant 0 : i32
    return %c0_i32, %c0_i32_0 : i32, i32
  }
  func.func @transform_3(%arg0: i32) -> (i32, i32) {
    %c0_i32 = arith.constant 0 : i32
    %c0_i32_0 = arith.constant 0 : i32
    %c0_i32_1 = arith.constant 0 : i32
    return %c0_i32, %c0_i32_0 : i32, i32
  }
  func.func @transform_4(%arg0: i32) -> (i32, i32) {
    %c0_i32 = arith.constant 0 : i32
    %c0_i32_0 = arith.constant 0 : i32
    %c0_i32_1 = arith.constant 0 : i32
    return %c0_i32, %c0_i32_0 : i32, i32
  }
  func.func @transform_5(%arg0: i32) -> (i32, i32) {
    %c0_i32 = arith.constant 0 : i32
    %c0_i32_0 = arith.constant 0 : i32
    %c0_i32_1 = arith.constant 0 : i32
    return %c0_i32, %c0_i32_0 : i32, i32
  }
  func.func @transform_6(%arg0: i32) -> (i32, i32) {
    %c0_i32 = arith.constant 0 : i32
    %c0_i32_0 = arith.constant 0 : i32
    %c0_i32_1 = arith.constant 0 : i32
    return %c0_i32, %c0_i32_0 : i32, i32
  }
  func.func @transform_7(%arg0: i32) -> (i32, i32) {
    %c0_i32 = arith.constant 0 : i32
    %c0_i32_0 = arith.constant 0 : i32
    return %arg0, %c0_i32 : i32, i32
  }
  func.func @transform_8(%arg0: i32) -> (i32, i32) {
    %c0_i32 = arith.constant 0 : i32
    %c0_i32_0 = arith.constant 0 : i32
    return %arg0, %c0_i32 : i32, i32
  }
}

</mosaic_0001>

<llo_original>
// kernel: tpu_custom_call.1
$region0: #{tpu_custom_call.1}
  #allocation0 [shape = 'u32[]', space=smem, size = 0x4, offset = 0x4, fixed_abs, tag = 'smem constant byte address 0x4 - core index']
  #allocation1 [shape = 'u32[72,128]{1,0:T(1,128)}', space=vmem, size = 0x9000, scoped, tag = 'internal scratch']
  %s0 = inlined_call_operand.hbm [shape: f32[32,16,32], index: 0, kind: input, shape index: {}]
  %s1 = inlined_call_operand.hbm [shape: f32[32,32], index: 1, kind: input, shape index: {}]
  %s2 = inlined_call_operand.hbm [shape: f32[32,32], index: 2, kind: input, shape index: {}]
  %s3 = inlined_call_operand.vmem [shape: f32[1,32], index: 3, kind: input, shape index: {}]
  %s4 = inlined_call_operand.hbm [shape: f32[32,32], index: 4, kind: input, shape index: {}]
  %s5 = inlined_call_operand.vmem [shape: f32[1,32], index: 5, kind: input, shape index: {}]
  %s6 = inlined_call_operand.vmem [shape: f32[1,32], index: 6, kind: input, shape index: {}]
  %s7 = inlined_call_operand.hbm [shape: f32[32,32], index: 7, kind: output, shape index: {0}]
  %s8 = inlined_call_operand.vmem [shape: f32[32,16], index: 8, kind: output, shape index: {1}]
  %9 = xla_tuple %s7, %s8
  %s10 = sld [smem:[#allocation0]]
  $region85: #{tpu_custom_call.1} parent=0
    _
  %s12 = ssub.s32 1, %s10
  %s13 = scalar_select 0, %s12, %s10
  $region1: #{tpu_custom_call.1} parent=0
    #allocation2 [shape = 'u8[262144]{0}', space=vmem, size = 0x40000, scoped, tag = 'input window, operand 0']
    #allocation3 [shape = 's32[2]{0}', space=sflag, size = 0x8, scoped, tag = 'scoped memory for tpu_custom_call.1']
    #allocation4 [shape = 's32[2]{0}', space=sflag, size = 0x8, scoped, tag = 'scoped memory for tpu_custom_call.1']
    #allocation5 [shape = 'u8[16384]{0}', space=vmem, size = 0x4000, scoped, tag = 'input window, operand 1']
    #allocation6 [shape = 's32[2]{0}', space=sflag, size = 0x8, scoped, tag = 'scoped memory for tpu_custom_call.1']
    #allocation7 [shape = 'u8[16384]{0}', space=vmem, size = 0x4000, scoped, tag = 'input window, operand 2, single buffered']
    #allocation8 [shape = 'u8[16384]{0}', space=vmem, size = 0x4000, scoped, tag = 'input window, operand 4, single buffered']
    #allocation9 [shape = 's32[1]{0}', space=sflag, size = 0x4, scoped, tag = 'scoped memory for tpu_custom_call.1']
    #allocation10 [shape = 'u8[16384]{0}', space=vmem, size = 0x4000, scoped, tag = 'output window, operand 0']
    %14 = vsyncpa [#allocation3], 0
    %s15 = scalar_lea.sflag [#allocation3], 1
    %16 = vsyncpa %s15, 0
    %17 = vsyncpa [#allocation6], 0
    %s18 = scalar_lea.sflag [#allocation6], 1
    %19 = vsyncpa %s18, 0
    %20 = vsyncpa [#allocation9], 0
    %21 = vsyncpa [#allocation4], 0
    %s22 = scalar_lea.sflag [#allocation4], 1
    %23 = vsyncpa %s22, 0
    loop: start=0, step=1, limit=4
    $region2: #{tpu_custom_call.1} parent=1 // loop_pre_header
      _
    $region3: #{tpu_custom_call.1} parent=1 // loop_header
      %s25 = sphi 0, %s29
      %p26 = scmp.ge.s32.totalorder %s25, 4
      %s35 = sphi 0, %s37
      %s38 = sphi 0, %s35
      %s39 = sphi 0, %s38
      %s55 = sphi 0, %s39
      %s61 = sphi 0, %s63
      %s64 = sphi 0, %s61
      %s65 = sphi 0, %s64
      %s81 = sphi 0, %s65
      %s85 = sphi 0, %s85
      %s87 = sphi 0, %s85
      %s88 = sphi 0, %s87
      %s102 = sphi 0, %s88
      %s106 = sphi 0, %s106
      %s108 = sphi 0, %s106
      %s109 = sphi 0, %s108
      %s123 = sphi 0, %s109
      %s127 = sphi 0, %s127
      %s129 = sphi 0, %s127
      %s130 = sphi 0, %s129
      %s144 = sphi 0, %s130
      %s148 = sphi 0, %s148
      %s150 = sphi 0, %s148
      %s151 = sphi 0, %s150
      %s165 = sphi 0, %s151
      %s169 = sphi 0, %s169
      %s171 = sphi 0, %s169
      %s172 = sphi 0, %s171
      %s186 = sphi 0, %s172
      %s192 = sphi 0, %s194
      %s195 = sphi 0, %s192
      %s196 = sphi 0, %s195
      %s212 = sphi 0, %s196
      %s218 = sphi 0, %s220
      %s221 = sphi 0, %s218
      %s222 = sphi 0, %s221
      %s238 = sphi 0, %s222
    $region4: #{tpu_custom_call.1} parent=1 // loop_header_branch
      %28 = sbr.rel (%p26) target = $region8
    $region5: #{tpu_custom_call.1} parent=1 // loop_body
      %s30 = ssub.s32 %s25, 1
      %s31 = ssub.s32 %s25, 2
      %s32 = sadd.s32 %s25, 1
      %s33 = ssub.s32 %s25, %s32
      %p34 = scmp.eq.s32.totalorder %s33, 0
      %s36 = sadd.s32 %s35, 1
      %s37 = scalar_select %p34, %s35, %s36
      %p40 = pneg %p34
      %p41 = scmp.eq.s32.totalorder %s25, 1
      %p42 = por %p40, %p41
      %p43 = scmp.ne.s32.totalorder %s35, %s38
      %p44 = scmp.eq.s32.totalorder %s25, 0
      %p45 = por %p43, %p44
      %p46 = scmp.ne.s32.totalorder %s35, %s38
      %p47 = scmp.eq.s32.totalorder %s30, 1
      %p48 = por %p46, %p47
      %p49 = scmp.ne.s32.totalorder %s38, %s39
      %p50 = scmp.eq.s32.totalorder %s30, 0
      %p51 = por %p49, %p50
      %p52 = scmp.ne.s32.totalorder %s38, %s39
      %p53 = scmp.eq.s32.totalorder %s31, 1
      %p54 = por %p52, %p53
      %p56 = scmp.ne.s32.totalorder %s39, %s55
      %p57 = scmp.eq.s32.totalorder %s31, 0
      %p58 = por %p56, %p57
      %s59 = ssub.s32 %s25, %s32
      %p60 = scmp.eq.s32.totalorder %s59, 0
      %s62 = sadd.s32 %s61, 1
      %s63 = scalar_select %p60, %s61, %s62
      %p66 = pneg %p60
      %p67 = scmp.eq.s32.totalorder %s25, 1
      %p68 = por %p66, %p67
      %p69 = scmp.ne.s32.totalorder %s61, %s64
      %p70 = scmp.eq.s32.totalorder %s25, 0
      %p71 = por %p69, %p70
      %p72 = scmp.ne.s32.totalorder %s61, %s64
      %p73 = scmp.eq.s32.totalorder %s30, 1
      %p74 = por %p72, %p73
      %p75 = scmp.ne.s32.totalorder %s64, %s65
      %p76 = scmp.eq.s32.totalorder %s30, 0
      %p77 = por %p75, %p76
      %p78 = scmp.ne.s32.totalorder %s64, %s65
      %p79 = scmp.eq.s32.totalorder %s31, 1
      %p80 = por %p78, %p79
      %p82 = scmp.ne.s32.totalorder %s65, %s81
      %p83 = scmp.eq.s32.totalorder %s31, 0
      %p84 = por %p82, %p83
      %s86 = sadd.s32 %s85, 1
      %p89 = scmp.eq.s32.totalorder %s25, 1
      %p90 = scmp.ne.s32.totalorder %s85, %s87
      %p91 = scmp.eq.s32.totalorder %s25, 0
      %p92 = por %p90, %p91
      %p93 = scmp.ne.s32.totalorder %s85, %s87
      %p94 = scmp.eq.s32.totalorder %s30, 1
      %p95 = por %p93, %p94
      %p96 = scmp.ne.s32.totalorder %s87, %s88
      %p97 = scmp.eq.s32.totalorder %s30, 0
      %p98 = por %p96, %p97
      %p99 = scmp.ne.s32.totalorder %s87, %s88
      %p100 = scmp.eq.s32.totalorder %s31, 1
      %p101 = por %p99, %p100
      %p103 = scmp.ne.s32.totalorder %s88, %s102
      %p104 = scmp.eq.s32.totalorder %s31, 0
      %p105 = por %p103, %p104
      %s107 = sadd.s32 %s106, 1
      %p110 = scmp.eq.s32.totalorder %s25, 1
      %p111 = scmp.ne.s32.totalorder %s106, %s108
      %p112 = scmp.eq.s32.totalorder %s25, 0
      %p113 = por %p111, %p112
      %p114 = scmp.ne.s32.totalorder %s106, %s108
      %p115 = scmp.eq.s32.totalorder %s30, 1
      %p116 = por %p114, %p115
      %p117 = scmp.ne.s32.totalorder %s108, %s109
      %p118 = scmp.eq.s32.totalorder %s30, 0
      %p119 = por %p117, %p118
      %p120 = scmp.ne.s32.totalorder %s108, %s109
      %p121 = scmp.eq.s32.totalorder %s31, 1
      %p122 = por %p120, %p121
      %p124 = scmp.ne.s32.totalorder %s109, %s123
      %p125 = scmp.eq.s32.totalorder %s31, 0
      %p126 = por %p124, %p125
      %s128 = sadd.s32 %s127, 1
      %p131 = scmp.eq.s32.totalorder %s25, 1
      %p132 = scmp.ne.s32.totalorder %s127, %s129
      %p133 = scmp.eq.s32.totalorder %s25, 0
      %p134 = por %p132, %p133
      %p135 = scmp.ne.s32.totalorder %s127, %s129
      %p136 = scmp.eq.s32.totalorder %s30, 1
      %p137 = por %p135, %p136
      %p138 = scmp.ne.s32.totalorder %s129, %s130
      %p139 = scmp.eq.s32.totalorder %s30, 0
      %p140 = por %p138, %p139
      %p141 = scmp.ne.s32.totalorder %s129, %s130
      %p142 = scmp.eq.s32.totalorder %s31, 1
      %p143 = por %p141, %p142
      %p145 = scmp.ne.s32.totalorder %s130, %s144
      %p146 = scmp.eq.s32.totalorder %s31, 0
      %p147 = por %p145, %p146
      %s149 = sadd.s32 %s148, 1
      %p152 = scmp.eq.s32.totalorder %s25, 1
      %p153 = scmp.ne.s32.totalorder %s148, %s150
      %p154 = scmp.eq.s32.totalorder %s25, 0
      %p155 = por %p153, %p154
      %p156 = scmp.ne.s32.totalorder %s148, %s150
      %p157 = scmp.eq.s32.totalorder %s30, 1
      %p158 = por %p156, %p157
      %p159 = scmp.ne.s32.totalorder %s150, %s151
      %p160 = scmp.eq.s32.totalorder %s30, 0
      %p161 = por %p159, %p160
      %p162 = scmp.ne.s32.totalorder %s150, %s151
      %p163 = scmp.eq.s32.totalorder %s31, 1
      %p164 = por %p162, %p163
      %p166 = scmp.ne.s32.totalorder %s151, %s165
      %p167 = scmp.eq.s32.totalorder %s31, 0
      %p168 = por %p166, %p167
      %s170 = sadd.s32 %s169, 1
      %p173 = scmp.eq.s32.totalorder %s25, 1
      %p174 = scmp.ne.s32.totalorder %s169, %s171
      %p175 = scmp.eq.s32.totalorder %s25, 0
      %p176 = por %p174, %p175
      %p177 = scmp.ne.s32.totalorder %s169, %s171
      %p178 = scmp.eq.s32.totalorder %s30, 1
      %p179 = por %p177, %p178
      %p180 = scmp.ne.s32.totalorder %s171, %s172
      %p181 = scmp.eq.s32.totalorder %s30, 0
      %p182 = por %p180, %p181
      %p183 = scmp.ne.s32.totalorder %s171, %s172
      %p184 = scmp.eq.s32.totalorder %s31, 1
      %p185 = por %p183, %p184
      %p187 = scmp.ne.s32.totalorder %s172, %s186
      %p188 = scmp.eq.s32.totalorder %s31, 0
      %p189 = por %p187, %p188
      %s190 = ssub.s32 %s25, %s32
      %p191 = scmp.eq.s32.totalorder %s190, 0
      %s193 = sadd.s32 %s192, 1
      %s194 = scalar_select %p191, %s192, %s193
      %p197 = pneg %p191
      %p198 = scmp.eq.s32.totalorder %s25, 1
      %p199 = por %p197, %p198
      %p200 = scmp.ne.s32.totalorder %s192, %s195
      %p201 = scmp.eq.s32.totalorder %s25, 0
      %p202 = por %p200, %p201
      %p203 = scmp.ne.s32.totalorder %s192, %s195
      %p204 = scmp.eq.s32.totalorder %s30, 1
      %p205 = por %p203, %p204
      %p206 = scmp.ne.s32.totalorder %s195, %s196
      %p207 = scmp.eq.s32.totalorder %s30, 0
      %p208 = por %p206, %p207
      %p209 = scmp.ne.s32.totalorder %s195, %s196
      %p210 = scmp.eq.s32.totalorder %s31, 1
      %p211 = por %p209, %p210
      %p213 = scmp.ne.s32.totalorder %s196, %s212
      %p214 = scmp.eq.s32.totalorder %s31, 0
      %p215 = por %p213, %p214
      %s216 = ssub.s32 %s25, %s32
      %p217 = scmp.eq.s32.totalorder %s216, 0
      %s219 = sadd.s32 %s218, 1
      %s220 = scalar_select %p217, %s218, %s219
      %p223 = pneg %p217
      %p224 = scmp.eq.s32.totalorder %s25, 1
      %p225 = por %p223, %p224
      %p226 = scmp.ne.s32.totalorder %s218, %s221
      %p227 = scmp.eq.s32.totalorder %s25, 0
      %p228 = por %p226, %p227
      %p229 = scmp.ne.s32.totalorder %s218, %s221
      %p230 = scmp.eq.s32.totalorder %s30, 1
      %p231 = por %p229, %p230
      %p232 = scmp.ne.s32.totalorder %s221, %s222
      %p233 = scmp.eq.s32.totalorder %s30, 0
      %p234 = por %p232, %p233
      %p235 = scmp.ne.s32.totalorder %s221, %s222
      %p236 = scmp.eq.s32.totalorder %s31, 1
      %p237 = por %p235, %p236
      %p239 = scmp.ne.s32.totalorder %s222, %s238
      %p240 = scmp.eq.s32.totalorder %s31, 0
      %p241 = por %p239, %p240
      %p242 = scmp.le.s32.totalorder 1, %s25
      %p243 = scmp.lt.s32.totalorder %s25, 3
      %p244 = pnand %p242, %p243
      %p245 = pneg %p244
      // Predicated region
      $region9: #{tpu_custom_call.1} parent=5 // pred_check
        _
      $region10: #{tpu_custom_call.1} parent=5 // pred_check_branch
        %247 = sbr.rel (%p244) target = $region12
      $region11: #{tpu_custom_call.1} parent=5 // pred_region
        %s248 = ssub.s32 %s25, 1
        // Predicated region
        $region13: #{tpu_custom_call.1} parent=11 // pred_check
          %p249 = pneg %p98
        $region14: #{tpu_custom_call.1} parent=11 // pred_check_branch
          %251 = sbr.rel (%p249) target = $region16
        $region15: #{tpu_custom_call.1} parent=11 // pred_region
          %253 = vsyncadd [#allocation6], 0
          %s254 = sshll.u32 %s2, 4
          %s255 = int_to_ptr.hbm [resolvable:$true] %s254
          %s256 = sshll.u32 [#allocation7], 4
          %s257 = int_to_ptr.vmem [resolvable:$true] %s256
          %262 = dma.hbm_to_vmem [thread:$0]  %s255, 512, %s257, [#allocation6], 128, 128, 8
        $region16: #{tpu_custom_call.1} parent=11 // pred_fallthru
          _
        // Predicated region
        $region17: #{tpu_custom_call.1} parent=11 // pred_check
          %p263 = pneg %p119
        $region18: #{tpu_custom_call.1} parent=11 // pred_check_branch
          %265 = sbr.rel (%p263) target = $region20
        $region19: #{tpu_custom_call.1} parent=11 // pred_region
          _
        $region20: #{tpu_custom_call.1} parent=11 // pred_fallthru
          _
        // Predicated region
        $region21: #{tpu_custom_call.1} parent=11 // pred_check
          %p266 = pneg %p140
        $region22: #{tpu_custom_call.1} parent=11 // pred_check_branch
          %268 = sbr.rel (%p266) target = $region24
        $region23: #{tpu_custom_call.1} parent=11 // pred_region
          %270 = vsyncadd [#allocation9], 0
          %s271 = sshll.u32 %s4, 4
          %s272 = int_to_ptr.hbm [resolvable:$true] %s271
          %s273 = sshll.u32 [#allocation8], 4
          %s274 = int_to_ptr.vmem [resolvable:$true] %s273
          %279 = dma.hbm_to_vmem [thread:$0]  %s272, 512, %s274, [#allocation9], 128, 128, 8
        $region24: #{tpu_custom_call.1} parent=11 // pred_fallthru
          _
        // Predicated region
        $region25: #{tpu_custom_call.1} parent=11 // pred_check
          %p280 = pneg %p161
        $region26: #{tpu_custom_call.1} parent=11 // pred_check_branch
          %282 = sbr.rel (%p280) target = $region28
        $region27: #{tpu_custom_call.1} parent=11 // pred_region
          _
        $region28: #{tpu_custom_call.1} parent=11 // pred_fallthru
          _
        // Predicated region
        $region29: #{tpu_custom_call.1} parent=11 // pred_check
          %p283 = pneg %p182
        $region30: #{tpu_custom_call.1} parent=11 // pred_check_branch
          %285 = sbr.rel (%p283) target = $region32
        $region31: #{tpu_custom_call.1} parent=11 // pred_region
          _
        $region32: #{tpu_custom_call.1} parent=11 // pred_fallthru
          _
      $region12: #{tpu_custom_call.1} parent=5 // pred_fallthru
        _
      %p286 = scmp.lt.s32.totalorder %s25, 2
      // Predicated region
      $region33: #{tpu_custom_call.1} parent=5 // pred_check
        %p287 = pneg %p286
      $region34: #{tpu_custom_call.1} parent=5 // pred_check_branch
        %289 = sbr.rel (%p287) target = $region36
      $region35: #{tpu_custom_call.1} parent=5 // pred_region
        // Predicated region
        $region37: #{tpu_custom_call.1} parent=35 // pred_check
          %p290 = pneg %p45
        $region38: #{tpu_custom_call.1} parent=35 // pred_check_branch
          %292 = sbr.rel (%p290) target = $region40
        $region39: #{tpu_custom_call.1} parent=35 // pred_region
          %s293 = sand.u32 %s35, 1
          %s294 = scalar_lea.sflag [#allocation3], %s293
          %s295 = sand.u32 %s35, 1
          %s296 = smul.addr %s295, 256
          %s297 = scalar_lea.vmem [#allocation2], %s296
          %s298 = smul.u32 16, %s25
          %300 = vsyncadd %s294, 0
          %s301 = smul.addr %s298, 2
          %s302 = smul.addr %s301, 8
          %s303 = scalar_lea.hbm %s0, %s302
          %s304 = sshll.u32 %s303, 4
          %s305 = int_to_ptr.hbm [resolvable:$true] %s304
          %s306 = sshll.u32 %s297, 4
          %s307 = int_to_ptr.vmem [resolvable:$true] %s306
          %312 = dma.hbm_to_vmem [thread:$0]  %s305, 4096, %s307, %s294, 128, 128, 8
        $region40: #{tpu_custom_call.1} parent=35 // pred_fallthru
          _
        // Predicated region
        $region41: #{tpu_custom_call.1} parent=35 // pred_check
          %p313 = pneg %p71
        $region42: #{tpu_custom_call.1} parent=35 // pred_check_branch
          %315 = sbr.rel (%p313) target = $region44
        $region43: #{tpu_custom_call.1} parent=35 // pred_region
          %s316 = sand.u32 %s25, 1
          %s317 = scalar_lea.sflag [#allocation6], %s316
          %s318 = sand.u32 %s61, 1
          %s319 = smul.addr %s318, 16
          %s320 = scalar_lea.vmem [#allocation5], %s319
          %s321 = smul.u32 2, %s25
          %323 = vsyncadd %s317, 0
          %s324 = smul.addr %s321, 8
          %s325 = scalar_lea.hbm %s1, %s324
          %s326 = sshll.u32 %s325, 4
          %s327 = int_to_ptr.hbm [resolvable:$true] %s326
          %s328 = sshll.u32 %s320, 4
          %s329 = int_to_ptr.vmem [resolvable:$true] %s328
          %334 = dma.hbm_to_vmem [thread:$0]  %s327, 256, %s329, %s317, 128, 128, 8
        $region44: #{tpu_custom_call.1} parent=35 // pred_fallthru
          _
      $region36: #{tpu_custom_call.1} parent=5 // pred_fallthru
        _
      %p335 = scmp.le.s32.totalorder 1, %s25
      %p336 = scmp.lt.s32.totalorder %s25, 3
      %p337 = pnand %p335, %p336
      %p338 = pneg %p337
      // Predicated region
      $region45: #{tpu_custom_call.1} parent=5 // pred_check
        _
      $region46: #{tpu_custom_call.1} parent=5 // pred_check_branch
        %340 = sbr.rel (%p337) target = $region48
      $region47: #{tpu_custom_call.1} parent=5 // pred_region
        %s341 = ssub.s32 %s25, 1
        %s342 = sand.u32 %s38, 1
        %s343 = scalar_lea.sflag [#allocation3], %s342
        %s344 = sand.u32 %s38, 1
        %s345 = smul.addr %s344, 256
        %s346 = scalar_lea.vmem [#allocation2], %s345
        // Predicated region
        $region49: #{tpu_custom_call.1} parent=47 // pred_check
          %p347 = pneg %p51
        $region50: #{tpu_custom_call.1} parent=47 // pred_check_branch
          %349 = sbr.rel (%p347) target = $region52
        $region51: #{tpu_custom_call.1} parent=47 // pred_region
          %351 = dma.done %s343, 4096
        $region52: #{tpu_custom_call.1} parent=47 // pred_fallthru
          _
        %s352 = sand.u32 %s30, 1
        %s353 = scalar_lea.sflag [#allocation6], %s352
        %s354 = sand.u32 %s64, 1
        %s355 = smul.addr %s354, 16
        %s356 = scalar_lea.vmem [#allocation5], %s355
        // Predicated region
        $region53: #{tpu_custom_call.1} parent=47 // pred_check
          %p357 = pneg %p77
        $region54: #{tpu_custom_call.1} parent=47 // pred_check_branch
          %359 = sbr.rel (%p357) target = $region56
        $region55: #{tpu_custom_call.1} parent=47 // pred_region
          %361 = dma.done %s353, 256
        $region56: #{tpu_custom_call.1} parent=47 // pred_fallthru
          _
        // Predicated region
        $region57: #{tpu_custom_call.1} parent=47 // pred_check
          %p362 = pneg %p98
        $region58: #{tpu_custom_call.1} parent=47 // pred_check_branch
          %364 = sbr.rel (%p362) target = $region60
        $region59: #{tpu_custom_call.1} parent=47 // pred_region
          %366 = dma.done [#allocation6], 512
        $region60: #{tpu_custom_call.1} parent=47 // pred_fallthru
          _
        // Predicated region
        $region61: #{tpu_custom_call.1} parent=47 // pred_check
          %p367 = pneg %p140
        $region62: #{tpu_custom_call.1} parent=47 // pred_check_branch
          %369 = sbr.rel (%p367) target = $region64
        $region63: #{tpu_custom_call.1} parent=47 // pred_region
          %371 = dma.done [#allocation9], 512
        $region64: #{tpu_custom_call.1} parent=47 // pred_fallthru
          _
        %s372 = sand.u32 %s38, 1
        %s373 = scalar_lea.sflag [#allocation3], %s372
        %s374 = sand.u32 %s38, 1
        %s375 = smul.addr %s374, 256
        %s376 = scalar_lea.vmem [#allocation2], %s375
        %p377 = pneg %p51
        %p378 = pneg %p48
        %s379 = sand.u32 %s30, 1
        %s380 = scalar_lea.sflag [#allocation6], %s379
        %s381 = sand.u32 %s64, 1
        %s382 = smul.addr %s381, 16
        %s383 = scalar_lea.vmem [#allocation5], %s382
        %p384 = pneg %p77
        %p385 = pneg %p74
        %p386 = pneg %p98
        %p387 = pneg %p95
        %p388 = pneg %p119
        %p389 = pneg %p116
        %p390 = pneg %p140
        %p391 = pneg %p137
        %p392 = pneg %p161
        %p393 = pneg %p158
        %p394 = pneg %p182
        %p395 = pneg %p179
        %p396 = pneg %p208
        %p397 = pneg %p205
        %s398 = sand.u32 %s195, 1
        %s399 = scalar_lea.sflag [#allocation4], %s398
        %s400 = sand.u32 %s195, 1
        %s401 = smul.addr %s400, 16
        %s402 = scalar_lea.vmem [#allocation10], %s401
        %p403 = pneg %p234
        %p404 = pneg %p231
        %s405 = smul.u32 2, %s30
        %p406 = scmp.lt.s32.totalorder %s405, 3
        %s407 = scalar_select %p406, %s405, 3
        %s408 = smul.addr %s407, 8
        %s409 = scalar_lea.vmem %s8, %s408
        %s410 = smul.u32 16, %s30
        %s411 = smul.u32 2, %s30
        %s412 = smul.u32 2, %s30
        %s413 = smul.u32 2, %s30
        %p414 = scmp.lt.s32.totalorder %s413, 3
        %s415 = scalar_select %p414, %s413, 3
        %s416 = smul.addr %s415, 8
        %s417 = scalar_lea.vmem %s8, %s416
        %s418 = smul.u32 2, %s30
        %v419 = vld [vmem:[%s346] sm:$0xff]
        %v420 = vld [vmem:[%s346 + $0x8] sm:$0xff]
        %v421 = vld [vmem:[%s346 + $0x10] sm:$0xff]
        %v422 = vld [vmem:[%s346 + $0x18] sm:$0xff]
        %v423 = vld [vmem:[%s346 + $0x20] sm:$0xff]
        %v424 = vld [vmem:[%s346 + $0x28] sm:$0xff]
        %v425 = vld [vmem:[%s346 + $0x30] sm:$0xff]
        %v426 = vld [vmem:[%s346 + $0x38] sm:$0xff]
        %v427 = vld [vmem:[%s346 + $0x40] sm:$0xff]
        %v428 = vld [vmem:[%s346 + $0x48] sm:$0xff]
        %v429 = vld [vmem:[%s346 + $0x50] sm:$0xff]
        %v430 = vld [vmem:[%s346 + $0x58] sm:$0xff]
        %v431 = vld [vmem:[%s346 + $0x60] sm:$0xff]
        %v432 = vld [vmem:[%s346 + $0x68] sm:$0xff]
        %v433 = vld [vmem:[%s346 + $0x70] sm:$0xff]
        %v434 = vld [vmem:[%s346 + $0x78] sm:$0xff]
        %v435 = vld [vmem:[%s346 + $0x80] sm:$0xff]
        %v436 = vld [vmem:[%s346 + $0x88] sm:$0xff]
        %v437 = vld [vmem:[%s346 + $0x90] sm:$0xff]
        %v438 = vld [vmem:[%s346 + $0x98] sm:$0xff]
        %v439 = vld [vmem:[%s346 + $0xa0] sm:$0xff]
        %v440 = vld [vmem:[%s346 + $0xa8] sm:$0xff]
        %v441 = vld [vmem:[%s346 + $0xb0] sm:$0xff]
        %v442 = vld [vmem:[%s346 + $0xb8] sm:$0xff]
        %v443 = vld [vmem:[%s346 + $0xc0] sm:$0xff]
        %v444 = vld [vmem:[%s346 + $0xc8] sm:$0xff]
        %v445 = vld [vmem:[%s346 + $0xd0] sm:$0xff]
        %v446 = vld [vmem:[%s346 + $0xd8] sm:$0xff]
        %v447 = vld [vmem:[%s346 + $0xe0] sm:$0xff]
        %v448 = vld [vmem:[%s346 + $0xe8] sm:$0xff]
        %v449 = vld [vmem:[%s346 + $0xf0] sm:$0xff]
        %v450 = vld [vmem:[%s346 + $0xf8] sm:$0xff]
        %v451 = vld [vmem:[#allocation7] sm:$0xff]
        %v452 = vld [vmem:[#allocation7 + $0x8] sm:$0xff]
        %v453 = vld [vmem:[#allocation7 + $0x10] sm:$0xff]
        %v454 = vld [vmem:[#allocation7 + $0x18] sm:$0xff]
        %vm455 = vcmask 261120
        %v457 = vsel %vm455, %v419, 0
        %v460 = vsel %vm455, %v420, 0
        %v463 = vsel %vm455, %v421, 0
        %v466 = vsel %vm455, %v422, 0
        %v469 = vsel %vm455, %v423, 0
        %v472 = vsel %vm455, %v424, 0
        %v475 = vsel %vm455, %v425, 0
        %v478 = vsel %vm455, %v426, 0
        %v481 = vsel %vm455, %v427, 0
        %v484 = vsel %vm455, %v428, 0
        %v487 = vsel %vm455, %v429, 0
        %v490 = vsel %vm455, %v430, 0
        %v493 = vsel %vm455, %v431, 0
        %v496 = vsel %vm455, %v432, 0
        %v499 = vsel %vm455, %v433, 0
        %v502 = vsel %vm455, %v434, 0
        %v505 = vsel %vm455, %v435, 0
        %v508 = vsel %vm455, %v436, 0
        %v511 = vsel %vm455, %v437, 0
        %v514 = vsel %vm455, %v438, 0
        %v517 = vsel %vm455, %v439, 0
        %v520 = vsel %vm455, %v440, 0
        %v523 = vsel %vm455, %v441, 0
        %v526 = vsel %vm455, %v442, 0
        %v529 = vsel %vm455, %v443, 0
        %v532 = vsel %vm455, %v444, 0
        %v535 = vsel %vm455, %v445, 0
        %v538 = vsel %vm455, %v446, 0
        %v541 = vsel %vm455, %v447, 0
        %v544 = vsel %vm455, %v448, 0
        %v547 = vsel %vm455, %v449, 0
        %v550 = vsel %vm455, %v450, 0
        %552 = vmatpush.msra.mxu0 0.0
        %553 = vmatpush.msra.mxu0 0.0
        %554 = vmatpush.msra.mxu0 0.0
        %555 = vmatpush.msra.mxu0 0.0
        %556 = vmatpush.msra.mxu0 0.0
        %557 = vmatpush.msra.mxu0 0.0
        %558 = vmatpush.msra.mxu0 0.0
        %559 = vmatpush.msra.mxu0 0.0
        %560 = vmatpush.msra.mxu0 0.0
        %561 = vmatpush.msra.mxu0 0.0
        %562 = vmatpush.msra.mxu0 0.0
        %563 = vmatpush.msra.mxu0 0.0
        %564 = vmatpush.msra.mxu0 %v454
        %565 = vmatpush.msra.mxu0 %v453
        %566 = vmatpush.msra.mxu0 %v452
        %567 = vmatpush.msra.mxu0 %v451
        %568 = vmatmul.f32.gmra.mxu0 %v457
        %v569 = vpop.f32.mrf.mxu0
        %v570 = vadd.f32 0.0, %v569
        %571 = vmatmul.f32.gmra.mxu0 %v460
        %v572 = vpop.f32.mrf.mxu0
        %v573 = vadd.f32 0.0, %v572
        %574 = vmatmul.f32.gmra.mxu0 %v463
        %v575 = vpop.f32.mrf.mxu0
        %v576 = vadd.f32 0.0, %v575
        %577 = vmatmul.f32.gmra.mxu0 %v466
        %v578 = vpop.f32.mrf.mxu0
        %v579 = vadd.f32 0.0, %v578
        %580 = vmatmul.f32.gmra.mxu0 %v469
        %v581 = vpop.f32.mrf.mxu0
        %v582 = vadd.f32 0.0, %v581
        %583 = vmatmul.f32.gmra.mxu0 %v472
        %v584 = vpop.f32.mrf.mxu0
        %v585 = vadd.f32 0.0, %v584
        %586 = vmatmul.f32.gmra.mxu0 %v475
        %v587 = vpop.f32.mrf.mxu0
        %v588 = vadd.f32 0.0, %v587
        %589 = vmatmul.f32.gmra.mxu0 %v478
        %v590 = vpop.f32.mrf.mxu0
        %v591 = vadd.f32 0.0, %v590
        %592 = vmatmul.f32.gmra.mxu0 %v481
        %v593 = vpop.f32.mrf.mxu0
        %v594 = vadd.f32 0.0, %v593
        %595 = vmatmul.f32.gmra.mxu0 %v484
        %v596 = vpop.f32.mrf.mxu0
        %v597 = vadd.f32 0.0, %v596
        %598 = vmatmul.f32.gmra.mxu0 %v487
        %v599 = vpop.f32.mrf.mxu0
        %v600 = vadd.f32 0.0, %v599
        %601 = vmatmul.f32.gmra.mxu0 %v490
        %v602 = vpop.f32.mrf.mxu0
        %v603 = vadd.f32 0.0, %v602
        %604 = vmatmul.f32.gmra.mxu0 %v493
        %v605 = vpop.f32.mrf.mxu0
        %v606 = vadd.f32 0.0, %v605
        %607 = vmatmul.f32.gmra.mxu0 %v496
        %v608 = vpop.f32.mrf.mxu0
        %v609 = vadd.f32 0.0, %v608
        %610 = vmatmul.f32.gmra.mxu0 %v499
        %v611 = vpop.f32.mrf.mxu0
        %v612 = vadd.f32 0.0, %v611
        %613 = vmatmul.f32.gmra.mxu0 %v502
        %v614 = vpop.f32.mrf.mxu0
        %v615 = vadd.f32 0.0, %v614
        %616 = vmatmul.f32.gmra.mxu0 %v505
        %v617 = vpop.f32.mrf.mxu0
        %v618 = vadd.f32 0.0, %v617
        %619 = vmatmul.f32.gmra.mxu0 %v508
        %v620 = vpop.f32.mrf.mxu0
        %v621 = vadd.f32 0.0, %v620
        %622 = vmatmul.f32.gmra.mxu0 %v511
        %v623 = vpop.f32.mrf.mxu0
        %v624 = vadd.f32 0.0, %v623
        %625 = vmatmul.f32.gmra.mxu0 %v514
        %v626 = vpop.f32.mrf.mxu0
        %v627 = vadd.f32 0.0, %v626
        %628 = vmatmul.f32.gmra.mxu0 %v517
        %v629 = vpop.f32.mrf.mxu0
        %v630 = vadd.f32 0.0, %v629
        %631 = vmatmul.f32.gmra.mxu0 %v520
        %v632 = vpop.f32.mrf.mxu0
        %v633 = vadd.f32 0.0, %v632
        %634 = vmatmul.f32.gmra.mxu0 %v523
        %v635 = vpop.f32.mrf.mxu0
        %v636 = vadd.f32 0.0, %v635
        %637 = vmatmul.f32.gmra.mxu0 %v526
        %v638 = vpop.f32.mrf.mxu0
        %v639 = vadd.f32 0.0, %v638
        %640 = vmatmul.f32.gmra.mxu0 %v529
        %v641 = vpop.f32.mrf.mxu0
        %v642 = vadd.f32 0.0, %v641
        %643 = vmatmul.f32.gmra.mxu0 %v532
        %v644 = vpop.f32.mrf.mxu0
        %v645 = vadd.f32 0.0, %v644
        %646 = vmatmul.f32.gmra.mxu0 %v535
        %v647 = vpop.f32.mrf.mxu0
        %v648 = vadd.f32 0.0, %v647
        %649 = vmatmul.f32.gmra.mxu0 %v538
        %v650 = vpop.f32.mrf.mxu0
        %v651 = vadd.f32 0.0, %v650
        %652 = vmatmul.f32.gmra.mxu0 %v541
        %v653 = vpop.f32.mrf.mxu0
        %v654 = vadd.f32 0.0, %v653
        %655 = vmatmul.f32.gmra.mxu0 %v544
        %v656 = vpop.f32.mrf.mxu0
        %v657 = vadd.f32 0.0, %v656
        %658 = vmatmul.f32.gmra.mxu0 %v547
        %v659 = vpop.f32.mrf.mxu0
        %v660 = vadd.f32 0.0, %v659
        %661 = vmatmul.f32.gmra.mxu0 %v550
        %v662 = vpop.f32.mrf.mxu0
        %v663 = vadd.f32 0.0, %v662
        %664 = vdwg.mxu0
        %v665 = vld [vmem:[%s356] sm:$0xff]
        %v666 = vld [vmem:[%s356 + $0x8] sm:$0xff]
        %v667 = vld [vmem:[#allocation8] sm:$0xff]
        %v668 = vld [vmem:[#allocation8 + $0x8] sm:$0xff]
        %v669 = vld [vmem:[#allocation8 + $0x10] sm:$0xff]
        %v670 = vld [vmem:[#allocation8 + $0x18] sm:$0xff]
        %v671 = vld [vmem:[%s3] sm:$0x1]
        %v672 = vld [vmem:[%s5] sm:$0x1]
        %v673 = vadd.f32 %v671, %v672
        %v675 = vperm.slane %v673, 0
        %v678 = vsel %vm455, %v665, 0
        %v681 = vsel %vm455, %v666, 0
        %683 = vmatpush.msra.mxu0 0.0
        %684 = vmatpush.msra.mxu0 0.0
        %685 = vmatpush.msra.mxu0 0.0
        %686 = vmatpush.msra.mxu0 0.0
        %687 = vmatpush.msra.mxu0 0.0
        %688 = vmatpush.msra.mxu0 0.0
        %689 = vmatpush.msra.mxu0 0.0
        %690 = vmatpush.msra.mxu0 0.0
        %691 = vmatpush.msra.mxu0 0.0
        %692 = vmatpush.msra.mxu0 0.0
        %693 = vmatpush.msra.mxu0 0.0
        %694 = vmatpush.msra.mxu0 0.0
        %695 = vmatpush.msra.mxu0 %v670
        %696 = vmatpush.msra.mxu0 %v669
        %697 = vmatpush.msra.mxu0 %v668
        %698 = vmatpush.msra.mxu0 %v667
        %699 = vmatmul.f32.gmra.mxu0 %v678
        %v700 = vpop.f32.mrf.mxu0
        %v701 = vadd.f32 %v675, %v700
        %702 = vmatmul.f32.gmra.mxu0 %v681
        %v703 = vpop.f32.mrf.mxu0
        %v704 = vadd.f32 %v675, %v703
        %705 = vdwg.mxu0
        %v708 = vrot.slane %v701, 1
        %v709 = vrot.slane %v701, 2
        %v710 = vrot.slane %v701, 3
        %v711 = vrot.slane %v701, 4
        %v712 = vrot.slane %v701, 5
        %v713 = vrot.slane %v701, 6
        %v714 = vrot.slane %v701, 7
        %v715 = vrot.slane %v704, 1
        %v716 = vrot.slane %v704, 2
        %v717 = vrot.slane %v704, 3
        %v718 = vrot.slane %v704, 4
        %v719 = vrot.slane %v704, 5
        %v720 = vrot.slane %v704, 6
        %v721 = vrot.slane %v704, 7
        %v722 = vperm.slane %v701, 0
        %v723 = vperm.slane %v708, 0
        %v724 = vperm.slane %v709, 0
        %v725 = vperm.slane %v710, 0
        %v726 = vperm.slane %v711, 0
        %v727 = vperm.slane %v712, 0
        %v728 = vperm.slane %v713, 0
        %v729 = vperm.slane %v714, 0
        %v730 = vperm.slane %v704, 0
        %v731 = vperm.slane %v715, 0
        %v732 = vperm.slane %v716, 0
        %v733 = vperm.slane %v717, 0
        %v734 = vperm.slane %v718, 0
        %v735 = vperm.slane %v719, 0
        %v736 = vperm.slane %v720, 0
        %v737 = vperm.slane %v721, 0
        %v754 = vadd.f32 %v570, %v722
        %v755 = vadd.f32 %v573, %v722
        %v756 = vadd.f32 %v576, %v723
        %v757 = vadd.f32 %v579, %v723
        %v758 = vadd.f32 %v582, %v724
        %v759 = vadd.f32 %v585, %v724
        %v760 = vadd.f32 %v588, %v725
        %v761 = vadd.f32 %v591, %v725
        %v762 = vadd.f32 %v594, %v726
        %v763 = vadd.f32 %v597, %v726
        %v764 = vadd.f32 %v600, %v727
        %v765 = vadd.f32 %v603, %v727
        %v766 = vadd.f32 %v606, %v728
        %v767 = vadd.f32 %v609, %v728
        %v768 = vadd.f32 %v612, %v729
        %v769 = vadd.f32 %v615, %v729
        %v770 = vadd.f32 %v618, %v730
        %v771 = vadd.f32 %v621, %v730
        %v772 = vadd.f32 %v624, %v731
        %v773 = vadd.f32 %v627, %v731
        %v774 = vadd.f32 %v630, %v732
        %v775 = vadd.f32 %v633, %v732
        %v776 = vadd.f32 %v636, %v733
        %v777 = vadd.f32 %v639, %v733
        %v778 = vadd.f32 %v642, %v734
        %v779 = vadd.f32 %v645, %v734
        %v780 = vadd.f32 %v648, %v735
        %v781 = vadd.f32 %v651, %v735
        %v782 = vadd.f32 %v654, %v736
        %v783 = vadd.f32 %v657, %v736
        %v784 = vadd.f32 %v660, %v737
        %v785 = vadd.f32 %v663, %v737
        %v786 = vmax.f32 %v754, 0.0
        %v787 = vmax.f32 %v755, 0.0
        %v788 = vmax.f32 %v756, 0.0
        %v789 = vmax.f32 %v757, 0.0
        %v790 = vmax.f32 %v758, 0.0
        %v791 = vmax.f32 %v759, 0.0
        %v792 = vmax.f32 %v760, 0.0
        %v793 = vmax.f32 %v761, 0.0
        %v794 = vmax.f32 %v762, 0.0
        %v795 = vmax.f32 %v763, 0.0
        %v796 = vmax.f32 %v764, 0.0
        %v797 = vmax.f32 %v765, 0.0
        %v798 = vmax.f32 %v766, 0.0
        %v799 = vmax.f32 %v767, 0.0
        %v800 = vmax.f32 %v768, 0.0
        %v801 = vmax.f32 %v769, 0.0
        %v802 = vmax.f32 %v770, 0.0
        %v803 = vmax.f32 %v771, 0.0
        %v804 = vmax.f32 %v772, 0.0
        %v805 = vmax.f32 %v773, 0.0
        %v806 = vmax.f32 %v774, 0.0
        %v807 = vmax.f32 %v775, 0.0
        %v808 = vmax.f32 %v776, 0.0
        %v809 = vmax.f32 %v777, 0.0
        %v810 = vmax.f32 %v778, 0.0
        %v811 = vmax.f32 %v779, 0.0
        %v812 = vmax.f32 %v780, 0.0
        %v813 = vmax.f32 %v781, 0.0
        %v814 = vmax.f32 %v782, 0.0
        %v815 = vmax.f32 %v783, 0.0
        %v816 = vmax.f32 %v784, 0.0
        %v817 = vmax.f32 %v785, 0.0
        %v818 = vld [vmem:[%s6] sm:$0x1]
        %v820 = vperm.slane %v818, 0
        %v822 = vmul.f32 %v786, %v820
        %v823 = vmul.f32 %v787, %v820
        %v824 = vmul.f32 %v788, %v820
        %v825 = vmul.f32 %v789, %v820
        %v826 = vmul.f32 %v790, %v820
        %v827 = vmul.f32 %v791, %v820
        %v828 = vmul.f32 %v792, %v820
        %v829 = vmul.f32 %v793, %v820
        %v830 = vmul.f32 %v794, %v820
        %v831 = vmul.f32 %v795, %v820
        %v832 = vmul.f32 %v796, %v820
        %v833 = vmul.f32 %v797, %v820
        %v834 = vmul.f32 %v798, %v820
        %v835 = vmul.f32 %v799, %v820
        %v836 = vmul.f32 %v800, %v820
        %v837 = vmul.f32 %v801, %v820
        %v838 = vmul.f32 %v802, %v820
        %v839 = vmul.f32 %v803, %v820
        %v840 = vmul.f32 %v804, %v820
        %v841 = vmul.f32 %v805, %v820
        %v842 = vmul.f32 %v806, %v820
        %v843 = vmul.f32 %v807, %v820
        %v844 = vmul.f32 %v808, %v820
        %v845 = vmul.f32 %v809, %v820
        %v846 = vmul.f32 %v810, %v820
        %v847 = vmul.f32 %v811, %v820
        %v848 = vmul.f32 %v812, %v820
        %v849 = vmul.f32 %v813, %v820
        %v850 = vmul.f32 %v814, %v820
        %v851 = vmul.f32 %v815, %v820
        %v852 = vmul.f32 %v816, %v820
        %v853 = vmul.f32 %v817, %v820
        %v854 = vsel %vm455, %v822, 0.0
        %855 = vadd.xlane.f32.xlu0 %v854
        %v856 = vpop.xlane.xlu0 %855
        %v857 = vsel %vm455, %v823, 0.0
        %858 = vadd.xlane.f32.xlu0 %v857
        %v859 = vpop.xlane.xlu0 %858
        %v860 = vsel %vm455, %v824, 0.0
        %861 = vadd.xlane.f32.xlu0 %v860
        %v862 = vpop.xlane.xlu0 %861
        %v863 = vsel %vm455, %v825, 0.0
        %864 = vadd.xlane.f32.xlu0 %v863
        %v865 = vpop.xlane.xlu0 %864
        %v866 = vsel %vm455, %v826, 0.0
        %867 = vadd.xlane.f32.xlu0 %v866
        %v868 = vpop.xlane.xlu0 %867
        %v869 = vsel %vm455, %v827, 0.0
        %870 = vadd.xlane.f32.xlu0 %v869
        %v871 = vpop.xlane.xlu0 %870
        %v872 = vsel %vm455, %v828, 0.0
        %873 = vadd.xlane.f32.xlu0 %v872
        %v874 = vpop.xlane.xlu0 %873
        %v875 = vsel %vm455, %v829, 0.0
        %876 = vadd.xlane.f32.xlu0 %v875
        %v877 = vpop.xlane.xlu0 %876
        %v878 = vsel %vm455, %v830, 0.0
        %879 = vadd.xlane.f32.xlu0 %v878
        %v880 = vpop.xlane.xlu0 %879
        %v881 = vsel %vm455, %v831, 0.0
        %882 = vadd.xlane.f32.xlu0 %v881
        %v883 = vpop.xlane.xlu0 %882
        %v884 = vsel %vm455, %v832, 0.0
        %885 = vadd.xlane.f32.xlu0 %v884
        %v886 = vpop.xlane.xlu0 %885
        %v887 = vsel %vm455, %v833, 0.0
        %888 = vadd.xlane.f32.xlu0 %v887
        %v889 = vpop.xlane.xlu0 %888
        %v890 = vsel %vm455, %v834, 0.0
        %891 = vadd.xlane.f32.xlu0 %v890
        %v892 = vpop.xlane.xlu0 %891
        %v893 = vsel %vm455, %v835, 0.0
        %894 = vadd.xlane.f32.xlu0 %v893
        %v895 = vpop.xlane.xlu0 %894
        %v896 = vsel %vm455, %v836, 0.0
        %897 = vadd.xlane.f32.xlu0 %v896
        %v898 = vpop.xlane.xlu0 %897
        %v899 = vsel %vm455, %v837, 0.0
        %900 = vadd.xlane.f32.xlu0 %v899
        %v901 = vpop.xlane.xlu0 %900
        %v902 = vsel %vm455, %v838, 0.0
        %903 = vadd.xlane.f32.xlu0 %v902
        %v904 = vpop.xlane.xlu0 %903
        %v905 = vsel %vm455, %v839, 0.0
        %906 = vadd.xlane.f32.xlu0 %v905
        %v907 = vpop.xlane.xlu0 %906
        %v908 = vsel %vm455, %v840, 0.0
        %909 = vadd.xlane.f32.xlu0 %v908
        %v910 = vpop.xlane.xlu0 %909
        %v911 = vsel %vm455, %v841, 0.0
        %912 = vadd.xlane.f32.xlu0 %v911
        %v913 = vpop.xlane.xlu0 %912
        %v914 = vsel %vm455, %v842, 0.0
        %915 = vadd.xlane.f32.xlu0 %v914
        %v916 = vpop.xlane.xlu0 %915
        %v917 = vsel %vm455, %v843, 0.0
        %918 = vadd.xlane.f32.xlu0 %v917
        %v919 = vpop.xlane.xlu0 %918
        %v920 = vsel %vm455, %v844, 0.0
        %921 = vadd.xlane.f32.xlu0 %v920
        %v922 = vpop.xlane.xlu0 %921
        %v923 = vsel %vm455, %v845, 0.0
        %924 = vadd.xlane.f32.xlu0 %v923
        %v925 = vpop.xlane.xlu0 %924
        %v926 = vsel %vm455, %v846, 0.0
        %927 = vadd.xlane.f32.xlu0 %v926
        %v928 = vpop.xlane.xlu0 %927
        %v929 = vsel %vm455, %v847, 0.0
        %930 = vadd.xlane.f32.xlu0 %v929
        %v931 = vpop.xlane.xlu0 %930
        %v932 = vsel %vm455, %v848, 0.0
        %933 = vadd.xlane.f32.xlu0 %v932
        %v934 = vpop.xlane.xlu0 %933
        %v935 = vsel %vm455, %v849, 0.0
        %936 = vadd.xlane.f32.xlu0 %v935
        %v937 = vpop.xlane.xlu0 %936
        %v938 = vsel %vm455, %v850, 0.0
        %939 = vadd.xlane.f32.xlu0 %v938
        %v940 = vpop.xlane.xlu0 %939
        %v941 = vsel %vm455, %v851, 0.0
        %942 = vadd.xlane.f32.xlu0 %v941
        %v943 = vpop.xlane.xlu0 %942
        %v944 = vsel %vm455, %v852, 0.0
        %945 = vadd.xlane.f32.xlu0 %v944
        %v946 = vpop.xlane.xlu0 %945
        %v947 = vsel %vm455, %v853, 0.0
        %948 = vadd.xlane.f32.xlu0 %v947
        %v949 = vpop.xlane.xlu0 %948
        %v982 = vlaneseq
        %v983 = vand.u32 %v982, 127
        %v984 = vperm.slane %v856, %v983
        %v985 = vadd.s32 %v983, 4294967288
        %v986 = vperm.slane %v859, %v985
        %vm987 = vcmask 130112
        %v988 = vsel %vm987, %v986, %v984
        %v989 = vperm.slane %v862, %v983
        %v990 = vperm.slane %v865, %v985
        %v991 = vsel %vm987, %v990, %v989
        %v992 = vperm.slane %v868, %v983
        %v993 = vperm.slane %v871, %v985
        %v994 = vsel %vm987, %v993, %v992
        %v995 = vperm.slane %v874, %v983
        %v996 = vperm.slane %v877, %v985
        %v997 = vsel %vm987, %v996, %v995
        %v998 = vperm.slane %v880, %v983
        %v999 = vperm.slane %v883, %v985
        %v1000 = vsel %vm987, %v999, %v998
        %v1001 = vperm.slane %v886, %v983
        %v1002 = vperm.slane %v889, %v985
        %v1003 = vsel %vm987, %v1002, %v1001
        %v1004 = vperm.slane %v892, %v983
        %v1005 = vperm.slane %v895, %v985
        %v1006 = vsel %vm987, %v1005, %v1004
        %v1007 = vperm.slane %v898, %v983
        %v1008 = vperm.slane %v901, %v985
        %v1009 = vsel %vm987, %v1008, %v1007
        %v1010 = vperm.slane %v904, %v983
        %v1011 = vperm.slane %v907, %v985
        %v1012 = vsel %vm987, %v1011, %v1010
        %v1013 = vperm.slane %v910, %v983
        %v1014 = vperm.slane %v913, %v985
        %v1015 = vsel %vm987, %v1014, %v1013
        %v1016 = vperm.slane %v916, %v983
        %v1017 = vperm.slane %v919, %v985
        %v1018 = vsel %vm987, %v1017, %v1016
        %v1019 = vperm.slane %v922, %v983
        %v1020 = vperm.slane %v925, %v985
        %v1021 = vsel %vm987, %v1020, %v1019
        %v1022 = vperm.slane %v928, %v983
        %v1023 = vperm.slane %v931, %v985
        %v1024 = vsel %vm987, %v1023, %v1022
        %v1025 = vperm.slane %v934, %v983
        %v1026 = vperm.slane %v937, %v985
        %v1027 = vsel %vm987, %v1026, %v1025
        %v1028 = vperm.slane %v940, %v983
        %v1029 = vperm.slane %v943, %v985
        %v1030 = vsel %vm987, %v1029, %v1028
        %v1031 = vperm.slane %v946, %v983
        %v1032 = vperm.slane %v949, %v985
        %v1033 = vsel %vm987, %v1032, %v1031
        %vm1034 = vcmask 1041409
        %v1035 = vsel %vm1034, %v991, %v988
        %vm1036 = vcmask 1042434
        %v1037 = vsel %vm1036, %v994, %v1035
        %vm1038 = vcmask 1043459
        %v1039 = vsel %vm1038, %v997, %v1037
        %vm1040 = vcmask 1044484
        %v1041 = vsel %vm1040, %v1000, %v1039
        %vm1042 = vcmask 1045509
        %v1043 = vsel %vm1042, %v1003, %v1041
        %vm1044 = vcmask 1046534
        %v1045 = vsel %vm1044, %v1006, %v1043
        %vm1046 = vcmask 1047559
        %v1047 = vsel %vm1046, %v1009, %v1045
        %v1048 = vsel %vm1034, %v1015, %v1012
        %v1049 = vsel %vm1036, %v1018, %v1048
        %v1050 = vsel %vm1038, %v1021, %v1049
        %v1051 = vsel %vm1040, %v1024, %v1050
        %v1052 = vsel %vm1042, %v1027, %v1051
        %v1053 = vsel %vm1044, %v1030, %v1052
        %v1054 = vsel %vm1046, %v1033, %v1053
        %vm1057 = vcmask 130048
        %v1058 = vsel %vm1057, %v1047, -inf
        %1059 = vmax.xlane.f32.xlu0 %v1058
        %v1060 = vpop.xlane.xlu0 %1059
        %v1061 = vsel %vm1057, %v1054, -inf
        %1062 = vmax.xlane.f32.xlu0 %v1061
        %v1063 = vpop.xlane.xlu0 %1062
        %v1066 = vperm.slane %v1060, 0
        %v1067 = vperm.slane %v1060, 1
        %v1068 = vperm.slane %v1060, 2
        %v1069 = vperm.slane %v1060, 3
        %v1070 = vperm.slane %v1060, 4
        %v1071 = vperm.slane %v1060, 5
        %v1072 = vperm.slane %v1060, 6
        %v1073 = vperm.slane %v1060, 7
        %v1074 = vperm.slane %v1063, 0
        %v1075 = vperm.slane %v1063, 1
        %v1076 = vperm.slane %v1063, 2
        %v1077 = vperm.slane %v1063, 3
        %v1078 = vperm.slane %v1063, 4
        %v1079 = vperm.slane %v1063, 5
        %v1080 = vperm.slane %v1063, 6
        %v1081 = vperm.slane %v1063, 7
        %v1098 = vsub.f32 %v856, %v1066
        %v1099 = vsub.f32 %v859, %v1066
        %v1100 = vsub.f32 %v862, %v1067
        %v1101 = vsub.f32 %v865, %v1067
        %v1102 = vsub.f32 %v868, %v1068
        %v1103 = vsub.f32 %v871, %v1068
        %v1104 = vsub.f32 %v874, %v1069
        %v1105 = vsub.f32 %v877, %v1069
        %v1106 = vsub.f32 %v880, %v1070
        %v1107 = vsub.f32 %v883, %v1070
        %v1108 = vsub.f32 %v886, %v1071
        %v1109 = vsub.f32 %v889, %v1071
        %v1110 = vsub.f32 %v892, %v1072
        %v1111 = vsub.f32 %v895, %v1072
        %v1112 = vsub.f32 %v898, %v1073
        %v1113 = vsub.f32 %v901, %v1073
        %v1114 = vsub.f32 %v904, %v1074
        %v1115 = vsub.f32 %v907, %v1074
        %v1116 = vsub.f32 %v910, %v1075
        %v1117 = vsub.f32 %v913, %v1075
        %v1118 = vsub.f32 %v916, %v1076
        %v1119 = vsub.f32 %v919, %v1076
        %v1120 = vsub.f32 %v922, %v1077
        %v1121 = vsub.f32 %v925, %v1077
        %v1122 = vsub.f32 %v928, %v1078
        %v1123 = vsub.f32 %v931, %v1078
        %v1124 = vsub.f32 %v934, %v1079
        %v1125 = vsub.f32 %v937, %v1079
        %v1126 = vsub.f32 %v940, %v1080
        %v1127 = vsub.f32 %v943, %v1080
        %v1128 = vsub.f32 %v946, %v1081
        %v1129 = vsub.f32 %v949, %v1081
        %v1130 = vmul.f32 %v1098, 1.442695
        %v1131 = vpow.pop %v1130
        %v1132 = vmul.f32 %v1099, 1.442695
        %v1133 = vpow.pop %v1132
        %v1134 = vmul.f32 %v1100, 1.442695
        %v1135 = vpow.pop %v1134
        %v1136 = vmul.f32 %v1101, 1.442695
        %v1137 = vpow.pop %v1136
        %v1138 = vmul.f32 %v1102, 1.442695
        %v1139 = vpow.pop %v1138
        %v1140 = vmul.f32 %v1103, 1.442695
        %v1141 = vpow.pop %v1140
        %v1142 = vmul.f32 %v1104, 1.442695
        %v1143 = vpow.pop %v1142
        %v1144 = vmul.f32 %v1105, 1.442695
        %v1145 = vpow.pop %v1144
        %v1146 = vmul.f32 %v1106, 1.442695
        %v1147 = vpow.pop %v1146
        %v1148 = vmul.f32 %v1107, 1.442695
        %v1149 = vpow.pop %v1148
        %v1150 = vmul.f32 %v1108, 1.442695
        %v1151 = vpow.pop %v1150
        %v1152 = vmul.f32 %v1109, 1.442695
        %v1153 = vpow.pop %v1152
        %v1154 = vmul.f32 %v1110, 1.442695
        %v1155 = vpow.pop %v1154
        %v1156 = vmul.f32 %v1111, 1.442695
        %v1157 = vpow.pop %v1156
        %v1158 = vmul.f32 %v1112, 1.442695
        %v1159 = vpow.pop %v1158
        %v1160 = vmul.f32 %v1113, 1.442695
        %v1161 = vpow.pop %v1160
        %v1162 = vmul.f32 %v1114, 1.442695
        %v1163 = vpow.pop %v1162
        %v1164 = vmul.f32 %v1115, 1.442695
        %v1165 = vpow.pop %v1164
        %v1166 = vmul.f32 %v1116, 1.442695
        %v1167 = vpow.pop %v1166
        %v1168 = vmul.f32 %v1117, 1.442695
        %v1169 = vpow.pop %v1168
        %v1170 = vmul.f32 %v1118, 1.442695
        %v1171 = vpow.pop %v1170
        %v1172 = vmul.f32 %v1119, 1.442695
        %v1173 = vpow.pop %v1172
        %v1174 = vmul.f32 %v1120, 1.442695
        %v1175 = vpow.pop %v1174
        %v1176 = vmul.f32 %v1121, 1.442695
        %v1177 = vpow.pop %v1176
        %v1178 = vmul.f32 %v1122, 1.442695
        %v1179 = vpow.pop %v1178
        %v1180 = vmul.f32 %v1123, 1.442695
        %v1181 = vpow.pop %v1180
        %v1182 = vmul.f32 %v1124, 1.442695
        %v1183 = vpow.pop %v1182
        %v1184 = vmul.f32 %v1125, 1.442695
        %v1185 = vpow.pop %v1184
        %v1186 = vmul.f32 %v1126, 1.442695
        %v1187 = vpow.pop %v1186
        %v1188 = vmul.f32 %v1127, 1.442695
        %v1189 = vpow.pop %v1188
        %v1190 = vmul.f32 %v1128, 1.442695
        %v1191 = vpow.pop %v1190
        %v1192 = vmul.f32 %v1129, 1.442695
        %v1193 = vpow.pop %v1192
        %1226 = vset.pattern.permute.xlu0 0
        %1227 = vperm.xlu0 %1226, %v1131
        %v1228 = vpop.permute.xlu0 %1227
        %1229 = vset.pattern.permute.xlu0 0
        %1230 = vperm.xlu0 %1229, %v1133
        %v1231 = vpop.permute.xlu0 %1230
        %1232 = vset.pattern.permute.xlu0 0
        %1233 = vperm.xlu0 %1232, %v1135
        %v1234 = vpop.permute.xlu0 %1233
        %1235 = vset.pattern.permute.xlu0 0
        %1236 = vperm.xlu0 %1235, %v1137
        %v1237 = vpop.permute.xlu0 %1236
        %1238 = vset.pattern.permute.xlu0 0
        %1239 = vperm.xlu0 %1238, %v1139
        %v1240 = vpop.permute.xlu0 %1239
        %1241 = vset.pattern.permute.xlu0 0
        %1242 = vperm.xlu0 %1241, %v1141
        %v1243 = vpop.permute.xlu0 %1242
        %1244 = vset.pattern.permute.xlu0 0
        %1245 = vperm.xlu0 %1244, %v1143
        %v1246 = vpop.permute.xlu0 %1245
        %1247 = vset.pattern.permute.xlu0 0
        %1248 = vperm.xlu0 %1247, %v1145
        %v1249 = vpop.permute.xlu0 %1248
        %1250 = vset.pattern.permute.xlu0 0
        %1251 = vperm.xlu0 %1250, %v1147
        %v1252 = vpop.permute.xlu0 %1251
        %1253 = vset.pattern.permute.xlu0 0
        %1254 = vperm.xlu0 %1253, %v1149
        %v1255 = vpop.permute.xlu0 %1254
        %1256 = vset.pattern.permute.xlu0 0
        %1257 = vperm.xlu0 %1256, %v1151
        %v1258 = vpop.permute.xlu0 %1257
        %1259 = vset.pattern.permute.xlu0 0
        %1260 = vperm.xlu0 %1259, %v1153
        %v1261 = vpop.permute.xlu0 %1260
        %1262 = vset.pattern.permute.xlu0 0
        %1263 = vperm.xlu0 %1262, %v1155
        %v1264 = vpop.permute.xlu0 %1263
        %1265 = vset.pattern.permute.xlu0 0
        %1266 = vperm.xlu0 %1265, %v1157
        %v1267 = vpop.permute.xlu0 %1266
        %1268 = vset.pattern.permute.xlu0 0
        %1269 = vperm.xlu0 %1268, %v1159
        %v1270 = vpop.permute.xlu0 %1269
        %1271 = vset.pattern.permute.xlu0 0
        %1272 = vperm.xlu0 %1271, %v1161
        %v1273 = vpop.permute.xlu0 %1272
        %1274 = vset.pattern.permute.xlu0 0
        %1275 = vperm.xlu0 %1274, %v1163
        %v1276 = vpop.permute.xlu0 %1275
        %1277 = vset.pattern.permute.xlu0 0
        %1278 = vperm.xlu0 %1277, %v1165
        %v1279 = vpop.permute.xlu0 %1278
        %1280 = vset.pattern.permute.xlu0 0
        %1281 = vperm.xlu0 %1280, %v1167
        %v1282 = vpop.permute.xlu0 %1281
        %1283 = vset.pattern.permute.xlu0 0
        %1284 = vperm.xlu0 %1283, %v1169
        %v1285 = vpop.permute.xlu0 %1284
        %1286 = vset.pattern.permute.xlu0 0
        %1287 = vperm.xlu0 %1286, %v1171
        %v1288 = vpop.permute.xlu0 %1287
        %1289 = vset.pattern.permute.xlu0 0
        %1290 = vperm.xlu0 %1289, %v1173
        %v1291 = vpop.permute.xlu0 %1290
        %1292 = vset.pattern.permute.xlu0 0
        %1293 = vperm.xlu0 %1292, %v1175
        %v1294 = vpop.permute.xlu0 %1293
        %1295 = vset.pattern.permute.xlu0 0
        %1296 = vperm.xlu0 %1295, %v1177
        %v1297 = vpop.permute.xlu0 %1296
        %1298 = vset.pattern.permute.xlu0 0
        %1299 = vperm.xlu0 %1298, %v1179
        %v1300 = vpop.permute.xlu0 %1299
        %1301 = vset.pattern.permute.xlu0 0
        %1302 = vperm.xlu0 %1301, %v1181
        %v1303 = vpop.permute.xlu0 %1302
        %1304 = vset.pattern.permute.xlu0 0
        %1305 = vperm.xlu0 %1304, %v1183
        %v1306 = vpop.permute.xlu0 %1305
        %1307 = vset.pattern.permute.xlu0 0
        %1308 = vperm.xlu0 %1307, %v1185
        %v1309 = vpop.permute.xlu0 %1308
        %1310 = vset.pattern.permute.xlu0 0
        %1311 = vperm.xlu0 %1310, %v1187
        %v1312 = vpop.permute.xlu0 %1311
        %1313 = vset.pattern.permute.xlu0 0
        %1314 = vperm.xlu0 %1313, %v1189
        %v1315 = vpop.permute.xlu0 %1314
        %1316 = vset.pattern.permute.xlu0 0
        %1317 = vperm.xlu0 %1316, %v1191
        %v1318 = vpop.permute.xlu0 %1317
        %1319 = vset.pattern.permute.xlu0 0
        %1320 = vperm.xlu0 %1319, %v1193
        %v1321 = vpop.permute.xlu0 %1320
        %v1322 = vperm.slane %v1228, %v983
        %v1323 = vperm.slane %v1231, %v985
        %v1324 = vsel %vm987, %v1323, %v1322
        %v1325 = vperm.slane %v1234, %v983
        %v1326 = vperm.slane %v1237, %v985
        %v1327 = vsel %vm987, %v1326, %v1325
        %v1328 = vperm.slane %v1240, %v983
        %v1329 = vperm.slane %v1243, %v985
        %v1330 = vsel %vm987, %v1329, %v1328
        %v1331 = vperm.slane %v1246, %v983
        %v1332 = vperm.slane %v1249, %v985
        %v1333 = vsel %vm987, %v1332, %v1331
        %v1334 = vperm.slane %v1252, %v983
        %v1335 = vperm.slane %v1255, %v985
        %v1336 = vsel %vm987, %v1335, %v1334
        %v1337 = vperm.slane %v1258, %v983
        %v1338 = vperm.slane %v1261, %v985
        %v1339 = vsel %vm987, %v1338, %v1337
        %v1340 = vperm.slane %v1264, %v983
        %v1341 = vperm.slane %v1267, %v985
        %v1342 = vsel %vm987, %v1341, %v1340
        %v1343 = vperm.slane %v1270, %v983
        %v1344 = vperm.slane %v1273, %v985
        %v1345 = vsel %vm987, %v1344, %v1343
        %v1346 = vperm.slane %v1276, %v983
        %v1347 = vperm.slane %v1279, %v985
        %v1348 = vsel %vm987, %v1347, %v1346
        %v1349 = vperm.slane %v1282, %v983
        %v1350 = vperm.slane %v1285, %v985
        %v1351 = vsel %vm987, %v1350, %v1349
        %v1352 = vperm.slane %v1288, %v983
        %v1353 = vperm.slane %v1291, %v985
        %v1354 = vsel %vm987, %v1353, %v1352
        %v1355 = vperm.slane %v1294, %v983
        %v1356 = vperm.slane %v1297, %v985
        %v1357 = vsel %vm987, %v1356, %v1355
        %v1358 = vperm.slane %v1300, %v983
        %v1359 = vperm.slane %v1303, %v985
        %v1360 = vsel %vm987, %v1359, %v1358
        %v1361 = vperm.slane %v1306, %v983
        %v1362 = vperm.slane %v1309, %v985
        %v1363 = vsel %vm987, %v1362, %v1361
        %v1364 = vperm.slane %v1312, %v983
        %v1365 = vperm.slane %v1315, %v985
        %v1366 = vsel %vm987, %v1365, %v1364
        %v1367 = vperm.slane %v1318, %v983
        %v1368 = vperm.slane %v1321, %v985
        %v1369 = vsel %vm987, %v1368, %v1367
        %v1370 = vsel %vm1034, %v1327, %v1324
        %v1371 = vsel %vm1036, %v1330, %v1370
        %v1372 = vsel %vm1038, %v1333, %v1371
        %v1373 = vsel %vm1040, %v1336, %v1372
        %v1374 = vsel %vm1042, %v1339, %v1373
        %v1375 = vsel %vm1044, %v1342, %v1374
        %v1376 = vsel %vm1046, %v1345, %v1375
        %v1377 = vsel %vm1034, %v1351, %v1348
        %v1378 = vsel %vm1036, %v1354, %v1377
        %v1379 = vsel %vm1038, %v1357, %v1378
        %v1380 = vsel %vm1040, %v1360, %v1379
        %v1381 = vsel %vm1042, %v1363, %v1380
        %v1382 = vsel %vm1044, %v1366, %v1381
        %v1383 = vsel %vm1046, %v1369, %v1382
        %v1386 = vsel %vm1057, %v1376, 0.0
        %1387 = vadd.xlane.f32.xlu0 %v1386
        %v1388 = vpop.xlane.xlu0 %1387
        %v1389 = vsel %vm1057, %v1383, 0.0
        %1390 = vadd.xlane.f32.xlu0 %v1389
        %v1391 = vpop.xlane.xlu0 %1390
        %v1394 = vperm.slane %v1388, 0
        %v1395 = vperm.slane %v1388, 1
        %v1396 = vperm.slane %v1388, 2
        %v1397 = vperm.slane %v1388, 3
        %v1398 = vperm.slane %v1388, 4
        %v1399 = vperm.slane %v1388, 5
        %v1400 = vperm.slane %v1388, 6
        %v1401 = vperm.slane %v1388, 7
        %v1402 = vperm.slane %v1391, 0
        %v1403 = vperm.slane %v1391, 1
        %v1404 = vperm.slane %v1391, 2
        %v1405 = vperm.slane %v1391, 3
        %v1406 = vperm.slane %v1391, 4
        %v1407 = vperm.slane %v1391, 5
        %v1408 = vperm.slane %v1391, 6
        %v1409 = vperm.slane %v1391, 7
        %v1426 = vrcp.pop %v1394
        %v1427 = vmul.f32 %v1394, %v1426
        %v1428 = vsub.f32 1.0, %v1427
        %v1429 = vmul.f32 %v1426, %v1428
        %v1430 = vadd.f32 %v1426, %v1429
        %vm1431 = vweird.f32 %v1394
        %vm1432 = vweird.f32 %v1426
        %vm1433 = vmor %vm1431, %vm1432
        %v1434 = vsel %vm1433, %v1426, %v1430
        %v1435 = vand.u32 2147483647, %v1394
        %vm1436 = vcmp.eq.f32.partialorder %v1435, 8.507059e+37
        %v1437 = vand.u32 %v1394, 2147483648
        %v1438 = vor.u32 1.1754944e-38, %v1437
        %v1439 = vsel %vm1436, %v1438, %v1434
        %v1440 = vmul.f32 %v1131, %v1439
        %v1441 = vmul.f32 %v1133, %v1439
        %v1442 = vrcp.pop %v1395
        %v1443 = vmul.f32 %v1395, %v1442
        %v1444 = vsub.f32 1.0, %v1443
        %v1445 = vmul.f32 %v1442, %v1444
        %v1446 = vadd.f32 %v1442, %v1445
        %vm1447 = vweird.f32 %v1395
        %vm1448 = vweird.f32 %v1442
        %vm1449 = vmor %vm1447, %vm1448
        %v1450 = vsel %vm1449, %v1442, %v1446
        %v1451 = vand.u32 2147483647, %v1395
        %vm1452 = vcmp.eq.f32.partialorder %v1451, 8.507059e+37
        %v1453 = vand.u32 %v1395, 2147483648
        %v1454 = vor.u32 1.1754944e-38, %v1453
        %v1455 = vsel %vm1452, %v1454, %v1450
        %v1456 = vmul.f32 %v1135, %v1455
        %v1457 = vmul.f32 %v1137, %v1455
        %v1458 = vrcp.pop %v1396
        %v1459 = vmul.f32 %v1396, %v1458
        %v1460 = vsub.f32 1.0, %v1459
        %v1461 = vmul.f32 %v1458, %v1460
        %v1462 = vadd.f32 %v1458, %v1461
        %vm1463 = vweird.f32 %v1396
        %vm1464 = vweird.f32 %v1458
        %vm1465 = vmor %vm1463, %vm1464
        %v1466 = vsel %vm1465, %v1458, %v1462
        %v1467 = vand.u32 2147483647, %v1396
        %vm1468 = vcmp.eq.f32.partialorder %v1467, 8.507059e+37
        %v1469 = vand.u32 %v1396, 2147483648
        %v1470 = vor.u32 1.1754944e-38, %v1469
        %v1471 = vsel %vm1468, %v1470, %v1466
        %v1472 = vmul.f32 %v1139, %v1471
        %v1473 = vmul.f32 %v1141, %v1471
        %v1474 = vrcp.pop %v1397
        %v1475 = vmul.f32 %v1397, %v1474
        %v1476 = vsub.f32 1.0, %v1475
        %v1477 = vmul.f32 %v1474, %v1476
        %v1478 = vadd.f32 %v1474, %v1477
        %vm1479 = vweird.f32 %v1397
        %vm1480 = vweird.f32 %v1474
        %vm1481 = vmor %vm1479, %vm1480
        %v1482 = vsel %vm1481, %v1474, %v1478
        %v1483 = vand.u32 2147483647, %v1397
        %vm1484 = vcmp.eq.f32.partialorder %v1483, 8.507059e+37
        %v1485 = vand.u32 %v1397, 2147483648
        %v1486 = vor.u32 1.1754944e-38, %v1485
        %v1487 = vsel %vm1484, %v1486, %v1482
        %v1488 = vmul.f32 %v1143, %v1487
        %v1489 = vmul.f32 %v1145, %v1487
        %v1490 = vrcp.pop %v1398
        %v1491 = vmul.f32 %v1398, %v1490
        %v1492 = vsub.f32 1.0, %v1491
        %v1493 = vmul.f32 %v1490, %v1492
        %v1494 = vadd.f32 %v1490, %v1493
        %vm1495 = vweird.f32 %v1398
        %vm1496 = vweird.f32 %v1490
        %vm1497 = vmor %vm1495, %vm1496
        %v1498 = vsel %vm1497, %v1490, %v1494
        %v1499 = vand.u32 2147483647, %v1398
        %vm1500 = vcmp.eq.f32.partialorder %v1499, 8.507059e+37
        %v1501 = vand.u32 %v1398, 2147483648
        %v1502 = vor.u32 1.1754944e-38, %v1501
        %v1503 = vsel %vm1500, %v1502, %v1498
        %v1504 = vmul.f32 %v1147, %v1503
        %v1505 = vmul.f32 %v1149, %v1503
        %v1506 = vrcp.pop %v1399
        %v1507 = vmul.f32 %v1399, %v1506
        %v1508 = vsub.f32 1.0, %v1507
        %v1509 = vmul.f32 %v1506, %v1508
        %v1510 = vadd.f32 %v1506, %v1509
        %vm1511 = vweird.f32 %v1399
        %vm1512 = vweird.f32 %v1506
        %vm1513 = vmor %vm1511, %vm1512
        %v1514 = vsel %vm1513, %v1506, %v1510
        %v1515 = vand.u32 2147483647, %v1399
        %vm1516 = vcmp.eq.f32.partialorder %v1515, 8.507059e+37
        %v1517 = vand.u32 %v1399, 2147483648
        %v1518 = vor.u32 1.1754944e-38, %v1517
        %v1519 = vsel %vm1516, %v1518, %v1514
        %v1520 = vmul.f32 %v1151, %v1519
        %v1521 = vmul.f32 %v1153, %v1519
        %v1522 = vrcp.pop %v1400
        %v1523 = vmul.f32 %v1400, %v1522
        %v1524 = vsub.f32 1.0, %v1523
        %v1525 = vmul.f32 %v1522, %v1524
        %v1526 = vadd.f32 %v1522, %v1525
        %vm1527 = vweird.f32 %v1400
        %vm1528 = vweird.f32 %v1522
        %vm1529 = vmor %vm1527, %vm1528
        %v1530 = vsel %vm1529, %v1522, %v1526
        %v1531 = vand.u32 2147483647, %v1400
        %vm1532 = vcmp.eq.f32.partialorder %v1531, 8.507059e+37
        %v1533 = vand.u32 %v1400, 2147483648
        %v1534 = vor.u32 1.1754944e-38, %v1533
        %v1535 = vsel %vm1532, %v1534, %v1530
        %v1536 = vmul.f32 %v1155, %v1535
        %v1537 = vmul.f32 %v1157, %v1535
        %v1538 = vrcp.pop %v1401
        %v1539 = vmul.f32 %v1401, %v1538
        %v1540 = vsub.f32 1.0, %v1539
        %v1541 = vmul.f32 %v1538, %v1540
        %v1542 = vadd.f32 %v1538, %v1541
        %vm1543 = vweird.f32 %v1401
        %vm1544 = vweird.f32 %v1538
        %vm1545 = vmor %vm1543, %vm1544
        %v1546 = vsel %vm1545, %v1538, %v1542
        %v1547 = vand.u32 2147483647, %v1401
        %vm1548 = vcmp.eq.f32.partialorder %v1547, 8.507059e+37
        %v1549 = vand.u32 %v1401, 2147483648
        %v1550 = vor.u32 1.1754944e-38, %v1549
        %v1551 = vsel %vm1548, %v1550, %v1546
        %v1552 = vmul.f32 %v1159, %v1551
        %v1553 = vmul.f32 %v1161, %v1551
        %v1554 = vrcp.pop %v1402
        %v1555 = vmul.f32 %v1402, %v1554
        %v1556 = vsub.f32 1.0, %v1555
        %v1557 = vmul.f32 %v1554, %v1556
        %v1558 = vadd.f32 %v1554, %v1557
        %vm1559 = vweird.f32 %v1402
        %vm1560 = vweird.f32 %v1554
        %vm1561 = vmor %vm1559, %vm1560
        %v1562 = vsel %vm1561, %v1554, %v1558
        %v1563 = vand.u32 2147483647, %v1402
        %vm1564 = vcmp.eq.f32.partialorder %v1563, 8.507059e+37
        %v1565 = vand.u32 %v1402, 2147483648
        %v1566 = vor.u32 1.1754944e-38, %v1565
        %v1567 = vsel %vm1564, %v1566, %v1562
        %v1568 = vmul.f32 %v1163, %v1567
        %v1569 = vmul.f32 %v1165, %v1567
        %v1570 = vrcp.pop %v1403
        %v1571 = vmul.f32 %v1403, %v1570
        %v1572 = vsub.f32 1.0, %v1571
        %v1573 = vmul.f32 %v1570, %v1572
        %v1574 = vadd.f32 %v1570, %v1573
        %vm1575 = vweird.f32 %v1403
        %vm1576 = vweird.f32 %v1570
        %vm1577 = vmor %vm1575, %vm1576
        %v1578 = vsel %vm1577, %v1570, %v1574
        %v1579 = vand.u32 2147483647, %v1403
        %vm1580 = vcmp.eq.f32.partialorder %v1579, 8.507059e+37
        %v1581 = vand.u32 %v1403, 2147483648
        %v1582 = vor.u32 1.1754944e-38, %v1581
        %v1583 = vsel %vm1580, %v1582, %v1578
        %v1584 = vmul.f32 %v1167, %v1583
        %v1585 = vmul.f32 %v1169, %v1583
        %v1586 = vrcp.pop %v1404
        %v1587 = vmul.f32 %v1404, %v1586
        %v1588 = vsub.f32 1.0, %v1587
        %v1589 = vmul.f32 %v1586, %v1588
        %v1590 = vadd.f32 %v1586, %v1589
        %vm1591 = vweird.f32 %v1404
        %vm1592 = vweird.f32 %v1586
        %vm1593 = vmor %vm1591, %vm1592
        %v1594 = vsel %vm1593, %v1586, %v1590
        %v1595 = vand.u32 2147483647, %v1404
        %vm1596 = vcmp.eq.f32.partialorder %v1595, 8.507059e+37
        %v1597 = vand.u32 %v1404, 2147483648
        %v1598 = vor.u32 1.1754944e-38, %v1597
        %v1599 = vsel %vm1596, %v1598, %v1594
        %v1600 = vmul.f32 %v1171, %v1599
        %v1601 = vmul.f32 %v1173, %v1599
        %v1602 = vrcp.pop %v1405
        %v1603 = vmul.f32 %v1405, %v1602
        %v1604 = vsub.f32 1.0, %v1603
        %v1605 = vmul.f32 %v1602, %v1604
        %v1606 = vadd.f32 %v1602, %v1605
        %vm1607 = vweird.f32 %v1405
        %vm1608 = vweird.f32 %v1602
        %vm1609 = vmor %vm1607, %vm1608
        %v1610 = vsel %vm1609, %v1602, %v1606
        %v1611 = vand.u32 2147483647, %v1405
        %vm1612 = vcmp.eq.f32.partialorder %v1611, 8.507059e+37
        %v1613 = vand.u32 %v1405, 2147483648
        %v1614 = vor.u32 1.1754944e-38, %v1613
        %v1615 = vsel %vm1612, %v1614, %v1610
        %v1616 = vmul.f32 %v1175, %v1615
        %v1617 = vmul.f32 %v1177, %v1615
        %v1618 = vrcp.pop %v1406
        %v1619 = vmul.f32 %v1406, %v1618
        %v1620 = vsub.f32 1.0, %v1619
        %v1621 = vmul.f32 %v1618, %v1620
        %v1622 = vadd.f32 %v1618, %v1621
        %vm1623 = vweird.f32 %v1406
        %vm1624 = vweird.f32 %v1618
        %vm1625 = vmor %vm1623, %vm1624
        %v1626 = vsel %vm1625, %v1618, %v1622
        %v1627 = vand.u32 2147483647, %v1406
        %vm1628 = vcmp.eq.f32.partialorder %v1627, 8.507059e+37
        %v1629 = vand.u32 %v1406, 2147483648
        %v1630 = vor.u32 1.1754944e-38, %v1629
        %v1631 = vsel %vm1628, %v1630, %v1626
        %v1632 = vmul.f32 %v1179, %v1631
        %v1633 = vmul.f32 %v1181, %v1631
        %v1634 = vrcp.pop %v1407
        %v1635 = vmul.f32 %v1407, %v1634
        %v1636 = vsub.f32 1.0, %v1635
        %v1637 = vmul.f32 %v1634, %v1636
        %v1638 = vadd.f32 %v1634, %v1637
        %vm1639 = vweird.f32 %v1407
        %vm1640 = vweird.f32 %v1634
        %vm1641 = vmor %vm1639, %vm1640
        %v1642 = vsel %vm1641, %v1634, %v1638
        %v1643 = vand.u32 2147483647, %v1407
        %vm1644 = vcmp.eq.f32.partialorder %v1643, 8.507059e+37
        %v1645 = vand.u32 %v1407, 2147483648
        %v1646 = vor.u32 1.1754944e-38, %v1645
        %v1647 = vsel %vm1644, %v1646, %v1642
        %v1648 = vmul.f32 %v1183, %v1647
        %v1649 = vmul.f32 %v1185, %v1647
        %v1650 = vrcp.pop %v1408
        %v1651 = vmul.f32 %v1408, %v1650
        %v1652 = vsub.f32 1.0, %v1651
        %v1653 = vmul.f32 %v1650, %v1652
        %v1654 = vadd.f32 %v1650, %v1653
        %vm1655 = vweird.f32 %v1408
        %vm1656 = vweird.f32 %v1650
        %vm1657 = vmor %vm1655, %vm1656
        %v1658 = vsel %vm1657, %v1650, %v1654
        %v1659 = vand.u32 2147483647, %v1408
        %vm1660 = vcmp.eq.f32.partialorder %v1659, 8.507059e+37
        %v1661 = vand.u32 %v1408, 2147483648
        %v1662 = vor.u32 1.1754944e-38, %v1661
        %v1663 = vsel %vm1660, %v1662, %v1658
        %v1664 = vmul.f32 %v1187, %v1663
        %v1665 = vmul.f32 %v1189, %v1663
        %v1666 = vrcp.pop %v1409
        %v1667 = vmul.f32 %v1409, %v1666
        %v1668 = vsub.f32 1.0, %v1667
        %v1669 = vmul.f32 %v1666, %v1668
        %v1670 = vadd.f32 %v1666, %v1669
        %vm1671 = vweird.f32 %v1409
        %vm1672 = vweird.f32 %v1666
        %vm1673 = vmor %vm1671, %vm1672
        %v1674 = vsel %vm1673, %v1666, %v1670
        %v1675 = vand.u32 2147483647, %v1409
        %vm1676 = vcmp.eq.f32.partialorder %v1675, 8.507059e+37
        %v1677 = vand.u32 %v1409, 2147483648
        %v1678 = vor.u32 1.1754944e-38, %v1677
        %v1679 = vsel %vm1676, %v1678, %v1674
        %v1680 = vmul.f32 %v1191, %v1679
        %v1681 = vmul.f32 %v1193, %v1679
        %1683 = vset.pattern.permute.xlu0 0
        %1684 = vperm.xlu0 %1683, %v1440
        %v1685 = vpop.permute.xlu0 %1684
        %1688 = vset.pattern.permute.xlu0 0
        %1689 = vperm.xlu0 %1688, %v1441
        %v1690 = vpop.permute.xlu0 %1689
        %1693 = vset.pattern.permute.xlu0 0
        %1694 = vperm.xlu0 %1693, %v1456
        %v1695 = vpop.permute.xlu0 %1694
        %1698 = vset.pattern.permute.xlu0 0
        %1699 = vperm.xlu0 %1698, %v1457
        %v1700 = vpop.permute.xlu0 %1699
        %1703 = vset.pattern.permute.xlu0 0
        %1704 = vperm.xlu0 %1703, %v1472
        %v1705 = vpop.permute.xlu0 %1704
        %1708 = vset.pattern.permute.xlu0 0
        %1709 = vperm.xlu0 %1708, %v1473
        %v1710 = vpop.permute.xlu0 %1709
        %1713 = vset.pattern.permute.xlu0 0
        %1714 = vperm.xlu0 %1713, %v1488
        %v1715 = vpop.permute.xlu0 %1714
        %1718 = vset.pattern.permute.xlu0 0
        %1719 = vperm.xlu0 %1718, %v1489
        %v1720 = vpop.permute.xlu0 %1719
        %1723 = vset.pattern.permute.xlu0 0
        %1724 = vperm.xlu0 %1723, %v1504
        %v1725 = vpop.permute.xlu0 %1724
        %1728 = vset.pattern.permute.xlu0 0
        %1729 = vperm.xlu0 %1728, %v1505
        %v1730 = vpop.permute.xlu0 %1729
        %1733 = vset.pattern.permute.xlu0 0
        %1734 = vperm.xlu0 %1733, %v1520
        %v1735 = vpop.permute.xlu0 %1734
        %1738 = vset.pattern.permute.xlu0 0
        %1739 = vperm.xlu0 %1738, %v1521
        %v1740 = vpop.permute.xlu0 %1739
        %1743 = vset.pattern.permute.xlu0 0
        %1744 = vperm.xlu0 %1743, %v1536
        %v1745 = vpop.permute.xlu0 %1744
        %1748 = vset.pattern.permute.xlu0 0
        %1749 = vperm.xlu0 %1748, %v1537
        %v1750 = vpop.permute.xlu0 %1749
        %1753 = vset.pattern.permute.xlu0 0
        %1754 = vperm.xlu0 %1753, %v1552
        %v1755 = vpop.permute.xlu0 %1754
        %1758 = vset.pattern.permute.xlu0 0
        %1759 = vperm.xlu0 %1758, %v1553
        %v1760 = vpop.permute.xlu0 %1759
        %1763 = vset.pattern.permute.xlu0 0
        %1764 = vperm.xlu0 %1763, %v1568
        %v1765 = vpop.permute.xlu0 %1764
        %1768 = vset.pattern.permute.xlu0 0
        %1769 = vperm.xlu0 %1768, %v1569
        %v1770 = vpop.permute.xlu0 %1769
        %1773 = vset.pattern.permute.xlu0 0
        %1774 = vperm.xlu0 %1773, %v1584
        %v1775 = vpop.permute.xlu0 %1774
        %1778 = vset.pattern.permute.xlu0 0
        %1779 = vperm.xlu0 %1778, %v1585
        %v1780 = vpop.permute.xlu0 %1779
        %1783 = vset.pattern.permute.xlu0 0
        %1784 = vperm.xlu0 %1783, %v1600
        %v1785 = vpop.permute.xlu0 %1784
        %1788 = vset.pattern.permute.xlu0 0
        %1789 = vperm.xlu0 %1788, %v1601
        %v1790 = vpop.permute.xlu0 %1789
        %1793 = vset.pattern.permute.xlu0 0
        %1794 = vperm.xlu0 %1793, %v1616
        %v1795 = vpop.permute.xlu0 %1794
        %1798 = vset.pattern.permute.xlu0 0
        %1799 = vperm.xlu0 %1798, %v1617
        %v1800 = vpop.permute.xlu0 %1799
        %1803 = vset.pattern.permute.xlu0 0
        %1804 = vperm.xlu0 %1803, %v1632
        %v1805 = vpop.permute.xlu0 %1804
        %1808 = vset.pattern.permute.xlu0 0
        %1809 = vperm.xlu0 %1808, %v1633
        %v1810 = vpop.permute.xlu0 %1809
        %1813 = vset.pattern.permute.xlu0 0
        %1814 = vperm.xlu0 %1813, %v1648
        %v1815 = vpop.permute.xlu0 %1814
        %1818 = vset.pattern.permute.xlu0 0
        %1819 = vperm.xlu0 %1818, %v1649
        %v1820 = vpop.permute.xlu0 %1819
        %1823 = vset.pattern.permute.xlu0 0
        %1824 = vperm.xlu0 %1823, %v1664
        %v1825 = vpop.permute.xlu0 %1824
        %1828 = vset.pattern.permute.xlu0 0
        %1829 = vperm.xlu0 %1828, %v1665
        %v1830 = vpop.permute.xlu0 %1829
        %1833 = vset.pattern.permute.xlu0 0
        %1834 = vperm.xlu0 %1833, %v1680
        %v1835 = vpop.permute.xlu0 %1834
        %1838 = vset.pattern.permute.xlu0 0
        %1839 = vperm.xlu0 %1838, %v1681
        %v1840 = vpop.permute.xlu0 %1839
        %v1842 = vmul.f32 %v419, %v1685
        %v1843 = vmul.f32 %v420, %v1690
        %v1844 = vmul.f32 %v421, %v1695
        %v1845 = vmul.f32 %v422, %v1700
        %v1846 = vmul.f32 %v423, %v1705
        %v1847 = vmul.f32 %v424, %v1710
        %v1848 = vmul.f32 %v425, %v1715
        %v1849 = vmul.f32 %v426, %v1720
        %v1850 = vmul.f32 %v427, %v1725
        %v1851 = vmul.f32 %v428, %v1730
        %v1852 = vmul.f32 %v429, %v1735
        %v1853 = vmul.f32 %v430, %v1740
        %v1854 = vmul.f32 %v431, %v1745
        %v1855 = vmul.f32 %v432, %v1750
        %v1856 = vmul.f32 %v433, %v1755
        %v1857 = vmul.f32 %v434, %v1760
        %v1858 = vmul.f32 %v435, %v1765
        %v1859 = vmul.f32 %v436, %v1770
        %v1860 = vmul.f32 %v437, %v1775
        %v1861 = vmul.f32 %v438, %v1780
        %v1862 = vmul.f32 %v439, %v1785
        %v1863 = vmul.f32 %v440, %v1790
        %v1864 = vmul.f32 %v441, %v1795
        %v1865 = vmul.f32 %v442, %v1800
        %v1866 = vmul.f32 %v443, %v1805
        %v1867 = vmul.f32 %v444, %v1810
        %v1868 = vmul.f32 %v445, %v1815
        %v1869 = vmul.f32 %v446, %v1820
        %v1870 = vmul.f32 %v447, %v1825
        %v1871 = vmul.f32 %v448, %v1830
        %v1872 = vmul.f32 %v449, %v1835
        %v1873 = vmul.f32 %v450, %v1840
        %v1874 = vsel %vm455, %v1842, 0.0
        %v1875 = vsel %vm455, %v1843, 0.0
        %v1876 = vadd.f32 %v1874, %v1875
        %v1877 = vrot.slane %v1876, 4
        %v1878 = vadd.f32 %v1876, %v1877
        %v1879 = vrot.slane %v1878, 2
        %v1880 = vadd.f32 %v1878, %v1879
        %v1881 = vrot.slane %v1880, 1
        %v1882 = vadd.f32 %v1880, %v1881
        %v1883 = vsel %vm455, %v1844, 0.0
        %v1884 = vsel %vm455, %v1845, 0.0
        %v1885 = vadd.f32 %v1883, %v1884
        %v1886 = vrot.slane %v1885, 4
        %v1887 = vadd.f32 %v1885, %v1886
        %v1888 = vrot.slane %v1887, 2
        %v1889 = vadd.f32 %v1887, %v1888
        %v1890 = vrot.slane %v1889, 1
        %v1891 = vadd.f32 %v1889, %v1890
        %v1892 = vsel %vm455, %v1846, 0.0
        %v1893 = vsel %vm455, %v1847, 0.0
        %v1894 = vadd.f32 %v1892, %v1893
        %v1895 = vrot.slane %v1894, 4
        %v1896 = vadd.f32 %v1894, %v1895
        %v1897 = vrot.slane %v1896, 2
        %v1898 = vadd.f32 %v1896, %v1897
        %v1899 = vrot.slane %v1898, 1
        %v1900 = vadd.f32 %v1898, %v1899
        %v1901 = vsel %vm455, %v1848, 0.0
        %v1902 = vsel %vm455, %v1849, 0.0
        %v1903 = vadd.f32 %v1901, %v1902
        %v1904 = vrot.slane %v1903, 4
        %v1905 = vadd.f32 %v1903, %v1904
        %v1906 = vrot.slane %v1905, 2
        %v1907 = vadd.f32 %v1905, %v1906
        %v1908 = vrot.slane %v1907, 1
        %v1909 = vadd.f32 %v1907, %v1908
        %v1910 = vsel %vm455, %v1850, 0.0
        %v1911 = vsel %vm455, %v1851, 0.0
        %v1912 = vadd.f32 %v1910, %v1911
        %v1913 = vrot.slane %v1912, 4
        %v1914 = vadd.f32 %v1912, %v1913
        %v1915 = vrot.slane %v1914, 2
        %v1916 = vadd.f32 %v1914, %v1915
        %v1917 = vrot.slane %v1916, 1
        %v1918 = vadd.f32 %v1916, %v1917
        %v1919 = vsel %vm455, %v1852, 0.0
        %v1920 = vsel %vm455, %v1853, 0.0
        %v1921 = vadd.f32 %v1919, %v1920
        %v1922 = vrot.slane %v1921, 4
        %v1923 = vadd.f32 %v1921, %v1922
        %v1924 = vrot.slane %v1923, 2
        %v1925 = vadd.f32 %v1923, %v1924
        %v1926 = vrot.slane %v1925, 1
        %v1927 = vadd.f32 %v1925, %v1926
        %v1928 = vsel %vm455, %v1854, 0.0
        %v1929 = vsel %vm455, %v1855, 0.0
        %v1930 = vadd.f32 %v1928, %v1929
        %v1931 = vrot.slane %v1930, 4
        %v1932 = vadd.f32 %v1930, %v1931
        %v1933 = vrot.slane %v1932, 2
        %v1934 = vadd.f32 %v1932, %v1933
        %v1935 = vrot.slane %v1934, 1
        %v1936 = vadd.f32 %v1934, %v1935
        %v1937 = vsel %vm455, %v1856, 0.0
        %v1938 = vsel %vm455, %v1857, 0.0
        %v1939 = vadd.f32 %v1937, %v1938
        %v1940 = vrot.slane %v1939, 4
        %v1941 = vadd.f32 %v1939, %v1940
        %v1942 = vrot.slane %v1941, 2
        %v1943 = vadd.f32 %v1941, %v1942
        %v1944 = vrot.slane %v1943, 1
        %v1945 = vadd.f32 %v1943, %v1944
        %v1946 = vsel %vm455, %v1858, 0.0
        %v1947 = vsel %vm455, %v1859, 0.0
        %v1948 = vadd.f32 %v1946, %v1947
        %v1949 = vrot.slane %v1948, 4
        %v1950 = vadd.f32 %v1948, %v1949
        %v1951 = vrot.slane %v1950, 2
        %v1952 = vadd.f32 %v1950, %v1951
        %v1953 = vrot.slane %v1952, 1
        %v1954 = vadd.f32 %v1952, %v1953
        %v1955 = vsel %vm455, %v1860, 0.0
        %v1956 = vsel %vm455, %v1861, 0.0
        %v1957 = vadd.f32 %v1955, %v1956
        %v1958 = vrot.slane %v1957, 4
        %v1959 = vadd.f32 %v1957, %v1958
        %v1960 = vrot.slane %v1959, 2
        %v1961 = vadd.f32 %v1959, %v1960
        %v1962 = vrot.slane %v1961, 1
        %v1963 = vadd.f32 %v1961, %v1962
        %v1964 = vsel %vm455, %v1862, 0.0
        %v1965 = vsel %vm455, %v1863, 0.0
        %v1966 = vadd.f32 %v1964, %v1965
        %v1967 = vrot.slane %v1966, 4
        %v1968 = vadd.f32 %v1966, %v1967
        %v1969 = vrot.slane %v1968, 2
        %v1970 = vadd.f32 %v1968, %v1969
        %v1971 = vrot.slane %v1970, 1
        %v1972 = vadd.f32 %v1970, %v1971
        %v1973 = vsel %vm455, %v1864, 0.0
        %v1974 = vsel %vm455, %v1865, 0.0
        %v1975 = vadd.f32 %v1973, %v1974
        %v1976 = vrot.slane %v1975, 4
        %v1977 = vadd.f32 %v1975, %v1976
        %v1978 = vrot.slane %v1977, 2
        %v1979 = vadd.f32 %v1977, %v1978
        %v1980 = vrot.slane %v1979, 1
        %v1981 = vadd.f32 %v1979, %v1980
        %v1982 = vsel %vm455, %v1866, 0.0
        %v1983 = vsel %vm455, %v1867, 0.0
        %v1984 = vadd.f32 %v1982, %v1983
        %v1985 = vrot.slane %v1984, 4
        %v1986 = vadd.f32 %v1984, %v1985
        %v1987 = vrot.slane %v1986, 2
        %v1988 = vadd.f32 %v1986, %v1987
        %v1989 = vrot.slane %v1988, 1
        %v1990 = vadd.f32 %v1988, %v1989
        %v1991 = vsel %vm455, %v1868, 0.0
        %v1992 = vsel %vm455, %v1869, 0.0
        %v1993 = vadd.f32 %v1991, %v1992
        %v1994 = vrot.slane %v1993, 4
        %v1995 = vadd.f32 %v1993, %v1994
        %v1996 = vrot.slane %v1995, 2
        %v1997 = vadd.f32 %v1995, %v1996
        %v1998 = vrot.slane %v1997, 1
        %v1999 = vadd.f32 %v1997, %v1998
        %v2000 = vsel %vm455, %v1870, 0.0
        %v2001 = vsel %vm455, %v1871, 0.0
        %v2002 = vadd.f32 %v2000, %v2001
        %v2003 = vrot.slane %v2002, 4
        %v2004 = vadd.f32 %v2002, %v2003
        %v2005 = vrot.slane %v2004, 2
        %v2006 = vadd.f32 %v2004, %v2005
        %v2007 = vrot.slane %v2006, 1
        %v2008 = vadd.f32 %v2006, %v2007
        %v2009 = vsel %vm455, %v1872, 0.0
        %v2010 = vsel %vm455, %v1873, 0.0
        %v2011 = vadd.f32 %v2009, %v2010
        %v2012 = vrot.slane %v2011, 4
        %v2013 = vadd.f32 %v2011, %v2012
        %v2014 = vrot.slane %v2013, 2
        %v2015 = vadd.f32 %v2013, %v2014
        %v2016 = vrot.slane %v2015, 1
        %v2017 = vadd.f32 %v2015, %v2016
        %v2034 = vsel %vm1034, %v1891, %v1882
        %v2035 = vsel %vm1036, %v1900, %v2034
        %v2036 = vsel %vm1038, %v1909, %v2035
        %v2037 = vsel %vm1040, %v1918, %v2036
        %v2038 = vsel %vm1042, %v1927, %v2037
        %v2039 = vsel %vm1044, %v1936, %v2038
        %v2040 = vsel %vm1046, %v1945, %v2039
        %v2041 = vsel %vm1034, %v1963, %v1954
        %v2042 = vsel %vm1036, %v1972, %v2041
        %v2043 = vsel %vm1038, %v1981, %v2042
        %v2044 = vsel %vm1040, %v1990, %v2043
        %v2045 = vsel %vm1042, %v1999, %v2044
        %v2046 = vsel %vm1044, %v2008, %v2045
        %v2047 = vsel %vm1046, %v2017, %v2046
        %2050 = vst.msk [vmem:[%s402] sm:$0xff] %vm455, %v2040
        %2051 = vst.msk [vmem:[%s402 + $0x8] sm:$0xff] %vm455, %v2047
        %v2052 = vperm.slane %v1685, %v983
        %v2053 = vperm.slane %v1690, %v985
        %v2054 = vsel %vm987, %v2053, %v2052
        %v2055 = vperm.slane %v1695, %v983
        %v2056 = vperm.slane %v1700, %v985
        %v2057 = vsel %vm987, %v2056, %v2055
        %v2058 = vperm.slane %v1705, %v983
        %v2059 = vperm.slane %v1710, %v985
        %v2060 = vsel %vm987, %v2059, %v2058
        %v2061 = vperm.slane %v1715, %v983
        %v2062 = vperm.slane %v1720, %v985
        %v2063 = vsel %vm987, %v2062, %v2061
        %v2064 = vperm.slane %v1725, %v983
        %v2065 = vperm.slane %v1730, %v985
        %v2066 = vsel %vm987, %v2065, %v2064
        %v2067 = vperm.slane %v1735, %v983
        %v2068 = vperm.slane %v1740, %v985
        %v2069 = vsel %vm987, %v2068, %v2067
        %v2070 = vperm.slane %v1745, %v983
        %v2071 = vperm.slane %v1750, %v985
        %v2072 = vsel %vm987, %v2071, %v2070
        %v2073 = vperm.slane %v1755, %v983
        %v2074 = vperm.slane %v1760, %v985
        %v2075 = vsel %vm987, %v2074, %v2073
        %v2076 = vperm.slane %v1765, %v983
        %v2077 = vperm.slane %v1770, %v985
        %v2078 = vsel %vm987, %v2077, %v2076
        %v2079 = vperm.slane %v1775, %v983
        %v2080 = vperm.slane %v1780, %v985
        %v2081 = vsel %vm987, %v2080, %v2079
        %v2082 = vperm.slane %v1785, %v983
        %v2083 = vperm.slane %v1790, %v985
        %v2084 = vsel %vm987, %v2083, %v2082
        %v2085 = vperm.slane %v1795, %v983
        %v2086 = vperm.slane %v1800, %v985
        %v2087 = vsel %vm987, %v2086, %v2085
        %v2088 = vperm.slane %v1805, %v983
        %v2089 = vperm.slane %v1810, %v985
        %v2090 = vsel %vm987, %v2089, %v2088
        %v2091 = vperm.slane %v1815, %v983
        %v2092 = vperm.slane %v1820, %v985
        %v2093 = vsel %vm987, %v2092, %v2091
        %v2094 = vperm.slane %v1825, %v983
        %v2095 = vperm.slane %v1830, %v985
        %v2096 = vsel %vm987, %v2095, %v2094
        %v2097 = vperm.slane %v1835, %v983
        %v2098 = vperm.slane %v1840, %v985
        %v2099 = vsel %vm987, %v2098, %v2097
        %v2100 = vsel %vm1034, %v2057, %v2054
        %v2101 = vsel %vm1036, %v2060, %v2100
        %v2102 = vsel %vm1038, %v2063, %v2101
        %v2103 = vsel %vm1040, %v2066, %v2102
        %v2104 = vsel %vm1042, %v2069, %v2103
        %v2105 = vsel %vm1044, %v2072, %v2104
        %v2106 = vsel %vm1046, %v2075, %v2105
        %v2107 = vsel %vm1034, %v2081, %v2078
        %v2108 = vsel %vm1036, %v2084, %v2107
        %v2109 = vsel %vm1038, %v2087, %v2108
        %v2110 = vsel %vm1040, %v2090, %v2109
        %v2111 = vsel %vm1042, %v2093, %v2110
        %v2112 = vsel %vm1044, %v2096, %v2111
        %v2113 = vsel %vm1046, %v2099, %v2112
        %2116 = vst.msk [vmem:[%s417] sm:$0xff] %vm1057, %v2106
        %2117 = vst.msk [vmem:[%s417 + $0x8] sm:$0xff] %vm1057, %v2113
        %s2118 = sand.u32 %s195, 1
        %s2119 = scalar_lea.sflag [#allocation4], %s2118
        %s2120 = sand.u32 %s195, 1
        %s2121 = smul.addr %s2120, 16
        %s2122 = scalar_lea.vmem [#allocation10], %s2121
        %s2123 = smul.u32 2, %s30
        %p2124 = scmp.lt.s32.totalorder %s2123, 3
        %s2125 = scalar_select %p2124, %s2123, 3
        %s2126 = smul.addr %s2125, 8
        %s2127 = scalar_lea.vmem %s8, %s2126
        // Predicated region
        $region65: #{tpu_custom_call.1} parent=47 // pred_check
          %p2128 = pneg %p205
        $region66: #{tpu_custom_call.1} parent=47 // pred_check_branch
          %2130 = sbr.rel (%p2128) target = $region68
        $region67: #{tpu_custom_call.1} parent=47 // pred_region
          %s2131 = smul.u32 2, %s30
          %2133 = vsyncadd %s2119, 0
          %s2134 = smul.addr %s2131, 8
          %s2135 = scalar_lea.hbm %s7, %s2134
          %s2136 = sshll.u32 %s2122, 4
          %s2137 = int_to_ptr.vmem [resolvable:$true] %s2136
          %s2138 = sshll.u32 %s2135, 4
          %s2139 = int_to_ptr.hbm [resolvable:$true] %s2138
          %2144 = dma.vmem_to_hbm [thread:$0]  %s2137, 256, %s2139, %s2119, 128, 128, 8
        $region68: #{tpu_custom_call.1} parent=47 // pred_fallthru
          _
        // Predicated region
        $region69: #{tpu_custom_call.1} parent=47 // pred_check
          %p2145 = pneg %p231
        $region70: #{tpu_custom_call.1} parent=47 // pred_check_branch
          %2147 = sbr.rel (%p2145) target = $region72
        $region71: #{tpu_custom_call.1} parent=47 // pred_region
          %s2148 = smul.u32 2, %s30
        $region72: #{tpu_custom_call.1} parent=47 // pred_fallthru
          _
      $region48: #{tpu_custom_call.1} parent=5 // pred_fallthru
        _
      %p2149 = scmp.le.s32.totalorder 2, %s25
      // Predicated region
      $region73: #{tpu_custom_call.1} parent=5 // pred_check
        %p2150 = pneg %p2149
      $region74: #{tpu_custom_call.1} parent=5 // pred_check_branch
        %2152 = sbr.rel (%p2150) target = $region76
      $region75: #{tpu_custom_call.1} parent=5 // pred_region
        %s2153 = ssub.s32 %s25, 2
        // Predicated region
        $region77: #{tpu_custom_call.1} parent=75 // pred_check
          %p2154 = pneg %p211
        $region78: #{tpu_custom_call.1} parent=75 // pred_check_branch
          %2156 = sbr.rel (%p2154) target = $region80
        $region79: #{tpu_custom_call.1} parent=75 // pred_region
          %s2157 = sand.u32 %s196, 1
          %s2158 = scalar_lea.sflag [#allocation4], %s2157
          %s2159 = sand.u32 %s196, 1
          %s2160 = smul.addr %s2159, 16
          %s2161 = scalar_lea.vmem [#allocation10], %s2160
          %2163 = dma.done %s2158, 256
        $region80: #{tpu_custom_call.1} parent=75 // pred_fallthru
          _
        // Predicated region
        $region81: #{tpu_custom_call.1} parent=75 // pred_check
          %p2164 = pneg %p237
        $region82: #{tpu_custom_call.1} parent=75 // pred_check_branch
          %2166 = sbr.rel (%p2164) target = $region84
        $region83: #{tpu_custom_call.1} parent=75 // pred_region
          %s2167 = smul.u32 2, %s31
          %p2168 = scmp.lt.s32.totalorder %s2167, 3
          %s2169 = scalar_select %p2168, %s2167, 3
          %s2170 = smul.addr %s2169, 8
          %s2171 = scalar_lea.vmem %s8, %s2170
        $region84: #{tpu_custom_call.1} parent=75 // pred_fallthru
          _
      $region76: #{tpu_custom_call.1} parent=5 // pred_fallthru
        _
    $region6: #{tpu_custom_call.1} parent=1 // loop_footer
      %s29 = sadd.s32 1, %s25
    $region7: #{tpu_custom_call.1} parent=1 // loop_footer_branch
      %24 = sbr.rel target = $region3
    $region8: #{tpu_custom_call.1} parent=1 // loop_exit
      _
    %2172 = vsyncpa [#allocation3], 1
    %s2173 = scalar_lea.sflag [#allocation3], 1
    %2174 = vsyncpa %s2173, 1
    %2175 = vsyncpa [#allocation6], 1
    %s2176 = scalar_lea.sflag [#allocation6], 1
    %2177 = vsyncpa %s2176, 1
    %2178 = vsyncpa [#allocation9], 1
    %2179 = vsyncpa [#allocation4], 1
    %s2180 = scalar_lea.sflag [#allocation4], 1
    %2181 = vsyncpa %s2180, 1

// kernel: tpu_custom_call.1
$region0: #{tpu_custom_call.1}
  #allocation0 [shape = 'u32[]', space=smem, size = 0x4, offset = 0x4, fixed_abs, tag = 'smem constant byte address 0x4 - core index']
  #allocation1 [shape = 'u32[72,128]{1,0:T(1,128)}', space=vmem, size = 0x9000, scoped, tag = 'internal scratch']
  %s0 = inlined_call_operand.hbm [shape: f32[32,16,32], index: 0, kind: input, shape index: {}]
  %s1 = inlined_call_operand.hbm [shape: f32[32,32], index: 1, kind: input, shape index: {}]
  %s2 = inlined_call_operand.hbm [shape: f32[32,32], index: 2, kind: input, shape index: {}]
  %s3 = inlined_call_operand.vmem [shape: f32[1,32], index: 3, kind: input, shape index: {}]
  %s4 = inlined_call_operand.hbm [shape: f32[32,32], index: 4, kind: input, shape index: {}]
  %s5 = inlined_call_operand.vmem [shape: f32[1,32], index: 5, kind: input, shape index: {}]
  %s6 = inlined_call_operand.vmem [shape: f32[1,32], index: 6, kind: input, shape index: {}]
  %s7 = inlined_call_operand.hbm [shape: f32[32,32], index: 7, kind: output, shape index: {0}]
  %s8 = inlined_call_operand.vmem [shape: f32[32,16], index: 8, kind: output, shape index: {1}]
  %9 = xla_tuple %s7, %s8
  %s10 = sld [smem:[#allocation0]]
  $region85: #{tpu_custom_call.1} parent=0
    _
  %s12 = ssub.s32 1, %s10
  %s13 = scalar_select 0, %s12, %s10
  $region1: #{tpu_custom_call.1} parent=0
    #allocation2 [shape = 'u8[262144]{0}', space=vmem, size = 0x40000, scoped, tag = 'input window, operand 0']
    #allocation3 [shape = 's32[2]{0}', space=sflag, size = 0x8, scoped, tag = 'scoped memory for tpu_custom_call.1']
    #allocation4 [shape = 's32[2]{0}', space=sflag, size = 0x8, scoped, tag = 'scoped memory for tpu_custom_call.1']
    #allocation5 [shape = 'u8[16384]{0}', space=vmem, size = 0x4000, scoped, tag = 'input window, operand 1']
    #allocation6 [shape = 's32[2]{0}', space=sflag, size = 0x8, scoped, tag = 'scoped memory for tpu_custom_call.1']
    #allocation7 [shape = 'u8[16384]{0}', space=vmem, size = 0x4000, scoped, tag = 'input window, operand 2, single buffered']
    #allocation8 [shape = 'u8[16384]{0}', space=vmem, size = 0x4000, scoped, tag = 'input window, operand 4, single buffered']
    #allocation9 [shape = 's32[1]{0}', space=sflag, size = 0x4, scoped, tag = 'scoped memory for tpu_custom_call.1']
    #allocation10 [shape = 'u8[16384]{0}', space=vmem, size = 0x4000, scoped, tag = 'output window, operand 0']
    %14 = vsyncpa [#allocation3], 0
    %s15 = scalar_lea.sflag [#allocation3], 1
    %16 = vsyncpa %s15, 0
    %17 = vsyncpa [#allocation6], 0
    %s18 = scalar_lea.sflag [#allocation6], 1
    %19 = vsyncpa %s18, 0
    %20 = vsyncpa [#allocation9], 0
    %21 = vsyncpa [#allocation4], 0
    %s22 = scalar_lea.sflag [#allocation4], 1
    %23 = vsyncpa %s22, 0
    loop: start=0, step=1, limit=4
    $region2: #{tpu_custom_call.1} parent=1 // loop_pre_header
      _
    $region3: #{tpu_custom_call.1} parent=1 // loop_header
      %s25 = sphi 0, %s29
      %p26 = scmp.ge.s32.totalorder %s25, 4
      %s35 = sphi 0, %s37
      %s38 = sphi 0, %s35
      %s39 = sphi 0, %s38
      %s55 = sphi 0, %s39
      %s61 = sphi 0, %s63
      %s64 = sphi 0, %s61
      %s65 = sphi 0, %s64
      %s81 = sphi 0, %s65
      %s85 = sphi 0, %s85
      %s87 = sphi 0, %s85
      %s88 = sphi 0, %s87
      %s102 = sphi 0, %s88
      %s106 = sphi 0, %s106
      %s108 = sphi 0, %s106
      %s109 = sphi 0, %s108
      %s123 = sphi 0, %s109
      %s127 = sphi 0, %s127
      %s129 = sphi 0, %s127
      %s130 = sphi 0, %s129
      %s144 = sphi 0, %s130
      %s148 = sphi 0, %s148
      %s150 = sphi 0, %s148
      %s151 = sphi 0, %s150
      %s165 = sphi 0, %s151
      %s169 = sphi 0, %s169
      %s171 = sphi 0, %s169
      %s172 = sphi 0, %s171
      %s186 = sphi 0, %s172
      %s192 = sphi 0, %s194
      %s195 = sphi 0, %s192
      %s196 = sphi 0, %s195
      %s212 = sphi 0, %s196
      %s218 = sphi 0, %s220
      %s221 = sphi 0, %s218
      %s222 = sphi 0, %s221
      %s238 = sphi 0, %s222
    $region4: #{tpu_custom_call.1} parent=1 // loop_header_branch
      %28 = sbr.rel (%p26) target = $region8
    $region5: #{tpu_custom_call.1} parent=1 // loop_body
      %s30 = ssub.s32 %s25, 1
      %s31 = ssub.s32 %s25, 2
      %s32 = sadd.s32 %s25, 1
      %s33 = ssub.s32 %s25, %s32
      %p34 = scmp.eq.s32.totalorder %s33, 0
      %s36 = sadd.s32 %s35, 1
      %s37 = scalar_select %p34, %s35, %s36
      %p40 = pneg %p34
      %p41 = scmp.eq.s32.totalorder %s25, 1
      %p42 = por %p40, %p41
      %p43 = scmp.ne.s32.totalorder %s35, %s38
      %p44 = scmp.eq.s32.totalorder %s25, 0
      %p45 = por %p43, %p44
      %p46 = scmp.ne.s32.totalorder %s35, %s38
      %p47 = scmp.eq.s32.totalorder %s30, 1
      %p48 = por %p46, %p47
      %p49 = scmp.ne.s32.totalorder %s38, %s39
      %p50 = scmp.eq.s32.totalorder %s30, 0
      %p51 = por %p49, %p50
      %p52 = scmp.ne.s32.totalorder %s38, %s39
      %p53 = scmp.eq.s32.totalorder %s31, 1
      %p54 = por %p52, %p53
      %p56 = scmp.ne.s32.totalorder %s39, %s55
      %p57 = scmp.eq.s32.totalorder %s31, 0
      %p58 = por %p56, %p57
      %s59 = ssub.s32 %s25, %s32
      %p60 = scmp.eq.s32.totalorder %s59, 0
      %s62 = sadd.s32 %s61, 1
      %s63 = scalar_select %p60, %s61, %s62
      %p66 = pneg %p60
      %p67 = scmp.eq.s32.totalorder %s25, 1
      %p68 = por %p66, %p67
      %p69 = scmp.ne.s32.totalorder %s61, %s64
      %p70 = scmp.eq.s32.totalorder %s25, 0
      %p71 = por %p69, %p70
      %p72 = scmp.ne.s32.totalorder %s61, %s64
      %p73 = scmp.eq.s32.totalorder %s30, 1
      %p74 = por %p72, %p73
      %p75 = scmp.ne.s32.totalorder %s64, %s65
      %p76 = scmp.eq.s32.totalorder %s30, 0
      %p77 = por %p75, %p76
      %p78 = scmp.ne.s32.totalorder %s64, %s65
      %p79 = scmp.eq.s32.totalorder %s31, 1
      %p80 = por %p78, %p79
      %p82 = scmp.ne.s32.totalorder %s65, %s81
      %p83 = scmp.eq.s32.totalorder %s31, 0
      %p84 = por %p82, %p83
      %s86 = sadd.s32 %s85, 1
      %p89 = scmp.eq.s32.totalorder %s25, 1
      %p90 = scmp.ne.s32.totalorder %s85, %s87
      %p91 = scmp.eq.s32.totalorder %s25, 0
      %p92 = por %p90, %p91
      %p93 = scmp.ne.s32.totalorder %s85, %s87
      %p94 = scmp.eq.s32.totalorder %s30, 1
      %p95 = por %p93, %p94
      %p96 = scmp.ne.s32.totalorder %s87, %s88
      %p97 = scmp.eq.s32.totalorder %s30, 0
      %p98 = por %p96, %p97
      %p99 = scmp.ne.s32.totalorder %s87, %s88
      %p100 = scmp.eq.s32.totalorder %s31, 1
      %p101 = por %p99, %p100
      %p103 = scmp.ne.s32.totalorder %s88, %s102
      %p104 = scmp.eq.s32.totalorder %s31, 0
      %p105 = por %p103, %p104
      %s107 = sadd.s32 %s106, 1
      %p110 = scmp.eq.s32.totalorder %s25, 1
      %p111 = scmp.ne.s32.totalorder %s106, %s108
      %p112 = scmp.eq.s32.totalorder %s25, 0
      %p113 = por %p111, %p112
      %p114 = scmp.ne.s32.totalorder %s106, %s108
      %p115 = scmp.eq.s32.totalorder %s30, 1
      %p116 = por %p114, %p115
      %p117 = scmp.ne.s32.totalorder %s108, %s109
      %p118 = scmp.eq.s32.totalorder %s30, 0
      %p119 = por %p117, %p118
      %p120 = scmp.ne.s32.totalorder %s108, %s109
      %p121 = scmp.eq.s32.totalorder %s31, 1
      %p122 = por %p120, %p121
      %p124 = scmp.ne.s32.totalorder %s109, %s123
      %p125 = scmp.eq.s32.totalorder %s31, 0
      %p126 = por %p124, %p125
      %s128 = sadd.s32 %s127, 1
      %p131 = scmp.eq.s32.totalorder %s25, 1
      %p132 = scmp.ne.s32.totalorder %s127, %s129
      %p133 = scmp.eq.s32.totalorder %s25, 0
      %p134 = por %p132, %p133
      %p135 = scmp.ne.s32.totalorder %s127, %s129
      %p136 = scmp.eq.s32.totalorder %s30, 1
      %p137 = por %p135, %p136
      %p138 = scmp.ne.s32.totalorder %s129, %s130
      %p139 = scmp.eq.s32.totalorder %s30, 0
      %p140 = por %p138, %p139
      %p141 = scmp.ne.s32.totalorder %s129, %s130
      %p142 = scmp.eq.s32.totalorder %s31, 1
      %p143 = por %p141, %p142
      %p145 = scmp.ne.s32.totalorder %s130, %s144
      %p146 = scmp.eq.s32.totalorder %s31, 0
      %p147 = por %p145, %p146
      %s149 = sadd.s32 %s148, 1
      %p152 = scmp.eq.s32.totalorder %s25, 1
      %p153 = scmp.ne.s32.totalorder %s148, %s150
      %p154 = scmp.eq.s32.totalorder %s25, 0
      %p155 = por %p153, %p154
      %p156 = scmp.ne.s32.totalorder %s148, %s150
      %p157 = scmp.eq.s32.totalorder %s30, 1
      %p158 = por %p156, %p157
      %p159 = scmp.ne.s32.totalorder %s150, %s151
      %p160 = scmp.eq.s32.totalorder %s30, 0
      %p161 = por %p159, %p160
      %p162 = scmp.ne.s32.totalorder %s150, %s151
      %p163 = scmp.eq.s32.totalorder %s31, 1
      %p164 = por %p162, %p163
      %p166 = scmp.ne.s32.totalorder %s151, %s165
      %p167 = scmp.eq.s32.totalorder %s31, 0
      %p168 = por %p166, %p167
      %s170 = sadd.s32 %s169, 1
      %p173 = scmp.eq.s32.totalorder %s25, 1
      %p174 = scmp.ne.s32.totalorder %s169, %s171
      %p175 = scmp.eq.s32.totalorder %s25, 0
      %p176 = por %p174, %p175
      %p177 = scmp.ne.s32.totalorder %s169, %s171
      %p178 = scmp.eq.s32.totalorder %s30, 1
      %p179 = por %p177, %p178
      %p180 = scmp.ne.s32.totalorder %s171, %s172
      %p181 = scmp.eq.s32.totalorder %s30, 0
      %p182 = por %p180, %p181
      %p183 = scmp.ne.s32.totalorder %s171, %s172
      %p184 = scmp.eq.s32.totalorder %s31, 1
      %p185 = por %p183, %p184
      %p187 = scmp.ne.s32.totalorder %s172, %s186
      %p188 = scmp.eq.s32.totalorder %s31, 0
      %p189 = por %p187, %p188
      %s190 = ssub.s32 %s25, %s32
      %p191 = scmp.eq.s32.totalorder %s190, 0
      %s193 = sadd.s32 %s192, 1
      %s194 = scalar_select %p191, %s192, %s193
      %p197 = pneg %p191
      %p198 = scmp.eq.s32.totalorder %s25, 1
      %p199 = por %p197, %p198
      %p200 = scmp.ne.s32.totalorder %s192, %s195
      %p201 = scmp.eq.s32.totalorder %s25, 0
      %p202 = por %p200, %p201
      %p203 = scmp.ne.s32.totalorder %s192, %s195
      %p204 = scmp.eq.s32.totalorder %s30, 1
      %p205 = por %p203, %p204
      %p206 = scmp.ne.s32.totalorder %s195, %s196
      %p207 = scmp.eq.s32.totalorder %s30, 0
      %p208 = por %p206, %p207
      %p209 = scmp.ne.s32.totalorder %s195, %s196
      %p210 = scmp.eq.s32.totalorder %s31, 1
      %p211 = por %p209, %p210
      %p213 = scmp.ne.s32.totalorder %s196, %s212
      %p214 = scmp.eq.s32.totalorder %s31, 0
      %p215 = por %p213, %p214
      %s216 = ssub.s32 %s25, %s32
      %p217 = scmp.eq.s32.totalorder %s216, 0
      %s219 = sadd.s32 %s218, 1
      %s220 = scalar_select %p217, %s218, %s219
      %p223 = pneg %p217
      %p224 = scmp.eq.s32.totalorder %s25, 1
      %p225 = por %p223, %p224
      %p226 = scmp.ne.s32.totalorder %s218, %s221
      %p227 = scmp.eq.s32.totalorder %s25, 0
      %p228 = por %p226, %p227
      %p229 = scmp.ne.s32.totalorder %s218, %s221
      %p230 = scmp.eq.s32.totalorder %s30, 1
      %p231 = por %p229, %p230
      %p232 = scmp.ne.s32.totalorder %s221, %s222
      %p233 = scmp.eq.s32.totalorder %s30, 0
      %p234 = por %p232, %p233
      %p235 = scmp.ne.s32.totalorder %s221, %s222
      %p236 = scmp.eq.s32.totalorder %s31, 1
      %p237 = por %p235, %p236
      %p239 = scmp.ne.s32.totalorder %s222, %s238
      %p240 = scmp.eq.s32.totalorder %s31, 0
      %p241 = por %p239, %p240
      %p242 = scmp.le.s32.totalorder 1, %s25
      %p243 = scmp.lt.s32.totalorder %s25, 3
      %p244 = pnand %p242, %p243
      %p245 = pneg %p244
      // Predicated region
      $region9: #{tpu_custom_call.1} parent=5 // pred_check
        _
      $region10: #{tpu_custom_call.1} parent=5 // pred_check_branch
        %247 = sbr.rel (%p244) target = $region12
      $region11: #{tpu_custom_call.1} parent=5 // pred_region
        %s248 = ssub.s32 %s25, 1
        // Predicated region
        $region13: #{tpu_custom_call.1} parent=11 // pred_check
          %p249 = pneg %p98
        $region14: #{tpu_custom_call.1} parent=11 // pred_check_branch
          %251 = sbr.rel (%p249) target = $region16
        $region15: #{tpu_custom_call.1} parent=11 // pred_region
          %253 = vsyncadd [#allocation6], 0
          %s254 = sshll.u32 %s2, 4
          %s255 = int_to_ptr.hbm [resolvable:$true] %s254
          %s256 = sshll.u32 [#allocation7], 4
          %s257 = int_to_ptr.vmem [resolvable:$true] %s256
          %262 = dma.hbm_to_vmem [thread:$0]  %s255, 512, %s257, [#allocation6], 128, 128, 8
        $region16: #{tpu_custom_call.1} parent=11 // pred_fallthru
          _
        // Predicated region
        $region17: #{tpu_custom_call.1} parent=11 // pred_check
          %p263 = pneg %p119
        $region18: #{tpu_custom_call.1} parent=11 // pred_check_branch
          %265 = sbr.rel (%p263) target = $region20
        $region19: #{tpu_custom_call.1} parent=11 // pred_region
          _
        $region20: #{tpu_custom_call.1} parent=11 // pred_fallthru
          _
        // Predicated region
        $region21: #{tpu_custom_call.1} parent=11 // pred_check
          %p266 = pneg %p140
        $region22: #{tpu_custom_call.1} parent=11 // pred_check_branch
          %268 = sbr.rel (%p266) target = $region24
        $region23: #{tpu_custom_call.1} parent=11 // pred_region
          %270 = vsyncadd [#allocation9], 0
          %s271 = sshll.u32 %s4, 4
          %s272 = int_to_ptr.hbm [resolvable:$true] %s271
          %s273 = sshll.u32 [#allocation8], 4
          %s274 = int_to_ptr.vmem [resolvable:$true] %s273
          %279 = dma.hbm_to_vmem [thread:$0]  %s272, 512, %s274, [#allocation9], 128, 128, 8
        $region24: #{tpu_custom_call.1} parent=11 // pred_fallthru
          _
        // Predicated region
        $region25: #{tpu_custom_call.1} parent=11 // pred_check
          %p280 = pneg %p161
        $region26: #{tpu_custom_call.1} parent=11 // pred_check_branch
          %282 = sbr.rel (%p280) target = $region28
        $region27: #{tpu_custom_call.1} parent=11 // pred_region
          _
        $region28: #{tpu_custom_call.1} parent=11 // pred_fallthru
          _
        // Predicated region
        $region29: #{tpu_custom_call.1} parent=11 // pred_check
          %p283 = pneg %p182
        $region30: #{tpu_custom_call.1} parent=11 // pred_check_branch
          %285 = sbr.rel (%p283) target = $region32
        $region31: #{tpu_custom_call.1} parent=11 // pred_region
          _
        $region32: #{tpu_custom_call.1} parent=11 // pred_fallthru
          _
      $region12: #{tpu_custom_call.1} parent=5 // pred_fallthru
        _
      %p286 = scmp.lt.s32.totalorder %s25, 2
      // Predicated region
      $region33: #{tpu_custom_call.1} parent=5 // pred_check
        %p287 = pneg %p286
      $region34: #{tpu_custom_call.1} parent=5 // pred_check_branch
        %289 = sbr.rel (%p287) target = $region36
      $region35: #{tpu_custom_call.1} parent=5 // pred_region
        // Predicated region
        $region37: #{tpu_custom_call.1} parent=35 // pred_check
          %p290 = pneg %p45
        $region38: #{tpu_custom_call.1} parent=35 // pred_check_branch
          %292 = sbr.rel (%p290) target = $region40
        $region39: #{tpu_custom_call.1} parent=35 // pred_region
          %s293 = sand.u32 %s35, 1
          %s294 = scalar_lea.sflag [#allocation3], %s293
          %s295 = sand.u32 %s35, 1
          %s296 = smul.addr %s295, 256
          %s297 = scalar_lea.vmem [#allocation2], %s296
          %s298 = smul.u32 16, %s25
          %300 = vsyncadd %s294, 0
          %s301 = smul.addr %s298, 2
          %s302 = smul.addr %s301, 8
          %s303 = scalar_lea.hbm %s0, %s302
          %s304 = sshll.u32 %s303, 4
          %s305 = int_to_ptr.hbm [resolvable:$true] %s304
          %s306 = sshll.u32 %s297, 4
          %s307 = int_to_ptr.vmem [resolvable:$true] %s306
          %312 = dma.hbm_to_vmem [thread:$0]  %s305, 4096, %s307, %s294, 128, 128, 8
        $region40: #{tpu_custom_call.1} parent=35 // pred_fallthru
          _
        // Predicated region
        $region41: #{tpu_custom_call.1} parent=35 // pred_check
          %p313 = pneg %p71
        $region42: #{tpu_custom_call.1} parent=35 // pred_check_branch
          %315 = sbr.rel (%p313) target = $region44
        $region43: #{tpu_custom_call.1} parent=35 // pred_region
          %s316 = sand.u32 %s25, 1
          %s317 = scalar_lea.sflag [#allocation6], %s316
          %s318 = sand.u32 %s61, 1
          %s319 = smul.addr %s318, 16
          %s320 = scalar_lea.vmem [#allocation5], %s319
          %s321 = smul.u32 2, %s25
          %323 = vsyncadd %s317, 0
          %s324 = smul.addr %s321, 8
          %s325 = scalar_lea.hbm %s1, %s324
          %s326 = sshll.u32 %s325, 4
          %s327 = int_to_ptr.hbm [resolvable:$true] %s326
          %s328 = sshll.u32 %s320, 4
          %s329 = int_to_ptr.vmem [resolvable:$true] %s328
          %334 = dma.hbm_to_vmem [thread:$0]  %s327, 256, %s329, %s317, 128, 128, 8
        $region44: #{tpu_custom_call.1} parent=35 // pred_fallthru
          _
      $region36: #{tpu_custom_call.1} parent=5 // pred_fallthru
        _
      %p335 = scmp.le.s32.totalorder 1, %s25
      %p336 = scmp.lt.s32.totalorder %s25, 3
      %p337 = pnand %p335, %p336
      %p338 = pneg %p337
      // Predicated region
      $region45: #{tpu_custom_call.1} parent=5 // pred_check
        _
      $region46: #{tpu_custom_call.1} parent=5 // pred_check_branch
        %340 = sbr.rel (%p337) target = $region48
      $region47: #{tpu_custom_call.1} parent=5 // pred_region
        %s341 = ssub.s32 %s25, 1
        %s342 = sand.u32 %s38, 1
        %s343 = scalar_lea.sflag [#allocation3], %s342
        %s344 = sand.u32 %s38, 1
        %s345 = smul.addr %s344, 256
        %s346 = scalar_lea.vmem [#allocation2], %s345
        // Predicated region
        $region49: #{tpu_custom_call.1} parent=47 // pred_check
          %p347 = pneg %p51
        $region50: #{tpu_custom_call.1} parent=47 // pred_check_branch
          %349 = sbr.rel (%p347) target = $region52
        $region51: #{tpu_custom_call.1} parent=47 // pred_region
          %351 = dma.done %s343, 4096
        $region52: #{tpu_custom_call.1} parent=47 // pred_fallthru
          _
        %s352 = sand.u32 %s30, 1
        %s353 = scalar_lea.sflag [#allocation6], %s352
        %s354 = sand.u32 %s64, 1
        %s355 = smul.addr %s354, 16
        %s356 = scalar_lea.vmem [#allocation5], %s355
        // Predicated region
        $region53: #{tpu_custom_call.1} parent=47 // pred_check
          %p357 = pneg %p77
        $region54: #{tpu_custom_call.1} parent=47 // pred_check_branch
          %359 = sbr.rel (%p357) target = $region56
        $region55: #{tpu_custom_call.1} parent=47 // pred_region
          %361 = dma.done %s353, 256
        $region56: #{tpu_custom_call.1} parent=47 // pred_fallthru
          _
        // Predicated region
        $region57: #{tpu_custom_call.1} parent=47 // pred_check
          %p362 = pneg %p98
        $region58: #{tpu_custom_call.1} parent=47 // pred_check_branch
          %364 = sbr.rel (%p362) target = $region60
        $region59: #{tpu_custom_call.1} parent=47 // pred_region
          %366 = dma.done [#allocation6], 512
        $region60: #{tpu_custom_call.1} parent=47 // pred_fallthru
          _
        // Predicated region
        $region61: #{tpu_custom_call.1} parent=47 // pred_check
          %p367 = pneg %p140
        $region62: #{tpu_custom_call.1} parent=47 // pred_check_branch
          %369 = sbr.rel (%p367) target = $region64
        $region63: #{tpu_custom_call.1} parent=47 // pred_region
          %371 = dma.done [#allocation9], 512
        $region64: #{tpu_custom_call.1} parent=47 // pred_fallthru
          _
        %s372 = sand.u32 %s38, 1
        %s373 = scalar_lea.sflag [#allocation3], %s372
        %s374 = sand.u32 %s38, 1
        %s375 = smul.addr %s374, 256
        %s376 = scalar_lea.vmem [#allocation2], %s375
        %p377 = pneg %p51
        %p378 = pneg %p48
        %s379 = sand.u32 %s30, 1
        %s380 = scalar_lea.sflag [#allocation6], %s379
        %s381 = sand.u32 %s64, 1
        %s382 = smul.addr %s381, 16
        %s383 = scalar_lea.vmem [#allocation5], %s382
        %p384 = pneg %p77
        %p385 = pneg %p74
        %p386 = pneg %p98
        %p387 = pneg %p95
        %p388 = pneg %p119
        %p389 = pneg %p116
        %p390 = pneg %p140
        %p391 = pneg %p137
        %p392 = pneg %p161
        %p393 = pneg %p158
        %p394 = pneg %p182
        %p395 = pneg %p179
        %p396 = pneg %p208
        %p397 = pneg %p205
        %s398 = sand.u32 %s195, 1
        %s399 = scalar_lea.sflag [#allocation4], %s398
        %s400 = sand.u32 %s195, 1
        %s401 = smul.addr %s400, 16
        %s402 = scalar_lea.vmem [#allocation10], %s401
        %p403 = pneg %p234
        %p404 = pneg %p231
        %s405 = smul.u32 2, %s30
        %p406 = scmp.lt.s32.totalorder %s405, 3
        %s407 = scalar_select %p406, %s405, 3
        %s408 = smul.addr %s407, 8
        %s409 = scalar_lea.vmem %s8, %s408
        %s410 = smul.u32 16, %s30
        %s411 = smul.u32 2, %s30
        %s412 = smul.u32 2, %s30
        %s413 = smul.u32 2, %s30
        %p414 = scmp.lt.s32.totalorder %s413, 3
        %s415 = scalar_select %p414, %s413, 3
        %s416 = smul.addr %s415, 8
        %s417 = scalar_lea.vmem %s8, %s416
        %s418 = smul.u32 2, %s30
        %v419 = vld [vmem:[%s346] sm:$0xff]
        %v420 = vld [vmem:[%s346 + $0x8] sm:$0xff]
        %v421 = vld [vmem:[%s346 + $0x10] sm:$0xff]
        %v422 = vld [vmem:[%s346 + $0x18] sm:$0xff]
        %v423 = vld [vmem:[%s346 + $0x20] sm:$0xff]
        %v424 = vld [vmem:[%s346 + $0x28] sm:$0xff]
        %v425 = vld [vmem:[%s346 + $0x30] sm:$0xff]
        %v426 = vld [vmem:[%s346 + $0x38] sm:$0xff]
        %v427 = vld [vmem:[%s346 + $0x40] sm:$0xff]
        %v428 = vld [vmem:[%s346 + $0x48] sm:$0xff]
        %v429 = vld [vmem:[%s346 + $0x50] sm:$0xff]
        %v430 = vld [vmem:[%s346 + $0x58] sm:$0xff]
        %v431 = vld [vmem:[%s346 + $0x60] sm:$0xff]
        %v432 = vld [vmem:[%s346 + $0x68] sm:$0xff]
        %v433 = vld [vmem:[%s346 + $0x70] sm:$0xff]
        %v434 = vld [vmem:[%s346 + $0x78] sm:$0xff]
        %v435 = vld [vmem:[%s346 + $0x80] sm:$0xff]
        %v436 = vld [vmem:[%s346 + $0x88] sm:$0xff]
        %v437 = vld [vmem:[%s346 + $0x90] sm:$0xff]
        %v438 = vld [vmem:[%s346 + $0x98] sm:$0xff]
        %v439 = vld [vmem:[%s346 + $0xa0] sm:$0xff]
        %v440 = vld [vmem:[%s346 + $0xa8] sm:$0xff]
        %v441 = vld [vmem:[%s346 + $0xb0] sm:$0xff]
        %v442 = vld [vmem:[%s346 + $0xb8] sm:$0xff]
        %v443 = vld [vmem:[%s346 + $0xc0] sm:$0xff]
        %v444 = vld [vmem:[%s346 + $0xc8] sm:$0xff]
        %v445 = vld [vmem:[%s346 + $0xd0] sm:$0xff]
        %v446 = vld [vmem:[%s346 + $0xd8] sm:$0xff]
        %v447 = vld [vmem:[%s346 + $0xe0] sm:$0xff]
        %v448 = vld [vmem:[%s346 + $0xe8] sm:$0xff]
        %v449 = vld [vmem:[%s346 + $0xf0] sm:$0xff]
        %v450 = vld [vmem:[%s346 + $0xf8] sm:$0xff]
        %v451 = vld [vmem:[#allocation7] sm:$0xff]
        %v452 = vld [vmem:[#allocation7 + $0x8] sm:$0xff]
        %v453 = vld [vmem:[#allocation7 + $0x10] sm:$0xff]
        %v454 = vld [vmem:[#allocation7 + $0x18] sm:$0xff]
        %vm455 = vcmask 261120
        %v457 = vsel %vm455, %v419, 0
        %v460 = vsel %vm455, %v420, 0
        %v463 = vsel %vm455, %v421, 0
        %v466 = vsel %vm455, %v422, 0
        %v469 = vsel %vm455, %v423, 0
        %v472 = vsel %vm455, %v424, 0
        %v475 = vsel %vm455, %v425, 0
        %v478 = vsel %vm455, %v426, 0
        %v481 = vsel %vm455, %v427, 0
        %v484 = vsel %vm455, %v428, 0
        %v487 = vsel %vm455, %v429, 0
        %v490 = vsel %vm455, %v430, 0
        %v493 = vsel %vm455, %v431, 0
        %v496 = vsel %vm455, %v432, 0
        %v499 = vsel %vm455, %v433, 0
        %v502 = vsel %vm455, %v434, 0
        %v505 = vsel %vm455, %v435, 0
        %v508 = vsel %vm455, %v436, 0
        %v511 = vsel %vm455, %v437, 0
        %v514 = vsel %vm455, %v438, 0
        %v517 = vsel %vm455, %v439, 0
        %v520 = vsel %vm455, %v440, 0
        %v523 = vsel %vm455, %v441, 0
        %v526 = vsel %vm455, %v442, 0
        %v529 = vsel %vm455, %v443, 0
        %v532 = vsel %vm455, %v444, 0
        %v535 = vsel %vm455, %v445, 0
        %v538 = vsel %vm455, %v446, 0
        %v541 = vsel %vm455, %v447, 0
        %v544 = vsel %vm455, %v448, 0
        %v547 = vsel %vm455, %v449, 0
        %v550 = vsel %vm455, %v450, 0
        %552 = vmatpush.msra.mxu0 0.0
        %553 = vmatpush.msra.mxu0 0.0
        %554 = vmatpush.msra.mxu0 0.0
        %555 = vmatpush.msra.mxu0 0.0
        %556 = vmatpush.msra.mxu0 0.0
        %557 = vmatpush.msra.mxu0 0.0
        %558 = vmatpush.msra.mxu0 0.0
        %559 = vmatpush.msra.mxu0 0.0
        %560 = vmatpush.msra.mxu0 0.0
        %561 = vmatpush.msra.mxu0 0.0
        %562 = vmatpush.msra.mxu0 0.0
        %563 = vmatpush.msra.mxu0 0.0
        %564 = vmatpush.msra.mxu0 %v454
        %565 = vmatpush.msra.mxu0 %v453
        %566 = vmatpush.msra.mxu0 %v452
        %567 = vmatpush.msra.mxu0 %v451
        %568 = vmatmul.f32.gmra.mxu0 %v457
        %v569 = vpop.f32.mrf.mxu0
        %v570 = vadd.f32 0.0, %v569
        %571 = vmatmul.f32.gmra.mxu0 %v460
        %v572 = vpop.f32.mrf.mxu0
        %v573 = vadd.f32 0.0, %v572
        %574 = vmatmul.f32.gmra.mxu0 %v463
        %v575 = vpop.f32.mrf.mxu0
        %v576 = vadd.f32 0.0, %v575
        %577 = vmatmul.f32.gmra.mxu0 %v466
        %v578 = vpop.f32.mrf.mxu0
        %v579 = vadd.f32 0.0, %v578
        %580 = vmatmul.f32.gmra.mxu0 %v469
        %v581 = vpop.f32.mrf.mxu0
        %v582 = vadd.f32 0.0, %v581
        %583 = vmatmul.f32.gmra.mxu0 %v472
        %v584 = vpop.f32.mrf.mxu0
        %v585 = vadd.f32 0.0, %v584
        %586 = vmatmul.f32.gmra.mxu0 %v475
        %v587 = vpop.f32.mrf.mxu0
        %v588 = vadd.f32 0.0, %v587
        %589 = vmatmul.f32.gmra.mxu0 %v478
        %v590 = vpop.f32.mrf.mxu0
        %v591 = vadd.f32 0.0, %v590
        %592 = vmatmul.f32.gmra.mxu0 %v481
        %v593 = vpop.f32.mrf.mxu0
        %v594 = vadd.f32 0.0, %v593
        %595 = vmatmul.f32.gmra.mxu0 %v484
        %v596 = vpop.f32.mrf.mxu0
        %v597 = vadd.f32 0.0, %v596
        %598 = vmatmul.f32.gmra.mxu0 %v487
        %v599 = vpop.f32.mrf.mxu0
        %v600 = vadd.f32 0.0, %v599
        %601 = vmatmul.f32.gmra.mxu0 %v490
        %v602 = vpop.f32.mrf.mxu0
        %v603 = vadd.f32 0.0, %v602
        %604 = vmatmul.f32.gmra.mxu0 %v493
        %v605 = vpop.f32.mrf.mxu0
        %v606 = vadd.f32 0.0, %v605
        %607 = vmatmul.f32.gmra.mxu0 %v496
        %v608 = vpop.f32.mrf.mxu0
        %v609 = vadd.f32 0.0, %v608
        %610 = vmatmul.f32.gmra.mxu0 %v499
        %v611 = vpop.f32.mrf.mxu0
        %v612 = vadd.f32 0.0, %v611
        %613 = vmatmul.f32.gmra.mxu0 %v502
        %v614 = vpop.f32.mrf.mxu0
        %v615 = vadd.f32 0.0, %v614
        %616 = vmatmul.f32.gmra.mxu0 %v505
        %v617 = vpop.f32.mrf.mxu0
        %v618 = vadd.f32 0.0, %v617
        %619 = vmatmul.f32.gmra.mxu0 %v508
        %v620 = vpop.f32.mrf.mxu0
        %v621 = vadd.f32 0.0, %v620
        %622 = vmatmul.f32.gmra.mxu0 %v511
        %v623 = vpop.f32.mrf.mxu0
        %v624 = vadd.f32 0.0, %v623
        %625 = vmatmul.f32.gmra.mxu0 %v514
        %v626 = vpop.f32.mrf.mxu0
        %v627 = vadd.f32 0.0, %v626
        %628 = vmatmul.f32.gmra.mxu0 %v517
        %v629 = vpop.f32.mrf.mxu0
        %v630 = vadd.f32 0.0, %v629
        %631 = vmatmul.f32.gmra.mxu0 %v520
        %v632 = vpop.f32.mrf.mxu0
        %v633 = vadd.f32 0.0, %v632
        %634 = vmatmul.f32.gmra.mxu0 %v523
        %v635 = vpop.f32.mrf.mxu0
        %v636 = vadd.f32 0.0, %v635
        %637 = vmatmul.f32.gmra.mxu0 %v526
        %v638 = vpop.f32.mrf.mxu0
        %v639 = vadd.f32 0.0, %v638
        %640 = vmatmul.f32.gmra.mxu0 %v529
        %v641 = vpop.f32.mrf.mxu0
        %v642 = vadd.f32 0.0, %v641
        %643 = vmatmul.f32.gmra.mxu0 %v532
        %v644 = vpop.f32.mrf.mxu0
        %v645 = vadd.f32 0.0, %v644
        %646 = vmatmul.f32.gmra.mxu0 %v535
        %v647 = vpop.f32.mrf.mxu0
        %v648 = vadd.f32 0.0, %v647
        %649 = vmatmul.f32.gmra.mxu0 %v538
        %v650 = vpop.f32.mrf.mxu0
        %v651 = vadd.f32 0.0, %v650
        %652 = vmatmul.f32.gmra.mxu0 %v541
        %v653 = vpop.f32.mrf.mxu0
        %v654 = vadd.f32 0.0, %v653
        %655 = vmatmul.f32.gmra.mxu0 %v544
        %v656 = vpop.f32.mrf.mxu0
        %v657 = vadd.f32 0.0, %v656
        %658 = vmatmul.f32.gmra.mxu0 %v547
        %v659 = vpop.f32.mrf.mxu0
        %v660 = vadd.f32 0.0, %v659
        %661 = vmatmul.f32.gmra.mxu0 %v550
        %v662 = vpop.f32.mrf.mxu0
        %v663 = vadd.f32 0.0, %v662
        %664 = vdwg.mxu0
        %v665 = vld [vmem:[%s356] sm:$0xff]
        %v666 = vld [vmem:[%s356 + $0x8] sm:$0xff]
        %v667 = vld [vmem:[#allocation8] sm:$0xff]
        %v668 = vld [vmem:[#allocation8 + $0x8] sm:$0xff]
        %v669 = vld [vmem:[#allocation8 + $0x10] sm:$0xff]
        %v670 = vld [vmem:[#allocation8 + $0x18] sm:$0xff]
        %v671 = vld [vmem:[%s3] sm:$0x1]
        %v672 = vld [vmem:[%s5] sm:$0x1]
        %v673 = vadd.f32 %v671, %v672
        %v675 = vperm.slane %v673, 0
        %v678 = vsel %vm455, %v665, 0
        %v681 = vsel %vm455, %v666, 0
        %683 = vmatpush.msra.mxu0 0.0
        %684 = vmatpush.msra.mxu0 0.0
        %685 = vmatpush.msra.mxu0 0.0
        %686 = vmatpush.msra.mxu0 0.0
        %687 = vmatpush.msra.mxu0 0.0
        %688 = vmatpush.msra.mxu0 0.0
        %689 = vmatpush.msra.mxu0 0.0
        %690 = vmatpush.msra.mxu0 0.0
        %691 = vmatpush.msra.mxu0 0.0
        %692 = vmatpush.msra.mxu0 0.0
        %693 = vmatpush.msra.mxu0 0.0
        %694 = vmatpush.msra.mxu0 0.0
        %695 = vmatpush.msra.mxu0 %v670
        %696 = vmatpush.msra.mxu0 %v669
        %697 = vmatpush.msra.mxu0 %v668
        %698 = vmatpush.msra.mxu0 %v667
        %699 = vmatmul.f32.gmra.mxu0 %v678
        %v700 = vpop.f32.mrf.mxu0
        %v701 = vadd.f32 %v675, %v700
        %702 = vmatmul.f32.gmra.mxu0 %v681
        %v703 = vpop.f32.mrf.mxu0
        %v704 = vadd.f32 %v675, %v703
        %705 = vdwg.mxu0
        %v708 = vrot.slane %v701, 1
        %v709 = vrot.slane %v701, 2
        %v710 = vrot.slane %v701, 3
        %v711 = vrot.slane %v701, 4
        %v712 = vrot.slane %v701, 5
        %v713 = vrot.slane %v701, 6
        %v714 = vrot.slane %v701, 7
        %v715 = vrot.slane %v704, 1
        %v716 = vrot.slane %v704, 2
        %v717 = vrot.slane %v704, 3
        %v718 = vrot.slane %v704, 4
        %v719 = vrot.slane %v704, 5
        %v720 = vrot.slane %v704, 6
        %v721 = vrot.slane %v704, 7
        %v722 = vperm.slane %v701, 0
        %v723 = vperm.slane %v708, 0
        %v724 = vperm.slane %v709, 0
        %v725 = vperm.slane %v710, 0
        %v726 = vperm.slane %v711, 0
        %v727 = vperm.slane %v712, 0
        %v728 = vperm.slane %v713, 0
        %v729 = vperm.slane %v714, 0
        %v730 = vperm.slane %v704, 0
        %v731 = vperm.slane %v715, 0
        %v732 = vperm.slane %v716, 0
        %v733 = vperm.slane %v717, 0
        %v734 = vperm.slane %v718, 0
        %v735 = vperm.slane %v719, 0
        %v736 = vperm.slane %v720, 0
        %v737 = vperm.slane %v721, 0
        %v754 = vadd.f32 %v570, %v722
        %v755 = vadd.f32 %v573, %v722
        %v756 = vadd.f32 %v576, %v723
        %v757 = vadd.f32 %v579, %v723
        %v758 = vadd.f32 %v582, %v724
        %v759 = vadd.f32 %v585, %v724
        %v760 = vadd.f32 %v588, %v725
        %v761 = vadd.f32 %v591, %v725
        %v762 = vadd.f32 %v594, %v726
        %v763 = vadd.f32 %v597, %v726
        %v764 = vadd.f32 %v600, %v727
        %v765 = vadd.f32 %v603, %v727
        %v766 = vadd.f32 %v606, %v728
        %v767 = vadd.f32 %v609, %v728
        %v768 = vadd.f32 %v612, %v729
        %v769 = vadd.f32 %v615, %v729
        %v770 = vadd.f32 %v618, %v730
        %v771 = vadd.f32 %v621, %v730
        %v772 = vadd.f32 %v624, %v731
        %v773 = vadd.f32 %v627, %v731
        %v774 = vadd.f32 %v630, %v732
        %v775 = vadd.f32 %v633, %v732
        %v776 = vadd.f32 %v636, %v733
        %v777 = vadd.f32 %v639, %v733
        %v778 = vadd.f32 %v642, %v734
        %v779 = vadd.f32 %v645, %v734
        %v780 = vadd.f32 %v648, %v735
        %v781 = vadd.f32 %v651, %v735
        %v782 = vadd.f32 %v654, %v736
        %v783 = vadd.f32 %v657, %v736
        %v784 = vadd.f32 %v660, %v737
        %v785 = vadd.f32 %v663, %v737
        %v786 = vmax.f32 %v754, 0.0
        %v787 = vmax.f32 %v755, 0.0
        %v788 = vmax.f32 %v756, 0.0
        %v789 = vmax.f32 %v757, 0.0
        %v790 = vmax.f32 %v758, 0.0
        %v791 = vmax.f32 %v759, 0.0
        %v792 = vmax.f32 %v760, 0.0
        %v793 = vmax.f32 %v761, 0.0
        %v794 = vmax.f32 %v762, 0.0
        %v795 = vmax.f32 %v763, 0.0
        %v796 = vmax.f32 %v764, 0.0
        %v797 = vmax.f32 %v765, 0.0
        %v798 = vmax.f32 %v766, 0.0
        %v799 = vmax.f32 %v767, 0.0
        %v800 = vmax.f32 %v768, 0.0
        %v801 = vmax.f32 %v769, 0.0
        %v802 = vmax.f32 %v770, 0.0
        %v803 = vmax.f32 %v771, 0.0
        %v804 = vmax.f32 %v772, 0.0
        %v805 = vmax.f32 %v773, 0.0
        %v806 = vmax.f32 %v774, 0.0
        %v807 = vmax.f32 %v775, 0.0
        %v808 = vmax.f32 %v776, 0.0
        %v809 = vmax.f32 %v777, 0.0
        %v810 = vmax.f32 %v778, 0.0
        %v811 = vmax.f32 %v779, 0.0
        %v812 = vmax.f32 %v780, 0.0
        %v813 = vmax.f32 %v781, 0.0
        %v814 = vmax.f32 %v782, 0.0
        %v815 = vmax.f32 %v783, 0.0
        %v816 = vmax.f32 %v784, 0.0
        %v817 = vmax.f32 %v785, 0.0
        %v818 = vld [vmem:[%s6] sm:$0x1]
        %v820 = vperm.slane %v818, 0
        %v822 = vmul.f32 %v786, %v820
        %v823 = vmul.f32 %v787, %v820
        %v824 = vmul.f32 %v788, %v820
        %v825 = vmul.f32 %v789, %v820
        %v826 = vmul.f32 %v790, %v820
        %v827 = vmul.f32 %v791, %v820
        %v828 = vmul.f32 %v792, %v820
        %v829 = vmul.f32 %v793, %v820
        %v830 = vmul.f32 %v794, %v820
        %v831 = vmul.f32 %v795, %v820
        %v832 = vmul.f32 %v796, %v820
        %v833 = vmul.f32 %v797, %v820
        %v834 = vmul.f32 %v798, %v820
        %v835 = vmul.f32 %v799, %v820
        %v836 = vmul.f32 %v800, %v820
        %v837 = vmul.f32 %v801, %v820
        %v838 = vmul.f32 %v802, %v820
        %v839 = vmul.f32 %v803, %v820
        %v840 = vmul.f32 %v804, %v820
        %v841 = vmul.f32 %v805, %v820
        %v842 = vmul.f32 %v806, %v820
        %v843 = vmul.f32 %v807, %v820
        %v844 = vmul.f32 %v808, %v820
        %v845 = vmul.f32 %v809, %v820
        %v846 = vmul.f32 %v810, %v820
        %v847 = vmul.f32 %v811, %v820
        %v848 = vmul.f32 %v812, %v820
        %v849 = vmul.f32 %v813, %v820
        %v850 = vmul.f32 %v814, %v820
        %v851 = vmul.f32 %v815, %v820
        %v852 = vmul.f32 %v816, %v820
        %v853 = vmul.f32 %v817, %v820
        %v854 = vsel %vm455, %v822, 0.0
        %855 = vadd.xlane.f32.xlu0 %v854
        %v856 = vpop.xlane.xlu0 %855
        %v857 = vsel %vm455, %v823, 0.0
        %858 = vadd.xlane.f32.xlu0 %v857
        %v859 = vpop.xlane.xlu0 %858
        %v860 = vsel %vm455, %v824, 0.0
        %861 = vadd.xlane.f32.xlu0 %v860
        %v862 = vpop.xlane.xlu0 %861
        %v863 = vsel %vm455, %v825, 0.0
        %864 = vadd.xlane.f32.xlu0 %v863
        %v865 = vpop.xlane.xlu0 %864
        %v866 = vsel %vm455, %v826, 0.0
        %867 = vadd.xlane.f32.xlu0 %v866
        %v868 = vpop.xlane.xlu0 %867
        %v869 = vsel %vm455, %v827, 0.0
        %870 = vadd.xlane.f32.xlu0 %v869
        %v871 = vpop.xlane.xlu0 %870
        %v872 = vsel %vm455, %v828, 0.0
        %873 = vadd.xlane.f32.xlu0 %v872
        %v874 = vpop.xlane.xlu0 %873
        %v875 = vsel %vm455, %v829, 0.0
        %876 = vadd.xlane.f32.xlu0 %v875
        %v877 = vpop.xlane.xlu0 %876
        %v878 = vsel %vm455, %v830, 0.0
        %879 = vadd.xlane.f32.xlu0 %v878
        %v880 = vpop.xlane.xlu0 %879
        %v881 = vsel %vm455, %v831, 0.0
        %882 = vadd.xlane.f32.xlu0 %v881
        %v883 = vpop.xlane.xlu0 %882
        %v884 = vsel %vm455, %v832, 0.0
        %885 = vadd.xlane.f32.xlu0 %v884
        %v886 = vpop.xlane.xlu0 %885
        %v887 = vsel %vm455, %v833, 0.0
        %888 = vadd.xlane.f32.xlu0 %v887
        %v889 = vpop.xlane.xlu0 %888
        %v890 = vsel %vm455, %v834, 0.0
        %891 = vadd.xlane.f32.xlu0 %v890
        %v892 = vpop.xlane.xlu0 %891
        %v893 = vsel %vm455, %v835, 0.0
        %894 = vadd.xlane.f32.xlu0 %v893
        %v895 = vpop.xlane.xlu0 %894
        %v896 = vsel %vm455, %v836, 0.0
        %897 = vadd.xlane.f32.xlu0 %v896
        %v898 = vpop.xlane.xlu0 %897
        %v899 = vsel %vm455, %v837, 0.0
        %900 = vadd.xlane.f32.xlu0 %v899
        %v901 = vpop.xlane.xlu0 %900
        %v902 = vsel %vm455, %v838, 0.0
        %903 = vadd.xlane.f32.xlu0 %v902
        %v904 = vpop.xlane.xlu0 %903
        %v905 = vsel %vm455, %v839, 0.0
        %906 = vadd.xlane.f32.xlu0 %v905
        %v907 = vpop.xlane.xlu0 %906
        %v908 = vsel %vm455, %v840, 0.0
        %909 = vadd.xlane.f32.xlu0 %v908
        %v910 = vpop.xlane.xlu0 %909
        %v911 = vsel %vm455, %v841, 0.0
        %912 = vadd.xlane.f32.xlu0 %v911
        %v913 = vpop.xlane.xlu0 %912
        %v914 = vsel %vm455, %v842, 0.0
        %915 = vadd.xlane.f32.xlu0 %v914
        %v916 = vpop.xlane.xlu0 %915
        %v917 = vsel %vm455, %v843, 0.0
        %918 = vadd.xlane.f32.xlu0 %v917
        %v919 = vpop.xlane.xlu0 %918
        %v920 = vsel %vm455, %v844, 0.0
        %921 = vadd.xlane.f32.xlu0 %v920
        %v922 = vpop.xlane.xlu0 %921
        %v923 = vsel %vm455, %v845, 0.0
        %924 = vadd.xlane.f32.xlu0 %v923
        %v925 = vpop.xlane.xlu0 %924
        %v926 = vsel %vm455, %v846, 0.0
        %927 = vadd.xlane.f32.xlu0 %v926
        %v928 = vpop.xlane.xlu0 %927
        %v929 = vsel %vm455, %v847, 0.0
        %930 = vadd.xlane.f32.xlu0 %v929
        %v931 = vpop.xlane.xlu0 %930
        %v932 = vsel %vm455, %v848, 0.0
        %933 = vadd.xlane.f32.xlu0 %v932
        %v934 = vpop.xlane.xlu0 %933
        %v935 = vsel %vm455, %v849, 0.0
        %936 = vadd.xlane.f32.xlu0 %v935
        %v937 = vpop.xlane.xlu0 %936
        %v938 = vsel %vm455, %v850, 0.0
        %939 = vadd.xlane.f32.xlu0 %v938
        %v940 = vpop.xlane.xlu0 %939
        %v941 = vsel %vm455, %v851, 0.0
        %942 = vadd.xlane.f32.xlu0 %v941
        %v943 = vpop.xlane.xlu0 %942
        %v944 = vsel %vm455, %v852, 0.0
        %945 = vadd.xlane.f32.xlu0 %v944
        %v946 = vpop.xlane.xlu0 %945
        %v947 = vsel %vm455, %v853, 0.0
        %948 = vadd.xlane.f32.xlu0 %v947
        %v949 = vpop.xlane.xlu0 %948
        %v982 = vlaneseq
        %v983 = vand.u32 %v982, 127
        %v984 = vperm.slane %v856, %v983
        %v985 = vadd.s32 %v983, 4294967288
        %v986 = vperm.slane %v859, %v985
        %vm987 = vcmask 130112
        %v988 = vsel %vm987, %v986, %v984
        %v989 = vperm.slane %v862, %v983
        %v990 = vperm.slane %v865, %v985
        %v991 = vsel %vm987, %v990, %v989
        %v992 = vperm.slane %v868, %v983
        %v993 = vperm.slane %v871, %v985
        %v994 = vsel %vm987, %v993, %v992
        %v995 = vperm.slane %v874, %v983
        %v996 = vperm.slane %v877, %v985
        %v997 = vsel %vm987, %v996, %v995
        %v998 = vperm.slane %v880, %v983
        %v999 = vperm.slane %v883, %v985
        %v1000 = vsel %vm987, %v999, %v998
        %v1001 = vperm.slane %v886, %v983
        %v1002 = vperm.slane %v889, %v985
        %v1003 = vsel %vm987, %v1002, %v1001
        %v1004 = vperm.slane %v892, %v983
        %v1005 = vperm.slane %v895, %v985
        %v1006 = vsel %vm987, %v1005, %v1004
        %v1007 = vperm.slane %v898, %v983
        %v1008 = vperm.slane %v901, %v985
        %v1009 = vsel %vm987, %v1008, %v1007
        %v1010 = vperm.slane %v904, %v983
        %v1011 = vperm.slane %v907, %v985
        %v1012 = vsel %vm987, %v1011, %v1010
        %v1013 = vperm.slane %v910, %v983
        %v1014 = vperm.slane %v913, %v985
        %v1015 = vsel %vm987, %v1014, %v1013
        %v1016 = vperm.slane %v916, %v983
        %v1017 = vperm.slane %v919, %v985
        %v1018 = vsel %vm987, %v1017, %v1016
        %v1019 = vperm.slane %v922, %v983
        %v1020 = vperm.slane %v925, %v985
        %v1021 = vsel %vm987, %v1020, %v1019
        %v1022 = vperm.slane %v928, %v983
        %v1023 = vperm.slane %v931, %v985
        %v1024 = vsel %vm987, %v1023, %v1022
        %v1025 = vperm.slane %v934, %v983
        %v1026 = vperm.slane %v937, %v985
        %v1027 = vsel %vm987, %v1026, %v1025
        %v1028 = vperm.slane %v940, %v983
        %v1029 = vperm.slane %v943, %v985
        %v1030 = vsel %vm987, %v1029, %v1028
        %v1031 = vperm.slane %v946, %v983
        %v1032 = vperm.slane %v949, %v985
        %v1033 = vsel %vm987, %v1032, %v1031
        %vm1034 = vcmask 1041409
        %v1035 = vsel %vm1034, %v991, %v988
        %vm1036 = vcmask 1042434
        %v1037 = vsel %vm1036, %v994, %v1035
        %vm1038 = vcmask 1043459
        %v1039 = vsel %vm1038, %v997, %v1037
        %vm1040 = vcmask 1044484
        %v1041 = vsel %vm1040, %v1000, %v1039
        %vm1042 = vcmask 1045509
        %v1043 = vsel %vm1042, %v1003, %v1041
        %vm1044 = vcmask 1046534
        %v1045 = vsel %vm1044, %v1006, %v1043
        %vm1046 = vcmask 1047559
        %v1047 = vsel %vm1046, %v1009, %v1045
        %v1048 = vsel %vm1034, %v1015, %v1012
        %v1049 = vsel %vm1036, %v1018, %v1048
        %v1050 = vsel %vm1038, %v1021, %v1049
        %v1051 = vsel %vm1040, %v1024, %v1050
        %v1052 = vsel %vm1042, %v1027, %v1051
        %v1053 = vsel %vm1044, %v1030, %v1052
        %v1054 = vsel %vm1046, %v1033, %v1053
        %vm1057 = vcmask 130048
        %v1058 = vsel %vm1057, %v1047, -inf
        %1059 = vmax.xlane.f32.xlu0 %v1058
        %v1060 = vpop.xlane.xlu0 %1059
        %v1061 = vsel %vm1057, %v1054, -inf
        %1062 = vmax.xlane.f32.xlu0 %v1061
        %v1063 = vpop.xlane.xlu0 %1062
        %v1066 = vperm.slane %v1060, 0
        %v1067 = vperm.slane %v1060, 1
        %v1068 = vperm.slane %v1060, 2
        %v1069 = vperm.slane %v1060, 3
        %v1070 = vperm.slane %v1060, 4
        %v1071 = vperm.slane %v1060, 5
        %v1072 = vperm.slane %v1060, 6
        %v1073 = vperm.slane %v1060, 7
        %v1074 = vperm.slane %v1063, 0
        %v1075 = vperm.slane %v1063, 1
        %v1076 = vperm.slane %v1063, 2
        %v1077 = vperm.slane %v1063, 3
        %v1078 = vperm.slane %v1063, 4
        %v1079 = vperm.slane %v1063, 5
        %v1080 = vperm.slane %v1063, 6
        %v1081 = vperm.slane %v1063, 7
        %v1098 = vsub.f32 %v856, %v1066
        %v1099 = vsub.f32 %v859, %v1066
        %v1100 = vsub.f32 %v862, %v1067
        %v1101 = vsub.f32 %v865, %v1067
        %v1102 = vsub.f32 %v868, %v1068
        %v1103 = vsub.f32 %v871, %v1068
        %v1104 = vsub.f32 %v874, %v1069
        %v1105 = vsub.f32 %v877, %v1069
        %v1106 = vsub.f32 %v880, %v1070
        %v1107 = vsub.f32 %v883, %v1070
        %v1108 = vsub.f32 %v886, %v1071
        %v1109 = vsub.f32 %v889, %v1071
        %v1110 = vsub.f32 %v892, %v1072
        %v1111 = vsub.f32 %v895, %v1072
        %v1112 = vsub.f32 %v898, %v1073
        %v1113 = vsub.f32 %v901, %v1073
        %v1114 = vsub.f32 %v904, %v1074
        %v1115 = vsub.f32 %v907, %v1074
        %v1116 = vsub.f32 %v910, %v1075
        %v1117 = vsub.f32 %v913, %v1075
        %v1118 = vsub.f32 %v916, %v1076
        %v1119 = vsub.f32 %v919, %v1076
        %v1120 = vsub.f32 %v922, %v1077
        %v1121 = vsub.f32 %v925, %v1077
        %v1122 = vsub.f32 %v928, %v1078
        %v1123 = vsub.f32 %v931, %v1078
        %v1124 = vsub.f32 %v934, %v1079
        %v1125 = vsub.f32 %v937, %v1079
        %v1126 = vsub.f32 %v940, %v1080
        %v1127 = vsub.f32 %v943, %v1080
        %v1128 = vsub.f32 %v946, %v1081
        %v1129 = vsub.f32 %v949, %v1081
        %v1130 = vmul.f32 %v1098, 1.442695
        %v1131 = vpow.pop %v1130
        %v1132 = vmul.f32 %v1099, 1.442695
        %v1133 = vpow.pop %v1132
        %v1134 = vmul.f32 %v1100, 1.442695
        %v1135 = vpow.pop %v1134
        %v1136 = vmul.f32 %v1101, 1.442695
        %v1137 = vpow.pop %v1136
        %v1138 = vmul.f32 %v1102, 1.442695
        %v1139 = vpow.pop %v1138
        %v1140 = vmul.f32 %v1103, 1.442695
        %v1141 = vpow.pop %v1140
        %v1142 = vmul.f32 %v1104, 1.442695
        %v1143 = vpow.pop %v1142
        %v1144 = vmul.f32 %v1105, 1.442695
        %v1145 = vpow.pop %v1144
        %v1146 = vmul.f32 %v1106, 1.442695
        %v1147 = vpow.pop %v1146
        %v1148 = vmul.f32 %v1107, 1.442695
        %v1149 = vpow.pop %v1148
        %v1150 = vmul.f32 %v1108, 1.442695
        %v1151 = vpow.pop %v1150
        %v1152 = vmul.f32 %v1109, 1.442695
        %v1153 = vpow.pop %v1152
        %v1154 = vmul.f32 %v1110, 1.442695
        %v1155 = vpow.pop %v1154
        %v1156 = vmul.f32 %v1111, 1.442695
        %v1157 = vpow.pop %v1156
        %v1158 = vmul.f32 %v1112, 1.442695
        %v1159 = vpow.pop %v1158
        %v1160 = vmul.f32 %v1113, 1.442695
        %v1161 = vpow.pop %v1160
        %v1162 = vmul.f32 %v1114, 1.442695
        %v1163 = vpow.pop %v1162
        %v1164 = vmul.f32 %v1115, 1.442695
        %v1165 = vpow.pop %v1164
        %v1166 = vmul.f32 %v1116, 1.442695
        %v1167 = vpow.pop %v1166
        %v1168 = vmul.f32 %v1117, 1.442695
        %v1169 = vpow.pop %v1168
        %v1170 = vmul.f32 %v1118, 1.442695
        %v1171 = vpow.pop %v1170
        %v1172 = vmul.f32 %v1119, 1.442695
        %v1173 = vpow.pop %v1172
        %v1174 = vmul.f32 %v1120, 1.442695
        %v1175 = vpow.pop %v1174
        %v1176 = vmul.f32 %v1121, 1.442695
        %v1177 = vpow.pop %v1176
        %v1178 = vmul.f32 %v1122, 1.442695
        %v1179 = vpow.pop %v1178
        %v1180 = vmul.f32 %v1123, 1.442695
        %v1181 = vpow.pop %v1180
        %v1182 = vmul.f32 %v1124, 1.442695
        %v1183 = vpow.pop %v1182
        %v1184 = vmul.f32 %v1125, 1.442695
        %v1185 = vpow.pop %v1184
        %v1186 = vmul.f32 %v1126, 1.442695
        %v1187 = vpow.pop %v1186
        %v1188 = vmul.f32 %v1127, 1.442695
        %v1189 = vpow.pop %v1188
        %v1190 = vmul.f32 %v1128, 1.442695
        %v1191 = vpow.pop %v1190
        %v1192 = vmul.f32 %v1129, 1.442695
        %v1193 = vpow.pop %v1192
        %1226 = vset.pattern.permute.xlu0 0
        %1227 = vperm.xlu0 %1226, %v1131
        %v1228 = vpop.permute.xlu0 %1227
        %1229 = vset.pattern.permute.xlu0 0
        %1230 = vperm.xlu0 %1229, %v1133
        %v1231 = vpop.permute.xlu0 %1230
        %1232 = vset.pattern.permute.xlu0 0
        %1233 = vperm.xlu0 %1232, %v1135
        %v1234 = vpop.permute.xlu0 %1233
        %1235 = vset.pattern.permute.xlu0 0
        %1236 = vperm.xlu0 %1235, %v1137
        %v1237 = vpop.permute.xlu0 %1236
        %1238 = vset.pattern.permute.xlu0 0
        %1239 = vperm.xlu0 %1238, %v1139
        %v1240 = vpop.permute.xlu0 %1239
        %1241 = vset.pattern.permute.xlu0 0
        %1242 = vperm.xlu0 %1241, %v1141
        %v1243 = vpop.permute.xlu0 %1242
        %1244 = vset.pattern.permute.xlu0 0
        %1245 = vperm.xlu0 %1244, %v1143
        %v1246 = vpop.permute.xlu0 %1245
        %1247 = vset.pattern.permute.xlu0 0
        %1248 = vperm.xlu0 %1247, %v1145
        %v1249 = vpop.permute.xlu0 %1248
        %1250 = vset.pattern.permute.xlu0 0
        %1251 = vperm.xlu0 %1250, %v1147
        %v1252 = vpop.permute.xlu0 %1251
        %1253 = vset.pattern.permute.xlu0 0
        %1254 = vperm.xlu0 %1253, %v1149
        %v1255 = vpop.permute.xlu0 %1254
        %1256 = vset.pattern.permute.xlu0 0
        %1257 = vperm.xlu0 %1256, %v1151
        %v1258 = vpop.permute.xlu0 %1257
        %1259 = vset.pattern.permute.xlu0 0
        %1260 = vperm.xlu0 %1259, %v1153
        %v1261 = vpop.permute.xlu0 %1260
        %1262 = vset.pattern.permute.xlu0 0
        %1263 = vperm.xlu0 %1262, %v1155
        %v1264 = vpop.permute.xlu0 %1263
        %1265 = vset.pattern.permute.xlu0 0
        %1266 = vperm.xlu0 %1265, %v1157
        %v1267 = vpop.permute.xlu0 %1266
        %1268 = vset.pattern.permute.xlu0 0
        %1269 = vperm.xlu0 %1268, %v1159
        %v1270 = vpop.permute.xlu0 %1269
        %1271 = vset.pattern.permute.xlu0 0
        %1272 = vperm.xlu0 %1271, %v1161
        %v1273 = vpop.permute.xlu0 %1272
        %1274 = vset.pattern.permute.xlu0 0
        %1275 = vperm.xlu0 %1274, %v1163
        %v1276 = vpop.permute.xlu0 %1275
        %1277 = vset.pattern.permute.xlu0 0
        %1278 = vperm.xlu0 %1277, %v1165
        %v1279 = vpop.permute.xlu0 %1278
        %1280 = vset.pattern.permute.xlu0 0
        %1281 = vperm.xlu0 %1280, %v1167
        %v1282 = vpop.permute.xlu0 %1281
        %1283 = vset.pattern.permute.xlu0 0
        %1284 = vperm.xlu0 %1283, %v1169
        %v1285 = vpop.permute.xlu0 %1284
        %1286 = vset.pattern.permute.xlu0 0
        %1287 = vperm.xlu0 %1286, %v1171
        %v1288 = vpop.permute.xlu0 %1287
        %1289 = vset.pattern.permute.xlu0 0
        %1290 = vperm.xlu0 %1289, %v1173
        %v1291 = vpop.permute.xlu0 %1290
        %1292 = vset.pattern.permute.xlu0 0
        %1293 = vperm.xlu0 %1292, %v1175
        %v1294 = vpop.permute.xlu0 %1293
        %1295 = vset.pattern.permute.xlu0 0
        %1296 = vperm.xlu0 %1295, %v1177
        %v1297 = vpop.permute.xlu0 %1296
        %1298 = vset.pattern.permute.xlu0 0
        %1299 = vperm.xlu0 %1298, %v1179
        %v1300 = vpop.permute.xlu0 %1299
        %1301 = vset.pattern.permute.xlu0 0
        %1302 = vperm.xlu0 %1301, %v1181
        %v1303 = vpop.permute.xlu0 %1302
        %1304 = vset.pattern.permute.xlu0 0
        %1305 = vperm.xlu0 %1304, %v1183
        %v1306 = vpop.permute.xlu0 %1305
        %1307 = vset.pattern.permute.xlu0 0
        %1308 = vperm.xlu0 %1307, %v1185
        %v1309 = vpop.permute.xlu0 %1308
        %1310 = vset.pattern.permute.xlu0 0
        %1311 = vperm.xlu0 %1310, %v1187
        %v1312 = vpop.permute.xlu0 %1311
        %1313 = vset.pattern.permute.xlu0 0
        %1314 = vperm.xlu0 %1313, %v1189
        %v1315 = vpop.permute.xlu0 %1314
        %1316 = vset.pattern.permute.xlu0 0
        %1317 = vperm.xlu0 %1316, %v1191
        %v1318 = vpop.permute.xlu0 %1317
        %1319 = vset.pattern.permute.xlu0 0
        %1320 = vperm.xlu0 %1319, %v1193
        %v1321 = vpop.permute.xlu0 %1320
        %v1322 = vperm.slane %v1228, %v983
        %v1323 = vperm.slane %v1231, %v985
        %v1324 = vsel %vm987, %v1323, %v1322
        %v1325 = vperm.slane %v1234, %v983
        %v1326 = vperm.slane %v1237, %v985
        %v1327 = vsel %vm987, %v1326, %v1325
        %v1328 = vperm.slane %v1240, %v983
        %v1329 = vperm.slane %v1243, %v985
        %v1330 = vsel %vm987, %v1329, %v1328
        %v1331 = vperm.slane %v1246, %v983
        %v1332 = vperm.slane %v1249, %v985
        %v1333 = vsel %vm987, %v1332, %v1331
        %v1334 = vperm.slane %v1252, %v983
        %v1335 = vperm.slane %v1255, %v985
        %v1336 = vsel %vm987, %v1335, %v1334
        %v1337 = vperm.slane %v1258, %v983
        %v1338 = vperm.slane %v1261, %v985
        %v1339 = vsel %vm987, %v1338, %v1337
        %v1340 = vperm.slane %v1264, %v983
        %v1341 = vperm.slane %v1267, %v985
        %v1342 = vsel %vm987, %v1341, %v1340
        %v1343 = vperm.slane %v1270, %v983
        %v1344 = vperm.slane %v1273, %v985
        %v1345 = vsel %vm987, %v1344, %v1343
        %v1346 = vperm.slane %v1276, %v983
        %v1347 = vperm.slane %v1279, %v985
        %v1348 = vsel %vm987, %v1347, %v1346
        %v1349 = vperm.slane %v1282, %v983
        %v1350 = vperm.slane %v1285, %v985
        %v1351 = vsel %vm987, %v1350, %v1349
        %v1352 = vperm.slane %v1288, %v983
        %v1353 = vperm.slane %v1291, %v985
        %v1354 = vsel %vm987, %v1353, %v1352
        %v1355 = vperm.slane %v1294, %v983
        %v1356 = vperm.slane %v1297, %v985
        %v1357 = vsel %vm987, %v1356, %v1355
        %v1358 = vperm.slane %v1300, %v983
        %v1359 = vperm.slane %v1303, %v985
        %v1360 = vsel %vm987, %v1359, %v1358
        %v1361 = vperm.slane %v1306, %v983
        %v1362 = vperm.slane %v1309, %v985
        %v1363 = vsel %vm987, %v1362, %v1361
        %v1364 = vperm.slane %v1312, %v983
        %v1365 = vperm.slane %v1315, %v985
        %v1366 = vsel %vm987, %v1365, %v1364
        %v1367 = vperm.slane %v1318, %v983
        %v1368 = vperm.slane %v1321, %v985
        %v1369 = vsel %vm987, %v1368, %v1367
        %v1370 = vsel %vm1034, %v1327, %v1324
        %v1371 = vsel %vm1036, %v1330, %v1370
        %v1372 = vsel %vm1038, %v1333, %v1371
        %v1373 = vsel %vm1040, %v1336, %v1372
        %v1374 = vsel %vm1042, %v1339, %v1373
        %v1375 = vsel %vm1044, %v1342, %v1374
        %v1376 = vsel %vm1046, %v1345, %v1375
        %v1377 = vsel %vm1034, %v1351, %v1348
        %v1378 = vsel %vm1036, %v1354, %v1377
        %v1379 = vsel %vm1038, %v1357, %v1378
        %v1380 = vsel %vm1040, %v1360, %v1379
        %v1381 = vsel %vm1042, %v1363, %v1380
        %v1382 = vsel %vm1044, %v1366, %v1381
        %v1383 = vsel %vm1046, %v1369, %v1382
        %v1386 = vsel %vm1057, %v1376, 0.0
        %1387 = vadd.xlane.f32.xlu0 %v1386
        %v1388 = vpop.xlane.xlu0 %1387
        %v1389 = vsel %vm1057, %v1383, 0.0
        %1390 = vadd.xlane.f32.xlu0 %v1389
        %v1391 = vpop.xlane.xlu0 %1390
        %v1394 = vperm.slane %v1388, 0
        %v1395 = vperm.slane %v1388, 1
        %v1396 = vperm.slane %v1388, 2
        %v1397 = vperm.slane %v1388, 3
        %v1398 = vperm.slane %v1388, 4
        %v1399 = vperm.slane %v1388, 5
        %v1400 = vperm.slane %v1388, 6
        %v1401 = vperm.slane %v1388, 7
        %v1402 = vperm.slane %v1391, 0
        %v1403 = vperm.slane %v1391, 1
        %v1404 = vperm.slane %v1391, 2
        %v1405 = vperm.slane %v1391, 3
        %v1406 = vperm.slane %v1391, 4
        %v1407 = vperm.slane %v1391, 5
        %v1408 = vperm.slane %v1391, 6
        %v1409 = vperm.slane %v1391, 7
        %v1426 = vrcp.pop %v1394
        %v1427 = vmul.f32 %v1394, %v1426
        %v1428 = vsub.f32 1.0, %v1427
        %v1429 = vmul.f32 %v1426, %v1428
        %v1430 = vadd.f32 %v1426, %v1429
        %vm1431 = vweird.f32 %v1394
        %vm1432 = vweird.f32 %v1426
        %vm1433 = vmor %vm1431, %vm1432
        %v1434 = vsel %vm1433, %v1426, %v1430
        %v1435 = vand.u32 2147483647, %v1394
        %vm1436 = vcmp.eq.f32.partialorder %v1435, 8.507059e+37
        %v1437 = vand.u32 %v1394, 2147483648
        %v1438 = vor.u32 1.1754944e-38, %v1437
        %v1439 = vsel %vm1436, %v1438, %v1434
        %v1440 = vmul.f32 %v1131, %v1439
        %v1441 = vmul.f32 %v1133, %v1439
        %v1442 = vrcp.pop %v1395
        %v1443 = vmul.f32 %v1395, %v1442
        %v1444 = vsub.f32 1.0, %v1443
        %v1445 = vmul.f32 %v1442, %v1444
        %v1446 = vadd.f32 %v1442, %v1445
        %vm1447 = vweird.f32 %v1395
        %vm1448 = vweird.f32 %v1442
        %vm1449 = vmor %vm1447, %vm1448
        %v1450 = vsel %vm1449, %v1442, %v1446
        %v1451 = vand.u32 2147483647, %v1395
        %vm1452 = vcmp.eq.f32.partialorder %v1451, 8.507059e+37
        %v1453 = vand.u32 %v1395, 2147483648
        %v1454 = vor.u32 1.1754944e-38, %v1453
        %v1455 = vsel %vm1452, %v1454, %v1450
        %v1456 = vmul.f32 %v1135, %v1455
        %v1457 = vmul.f32 %v1137, %v1455
        %v1458 = vrcp.pop %v1396
        %v1459 = vmul.f32 %v1396, %v1458
        %v1460 = vsub.f32 1.0, %v1459
        %v1461 = vmul.f32 %v1458, %v1460
        %v1462 = vadd.f32 %v1458, %v1461
        %vm1463 = vweird.f32 %v1396
        %vm1464 = vweird.f32 %v1458
        %vm1465 = vmor %vm1463, %vm1464
        %v1466 = vsel %vm1465, %v1458, %v1462
        %v1467 = vand.u32 2147483647, %v1396
        %vm1468 = vcmp.eq.f32.partialorder %v1467, 8.507059e+37
        %v1469 = vand.u32 %v1396, 2147483648
        %v1470 = vor.u32 1.1754944e-38, %v1469
        %v1471 = vsel %vm1468, %v1470, %v1466
        %v1472 = vmul.f32 %v1139, %v1471
        %v1473 = vmul.f32 %v1141, %v1471
        %v1474 = vrcp.pop %v1397
        %v1475 = vmul.f32 %v1397, %v1474
        %v1476 = vsub.f32 1.0, %v1475
        %v1477 = vmul.f32 %v1474, %v1476
        %v1478 = vadd.f32 %v1474, %v1477
        %vm1479 = vweird.f32 %v1397
        %vm1480 = vweird.f32 %v1474
        %vm1481 = vmor %vm1479, %vm1480
        %v1482 = vsel %vm1481, %v1474, %v1478
        %v1483 = vand.u32 2147483647, %v1397
        %vm1484 = vcmp.eq.f32.partialorder %v1483, 8.507059e+37
        %v1485 = vand.u32 %v1397, 2147483648
        %v1486 = vor.u32 1.1754944e-38, %v1485
        %v1487 = vsel %vm1484, %v1486, %v1482
        %v1488 = vmul.f32 %v1143, %v1487
        %v1489 = vmul.f32 %v1145, %v1487
        %v1490 = vrcp.pop %v1398
        %v1491 = vmul.f32 %v1398, %v1490
        %v1492 = vsub.f32 1.0, %v1491
        %v1493 = vmul.f32 %v1490, %v1492
        %v1494 = vadd.f32 %v1490, %v1493
        %vm1495 = vweird.f32 %v1398
        %vm1496 = vweird.f32 %v1490
        %vm1497 = vmor %vm1495, %vm1496
        %v1498 = vsel %vm1497, %v1490, %v1494
        %v1499 = vand.u32 2147483647, %v1398
        %vm1500 = vcmp.eq.f32.partialorder %v1499, 8.507059e+37
        %v1501 = vand.u32 %v1398, 2147483648
        %v1502 = vor.u32 1.1754944e-38, %v1501
        %v1503 = vsel %vm1500, %v1502, %v1498
        %v1504 = vmul.f32 %v1147, %v1503
        %v1505 = vmul.f32 %v1149, %v1503
        %v1506 = vrcp.pop %v1399
        %v1507 = vmul.f32 %v1399, %v1506
        %v1508 = vsub.f32 1.0, %v1507
        %v1509 = vmul.f32 %v1506, %v1508
        %v1510 = vadd.f32 %v1506, %v1509
        %vm1511 = vweird.f32 %v1399
        %vm1512 = vweird.f32 %v1506
        %vm1513 = vmor %vm1511, %vm1512
        %v1514 = vsel %vm1513, %v1506, %v1510
        %v1515 = vand.u32 2147483647, %v1399
        %vm1516 = vcmp.eq.f32.partialorder %v1515, 8.507059e+37
        %v1517 = vand.u32 %v1399, 2147483648
        %v1518 = vor.u32 1.1754944e-38, %v1517
        %v1519 = vsel %vm1516, %v1518, %v1514
        %v1520 = vmul.f32 %v1151, %v1519
        %v1521 = vmul.f32 %v1153, %v1519
        %v1522 = vrcp.pop %v1400
        %v1523 = vmul.f32 %v1400, %v1522
        %v1524 = vsub.f32 1.0, %v1523
        %v1525 = vmul.f32 %v1522, %v1524
        %v1526 = vadd.f32 %v1522, %v1525
        %vm1527 = vweird.f32 %v1400
        %vm1528 = vweird.f32 %v1522
        %vm1529 = vmor %vm1527, %vm1528
        %v1530 = vsel %vm1529, %v1522, %v1526
        %v1531 = vand.u32 2147483647, %v1400
        %vm1532 = vcmp.eq.f32.partialorder %v1531, 8.507059e+37
        %v1533 = vand.u32 %v1400, 2147483648
        %v1534 = vor.u32 1.1754944e-38, %v1533
        %v1535 = vsel %vm1532, %v1534, %v1530
        %v1536 = vmul.f32 %v1155, %v1535
        %v1537 = vmul.f32 %v1157, %v1535
        %v1538 = vrcp.pop %v1401
        %v1539 = vmul.f32 %v1401, %v1538
        %v1540 = vsub.f32 1.0, %v1539
        %v1541 = vmul.f32 %v1538, %v1540
        %v1542 = vadd.f32 %v1538, %v1541
        %vm1543 = vweird.f32 %v1401
        %vm1544 = vweird.f32 %v1538
        %vm1545 = vmor %vm1543, %vm1544
        %v1546 = vsel %vm1545, %v1538, %v1542
        %v1547 = vand.u32 2147483647, %v1401
        %vm1548 = vcmp.eq.f32.partialorder %v1547, 8.507059e+37
        %v1549 = vand.u32 %v1401, 2147483648
        %v1550 = vor.u32 1.1754944e-38, %v1549
        %v1551 = vsel %vm1548, %v1550, %v1546
        %v1552 = vmul.f32 %v1159, %v1551
        %v1553 = vmul.f32 %v1161, %v1551
        %v1554 = vrcp.pop %v1402
        %v1555 = vmul.f32 %v1402, %v1554
        %v1556 = vsub.f32 1.0, %v1555
        %v1557 = vmul.f32 %v1554, %v1556
        %v1558 = vadd.f32 %v1554, %v1557
        %vm1559 = vweird.f32 %v1402
        %vm1560 = vweird.f32 %v1554
        %vm1561 = vmor %vm1559, %vm1560
        %v1562 = vsel %vm1561, %v1554, %v1558
        %v1563 = vand.u32 2147483647, %v1402
        %vm1564 = vcmp.eq.f32.partialorder %v1563, 8.507059e+37
        %v1565 = vand.u32 %v1402, 2147483648
        %v1566 = vor.u32 1.1754944e-38, %v1565
        %v1567 = vsel %vm1564, %v1566, %v1562
        %v1568 = vmul.f32 %v1163, %v1567
        %v1569 = vmul.f32 %v1165, %v1567
        %v1570 = vrcp.pop %v1403
        %v1571 = vmul.f32 %v1403, %v1570
        %v1572 = vsub.f32 1.0, %v1571
        %v1573 = vmul.f32 %v1570, %v1572
        %v1574 = vadd.f32 %v1570, %v1573
        %vm1575 = vweird.f32 %v1403
        %vm1576 = vweird.f32 %v1570
        %vm1577 = vmor %vm1575, %vm1576
        %v1578 = vsel %vm1577, %v1570, %v1574
        %v1579 = vand.u32 2147483647, %v1403
        %vm1580 = vcmp.eq.f32.partialorder %v1579, 8.507059e+37
        %v1581 = vand.u32 %v1403, 2147483648
        %v1582 = vor.u32 1.1754944e-38, %v1581
        %v1583 = vsel %vm1580, %v1582, %v1578
        %v1584 = vmul.f32 %v1167, %v1583
        %v1585 = vmul.f32 %v1169, %v1583
        %v1586 = vrcp.pop %v1404
        %v1587 = vmul.f32 %v1404, %v1586
        %v1588 = vsub.f32 1.0, %v1587
        %v1589 = vmul.f32 %v1586, %v1588
        %v1590 = vadd.f32 %v1586, %v1589
        %vm1591 = vweird.f32 %v1404
        %vm1592 = vweird.f32 %v1586
        %vm1593 = vmor %vm1591, %vm1592
        %v1594 = vsel %vm1593, %v1586, %v1590
        %v1595 = vand.u32 2147483647, %v1404
        %vm1596 = vcmp.eq.f32.partialorder %v1595, 8.507059e+37
        %v1597 = vand.u32 %v1404, 2147483648
        %v1598 = vor.u32 1.1754944e-38, %v1597
        %v1599 = vsel %vm1596, %v1598, %v1594
        %v1600 = vmul.f32 %v1171, %v1599
        %v1601 = vmul.f32 %v1173, %v1599
        %v1602 = vrcp.pop %v1405
        %v1603 = vmul.f32 %v1405, %v1602
        %v1604 = vsub.f32 1.0, %v1603
        %v1605 = vmul.f32 %v1602, %v1604
        %v1606 = vadd.f32 %v1602, %v1605
        %vm1607 = vweird.f32 %v1405
        %vm1608 = vweird.f32 %v1602
        %vm1609 = vmor %vm1607, %vm1608
        %v1610 = vsel %vm1609, %v1602, %v1606
        %v1611 = vand.u32 2147483647, %v1405
        %vm1612 = vcmp.eq.f32.partialorder %v1611, 8.507059e+37
        %v1613 = vand.u32 %v1405, 2147483648
        %v1614 = vor.u32 1.1754944e-38, %v1613
        %v1615 = vsel %vm1612, %v1614, %v1610
        %v1616 = vmul.f32 %v1175, %v1615
        %v1617 = vmul.f32 %v1177, %v1615
        %v1618 = vrcp.pop %v1406
        %v1619 = vmul.f32 %v1406, %v1618
        %v1620 = vsub.f32 1.0, %v1619
        %v1621 = vmul.f32 %v1618, %v1620
        %v1622 = vadd.f32 %v1618, %v1621
        %vm1623 = vweird.f32 %v1406
        %vm1624 = vweird.f32 %v1618
        %vm1625 = vmor %vm1623, %vm1624
        %v1626 = vsel %vm1625, %v1618, %v1622
        %v1627 = vand.u32 2147483647, %v1406
        %vm1628 = vcmp.eq.f32.partialorder %v1627, 8.507059e+37
        %v1629 = vand.u32 %v1406, 2147483648
        %v1630 = vor.u32 1.1754944e-38, %v1629
        %v1631 = vsel %vm1628, %v1630, %v1626
        %v1632 = vmul.f32 %v1179, %v1631
        %v1633 = vmul.f32 %v1181, %v1631
        %v1634 = vrcp.pop %v1407
        %v1635 = vmul.f32 %v1407, %v1634
        %v1636 = vsub.f32 1.0, %v1635
        %v1637 = vmul.f32 %v1634, %v1636
        %v1638 = vadd.f32 %v1634, %v1637
        %vm1639 = vweird.f32 %v1407
        %vm1640 = vweird.f32 %v1634
        %vm1641 = vmor %vm1639, %vm1640
        %v1642 = vsel %vm1641, %v1634, %v1638
        %v1643 = vand.u32 2147483647, %v1407
        %vm1644 = vcmp.eq.f32.partialorder %v1643, 8.507059e+37
        %v1645 = vand.u32 %v1407, 2147483648
        %v1646 = vor.u32 1.1754944e-38, %v1645
        %v1647 = vsel %vm1644, %v1646, %v1642
        %v1648 = vmul.f32 %v1183, %v1647
        %v1649 = vmul.f32 %v1185, %v1647
        %v1650 = vrcp.pop %v1408
        %v1651 = vmul.f32 %v1408, %v1650
        %v1652 = vsub.f32 1.0, %v1651
        %v1653 = vmul.f32 %v1650, %v1652
        %v1654 = vadd.f32 %v1650, %v1653
        %vm1655 = vweird.f32 %v1408
        %vm1656 = vweird.f32 %v1650
        %vm1657 = vmor %vm1655, %vm1656
        %v1658 = vsel %vm1657, %v1650, %v1654
        %v1659 = vand.u32 2147483647, %v1408
        %vm1660 = vcmp.eq.f32.partialorder %v1659, 8.507059e+37
        %v1661 = vand.u32 %v1408, 2147483648
        %v1662 = vor.u32 1.1754944e-38, %v1661
        %v1663 = vsel %vm1660, %v1662, %v1658
        %v1664 = vmul.f32 %v1187, %v1663
        %v1665 = vmul.f32 %v1189, %v1663
        %v1666 = vrcp.pop %v1409
        %v1667 = vmul.f32 %v1409, %v1666
        %v1668 = vsub.f32 1.0, %v1667
        %v1669 = vmul.f32 %v1666, %v1668
        %v1670 = vadd.f32 %v1666, %v1669
        %vm1671 = vweird.f32 %v1409
        %vm1672 = vweird.f32 %v1666
        %vm1673 = vmor %vm1671, %vm1672
        %v1674 = vsel %vm1673, %v1666, %v1670
        %v1675 = vand.u32 2147483647, %v1409
        %vm1676 = vcmp.eq.f32.partialorder %v1675, 8.507059e+37
        %v1677 = vand.u32 %v1409, 2147483648
        %v1678 = vor.u32 1.1754944e-38, %v1677
        %v1679 = vsel %vm1676, %v1678, %v1674
        %v1680 = vmul.f32 %v1191, %v1679
        %v1681 = vmul.f32 %v1193, %v1679
        %1683 = vset.pattern.permute.xlu0 0
        %1684 = vperm.xlu0 %1683, %v1440
        %v1685 = vpop.permute.xlu0 %1684
        %1688 = vset.pattern.permute.xlu0 0
        %1689 = vperm.xlu0 %1688, %v1441
        %v1690 = vpop.permute.xlu0 %1689
        %1693 = vset.pattern.permute.xlu0 0
        %1694 = vperm.xlu0 %1693, %v1456
        %v1695 = vpop.permute.xlu0 %1694
        %1698 = vset.pattern.permute.xlu0 0
        %1699 = vperm.xlu0 %1698, %v1457
        %v1700 = vpop.permute.xlu0 %1699
        %1703 = vset.pattern.permute.xlu0 0
        %1704 = vperm.xlu0 %1703, %v1472
        %v1705 = vpop.permute.xlu0 %1704
        %1708 = vset.pattern.permute.xlu0 0
        %1709 = vperm.xlu0 %1708, %v1473
        %v1710 = vpop.permute.xlu0 %1709
        %1713 = vset.pattern.permute.xlu0 0
        %1714 = vperm.xlu0 %1713, %v1488
        %v1715 = vpop.permute.xlu0 %1714
        %1718 = vset.pattern.permute.xlu0 0
        %1719 = vperm.xlu0 %1718, %v1489
        %v1720 = vpop.permute.xlu0 %1719
        %1723 = vset.pattern.permute.xlu0 0
        %1724 = vperm.xlu0 %1723, %v1504
        %v1725 = vpop.permute.xlu0 %1724
        %1728 = vset.pattern.permute.xlu0 0
        %1729 = vperm.xlu0 %1728, %v1505
        %v1730 = vpop.permute.xlu0 %1729
        %1733 = vset.pattern.permute.xlu0 0
        %1734 = vperm.xlu0 %1733, %v1520
        %v1735 = vpop.permute.xlu0 %1734
        %1738 = vset.pattern.permute.xlu0 0
        %1739 = vperm.xlu0 %1738, %v1521
        %v1740 = vpop.permute.xlu0 %1739
        %1743 = vset.pattern.permute.xlu0 0
        %1744 = vperm.xlu0 %1743, %v1536
        %v1745 = vpop.permute.xlu0 %1744
        %1748 = vset.pattern.permute.xlu0 0
        %1749 = vperm.xlu0 %1748, %v1537
        %v1750 = vpop.permute.xlu0 %1749
        %1753 = vset.pattern.permute.xlu0 0
        %1754 = vperm.xlu0 %1753, %v1552
        %v1755 = vpop.permute.xlu0 %1754
        %1758 = vset.pattern.permute.xlu0 0
        %1759 = vperm.xlu0 %1758, %v1553
        %v1760 = vpop.permute.xlu0 %1759
        %1763 = vset.pattern.permute.xlu0 0
        %1764 = vperm.xlu0 %1763, %v1568
        %v1765 = vpop.permute.xlu0 %1764
        %1768 = vset.pattern.permute.xlu0 0
        %1769 = vperm.xlu0 %1768, %v1569
        %v1770 = vpop.permute.xlu0 %1769
        %1773 = vset.pattern.permute.xlu0 0
        %1774 = vperm.xlu0 %1773, %v1584
        %v1775 = vpop.permute.xlu0 %1774
        %1778 = vset.pattern.permute.xlu0 0
        %1779 = vperm.xlu0 %1778, %v1585
        %v1780 = vpop.permute.xlu0 %1779
        %1783 = vset.pattern.permute.xlu0 0
        %1784 = vperm.xlu0 %1783, %v1600
        %v1785 = vpop.permute.xlu0 %1784
        %1788 = vset.pattern.permute.xlu0 0
        %1789 = vperm.xlu0 %1788, %v1601
        %v1790 = vpop.permute.xlu0 %1789
        %1793 = vset.pattern.permute.xlu0 0
        %1794 = vperm.xlu0 %1793, %v1616
        %v1795 = vpop.permute.xlu0 %1794
        %1798 = vset.pattern.permute.xlu0 0
        %1799 = vperm.xlu0 %1798, %v1617
        %v1800 = vpop.permute.xlu0 %1799
        %1803 = vset.pattern.permute.xlu0 0
        %1804 = vperm.xlu0 %1803, %v1632
        %v1805 = vpop.permute.xlu0 %1804
        %1808 = vset.pattern.permute.xlu0 0
        %1809 = vperm.xlu0 %1808, %v1633
        %v1810 = vpop.permute.xlu0 %1809
        %1813 = vset.pattern.permute.xlu0 0
        %1814 = vperm.xlu0 %1813, %v1648
        %v1815 = vpop.permute.xlu0 %1814
        %1818 = vset.pattern.permute.xlu0 0
        %1819 = vperm.xlu0 %1818, %v1649
        %v1820 = vpop.permute.xlu0 %1819
        %1823 = vset.pattern.permute.xlu0 0
        %1824 = vperm.xlu0 %1823, %v1664
        %v1825 = vpop.permute.xlu0 %1824
        %1828 = vset.pattern.permute.xlu0 0
        %1829 = vperm.xlu0 %1828, %v1665
        %v1830 = vpop.permute.xlu0 %1829
        %1833 = vset.pattern.permute.xlu0 0
        %1834 = vperm.xlu0 %1833, %v1680
        %v1835 = vpop.permute.xlu0 %1834
        %1838 = vset.pattern.permute.xlu0 0
        %1839 = vperm.xlu0 %1838, %v1681
        %v1840 = vpop.permute.xlu0 %1839
        %v1842 = vmul.f32 %v419, %v1685
        %v1843 = vmul.f32 %v420, %v1690
        %v1844 = vmul.f32 %v421, %v1695
        %v1845 = vmul.f32 %v422, %v1700
        %v1846 = vmul.f32 %v423, %v1705
        %v1847 = vmul.f32 %v424, %v1710
        %v1848 = vmul.f32 %v425, %v1715
        %v1849 = vmul.f32 %v426, %v1720
        %v1850 = vmul.f32 %v427, %v1725
        %v1851 = vmul.f32 %v428, %v1730
        %v1852 = vmul.f32 %v429, %v1735
        %v1853 = vmul.f32 %v430, %v1740
        %v1854 = vmul.f32 %v431, %v1745
        %v1855 = vmul.f32 %v432, %v1750
        %v1856 = vmul.f32 %v433, %v1755
        %v1857 = vmul.f32 %v434, %v1760
        %v1858 = vmul.f32 %v435, %v1765
        %v1859 = vmul.f32 %v436, %v1770
        %v1860 = vmul.f32 %v437, %v1775
        %v1861 = vmul.f32 %v438, %v1780
        %v1862 = vmul.f32 %v439, %v1785
        %v1863 = vmul.f32 %v440, %v1790
        %v1864 = vmul.f32 %v441, %v1795
        %v1865 = vmul.f32 %v442, %v1800
        %v1866 = vmul.f32 %v443, %v1805
        %v1867 = vmul.f32 %v444, %v1810
        %v1868 = vmul.f32 %v445, %v1815
        %v1869 = vmul.f32 %v446, %v1820
        %v1870 = vmul.f32 %v447, %v1825
        %v1871 = vmul.f32 %v448, %v1830
        %v1872 = vmul.f32 %v449, %v1835
        %v1873 = vmul.f32 %v450, %v1840
        %v1874 = vsel %vm455, %v1842, 0.0
        %v1875 = vsel %vm455, %v1843, 0.0
        %v1876 = vadd.f32 %v1874, %v1875
        %v1877 = vrot.slane %v1876, 4
        %v1878 = vadd.f32 %v1876, %v1877
        %v1879 = vrot.slane %v1878, 2
        %v1880 = vadd.f32 %v1878, %v1879
        %v1881 = vrot.slane %v1880, 1
        %v1882 = vadd.f32 %v1880, %v1881
        %v1883 = vsel %vm455, %v1844, 0.0
        %v1884 = vsel %vm455, %v1845, 0.0
        %v1885 = vadd.f32 %v1883, %v1884
        %v1886 = vrot.slane %v1885, 4
        %v1887 = vadd.f32 %v1885, %v1886
        %v1888 = vrot.slane %v1887, 2
        %v1889 = vadd.f32 %v1887, %v1888
        %v1890 = vrot.slane %v1889, 1
        %v1891 = vadd.f32 %v1889, %v1890
        %v1892 = vsel %vm455, %v1846, 0.0
        %v1893 = vsel %vm455, %v1847, 0.0
        %v1894 = vadd.f32 %v1892, %v1893
        %v1895 = vrot.slane %v1894, 4
        %v1896 = vadd.f32 %v1894, %v1895
        %v1897 = vrot.slane %v1896, 2
        %v1898 = vadd.f32 %v1896, %v1897
        %v1899 = vrot.slane %v1898, 1
        %v1900 = vadd.f32 %v1898, %v1899
        %v1901 = vsel %vm455, %v1848, 0.0
        %v1902 = vsel %vm455, %v1849, 0.0
        %v1903 = vadd.f32 %v1901, %v1902
        %v1904 = vrot.slane %v1903, 4
        %v1905 = vadd.f32 %v1903, %v1904
        %v1906 = vrot.slane %v1905, 2
        %v1907 = vadd.f32 %v1905, %v1906
        %v1908 = vrot.slane %v1907, 1
        %v1909 = vadd.f32 %v1907, %v1908
        %v1910 = vsel %vm455, %v1850, 0.0
        %v1911 = vsel %vm455, %v1851, 0.0
        %v1912 = vadd.f32 %v1910, %v1911
        %v1913 = vrot.slane %v1912, 4
        %v1914 = vadd.f32 %v1912, %v1913
        %v1915 = vrot.slane %v1914, 2
        %v1916 = vadd.f32 %v1914, %v1915
        %v1917 = vrot.slane %v1916, 1
        %v1918 = vadd.f32 %v1916, %v1917
        %v1919 = vsel %vm455, %v1852, 0.0
        %v1920 = vsel %vm455, %v1853, 0.0
        %v1921 = vadd.f32 %v1919, %v1920
        %v1922 = vrot.slane %v1921, 4
        %v1923 = vadd.f32 %v1921, %v1922
        %v1924 = vrot.slane %v1923, 2
        %v1925 = vadd.f32 %v1923, %v1924
        %v1926 = vrot.slane %v1925, 1
        %v1927 = vadd.f32 %v1925, %v1926
        %v1928 = vsel %vm455, %v1854, 0.0
        %v1929 = vsel %vm455, %v1855, 0.0
        %v1930 = vadd.f32 %v1928, %v1929
        %v1931 = vrot.slane %v1930, 4
        %v1932 = vadd.f32 %v1930, %v1931
        %v1933 = vrot.slane %v1932, 2
        %v1934 = vadd.f32 %v1932, %v1933
        %v1935 = vrot.slane %v1934, 1
        %v1936 = vadd.f32 %v1934, %v1935
        %v1937 = vsel %vm455, %v1856, 0.0
        %v1938 = vsel %vm455, %v1857, 0.0
        %v1939 = vadd.f32 %v1937, %v1938
        %v1940 = vrot.slane %v1939, 4
        %v1941 = vadd.f32 %v1939, %v1940
        %v1942 = vrot.slane %v1941, 2
        %v1943 = vadd.f32 %v1941, %v1942
        %v1944 = vrot.slane %v1943, 1
        %v1945 = vadd.f32 %v1943, %v1944
        %v1946 = vsel %vm455, %v1858, 0.0
        %v1947 = vsel %vm455, %v1859, 0.0
        %v1948 = vadd.f32 %v1946, %v1947
        %v1949 = vrot.slane %v1948, 4
        %v1950 = vadd.f32 %v1948, %v1949
        %v1951 = vrot.slane %v1950, 2
        %v1952 = vadd.f32 %v1950, %v1951
        %v1953 = vrot.slane %v1952, 1
        %v1954 = vadd.f32 %v1952, %v1953
        %v1955 = vsel %vm455, %v1860, 0.0
        %v1956 = vsel %vm455, %v1861, 0.0
        %v1957 = vadd.f32 %v1955, %v1956
        %v1958 = vrot.slane %v1957, 4
        %v1959 = vadd.f32 %v1957, %v1958
        %v1960 = vrot.slane %v1959, 2
        %v1961 = vadd.f32 %v1959, %v1960
        %v1962 = vrot.slane %v1961, 1
        %v1963 = vadd.f32 %v1961, %v1962
        %v1964 = vsel %vm455, %v1862, 0.0
        %v1965 = vsel %vm455, %v1863, 0.0
        %v1966 = vadd.f32 %v1964, %v1965
        %v1967 = vrot.slane %v1966, 4
        %v1968 = vadd.f32 %v1966, %v1967
        %v1969 = vrot.slane %v1968, 2
        %v1970 = vadd.f32 %v1968, %v1969
        %v1971 = vrot.slane %v1970, 1
        %v1972 = vadd.f32 %v1970, %v1971
        %v1973 = vsel %vm455, %v1864, 0.0
        %v1974 = vsel %vm455, %v1865, 0.0
        %v1975 = vadd.f32 %v1973, %v1974
        %v1976 = vrot.slane %v1975, 4
        %v1977 = vadd.f32 %v1975, %v1976
        %v1978 = vrot.slane %v1977, 2
        %v1979 = vadd.f32 %v1977, %v1978
        %v1980 = vrot.slane %v1979, 1
        %v1981 = vadd.f32 %v1979, %v1980
        %v1982 = vsel %vm455, %v1866, 0.0
        %v1983 = vsel %vm455, %v1867, 0.0
        %v1984 = vadd.f32 %v1982, %v1983
        %v1985 = vrot.slane %v1984, 4
        %v1986 = vadd.f32 %v1984, %v1985
        %v1987 = vrot.slane %v1986, 2
        %v1988 = vadd.f32 %v1986, %v1987
        %v1989 = vrot.slane %v1988, 1
        %v1990 = vadd.f32 %v1988, %v1989
        %v1991 = vsel %vm455, %v1868, 0.0
        %v1992 = vsel %vm455, %v1869, 0.0
        %v1993 = vadd.f32 %v1991, %v1992
        %v1994 = vrot.slane %v1993, 4
        %v1995 = vadd.f32 %v1993, %v1994
        %v1996 = vrot.slane %v1995, 2
        %v1997 = vadd.f32 %v1995, %v1996
        %v1998 = vrot.slane %v1997, 1
        %v1999 = vadd.f32 %v1997, %v1998
        %v2000 = vsel %vm455, %v1870, 0.0
        %v2001 = vsel %vm455, %v1871, 0.0
        %v2002 = vadd.f32 %v2000, %v2001
        %v2003 = vrot.slane %v2002, 4
        %v2004 = vadd.f32 %v2002, %v2003
        %v2005 = vrot.slane %v2004, 2
        %v2006 = vadd.f32 %v2004, %v2005
        %v2007 = vrot.slane %v2006, 1
        %v2008 = vadd.f32 %v2006, %v2007
        %v2009 = vsel %vm455, %v1872, 0.0
        %v2010 = vsel %vm455, %v1873, 0.0
        %v2011 = vadd.f32 %v2009, %v2010
        %v2012 = vrot.slane %v2011, 4
        %v2013 = vadd.f32 %v2011, %v2012
        %v2014 = vrot.slane %v2013, 2
        %v2015 = vadd.f32 %v2013, %v2014
        %v2016 = vrot.slane %v2015, 1
        %v2017 = vadd.f32 %v2015, %v2016
        %v2034 = vsel %vm1034, %v1891, %v1882
        %v2035 = vsel %vm1036, %v1900, %v2034
        %v2036 = vsel %vm1038, %v1909, %v2035
        %v2037 = vsel %vm1040, %v1918, %v2036
        %v2038 = vsel %vm1042, %v1927, %v2037
        %v2039 = vsel %vm1044, %v1936, %v2038
        %v2040 = vsel %vm1046, %v1945, %v2039
        %v2041 = vsel %vm1034, %v1963, %v1954
        %v2042 = vsel %vm1036, %v1972, %v2041
        %v2043 = vsel %vm1038, %v1981, %v2042
        %v2044 = vsel %vm1040, %v1990, %v2043
        %v2045 = vsel %vm1042, %v1999, %v2044
        %v2046 = vsel %vm1044, %v2008, %v2045
        %v2047 = vsel %vm1046, %v2017, %v2046
        %2050 = vst.msk [vmem:[%s402] sm:$0xff] %vm455, %v2040
        %2051 = vst.msk [vmem:[%s402 + $0x8] sm:$0xff] %vm455, %v2047
        %v2052 = vperm.slane %v1685, %v983
        %v2053 = vperm.slane %v1690, %v985
        %v2054 = vsel %vm987, %v2053, %v2052
        %v2055 = vperm.slane %v1695, %v983
        %v2056 = vperm.slane %v1700, %v985
        %v2057 = vsel %vm987, %v2056, %v2055
        %v2058 = vperm.slane %v1705, %v983
        %v2059 = vperm.slane %v1710, %v985
        %v2060 = vsel %vm987, %v2059, %v2058
        %v2061 = vperm.slane %v1715, %v983
        %v2062 = vperm.slane %v1720, %v985
        %v2063 = vsel %vm987, %v2062, %v2061
        %v2064 = vperm.slane %v1725, %v983
        %v2065 = vperm.slane %v1730, %v985
        %v2066 = vsel %vm987, %v2065, %v2064
        %v2067 = vperm.slane %v1735, %v983
        %v2068 = vperm.slane %v1740, %v985
        %v2069 = vsel %vm987, %v2068, %v2067
        %v2070 = vperm.slane %v1745, %v983
        %v2071 = vperm.slane %v1750, %v985
        %v2072 = vsel %vm987, %v2071, %v2070
        %v2073 = vperm.slane %v1755, %v983
        %v2074 = vperm.slane %v1760, %v985
        %v2075 = vsel %vm987, %v2074, %v2073
        %v2076 = vperm.slane %v1765, %v983
        %v2077 = vperm.slane %v1770, %v985
        %v2078 = vsel %vm987, %v2077, %v2076
        %v2079 = vperm.slane %v1775, %v983
        %v2080 = vperm.slane %v1780, %v985
        %v2081 = vsel %vm987, %v2080, %v2079
        %v2082 = vperm.slane %v1785, %v983
        %v2083 = vperm.slane %v1790, %v985
        %v2084 = vsel %vm987, %v2083, %v2082
        %v2085 = vperm.slane %v1795, %v983
        %v2086 = vperm.slane %v1800, %v985
        %v2087 = vsel %vm987, %v2086, %v2085
        %v2088 = vperm.slane %v1805, %v983
        %v2089 = vperm.slane %v1810, %v985
        %v2090 = vsel %vm987, %v2089, %v2088
        %v2091 = vperm.slane %v1815, %v983
        %v2092 = vperm.slane %v1820, %v985
        %v2093 = vsel %vm987, %v2092, %v2091
        %v2094 = vperm.slane %v1825, %v983
        %v2095 = vperm.slane %v1830, %v985
        %v2096 = vsel %vm987, %v2095, %v2094
        %v2097 = vperm.slane %v1835, %v983
        %v2098 = vperm.slane %v1840, %v985
        %v2099 = vsel %vm987, %v2098, %v2097
        %v2100 = vsel %vm1034, %v2057, %v2054
        %v2101 = vsel %vm1036, %v2060, %v2100
        %v2102 = vsel %vm1038, %v2063, %v2101
        %v2103 = vsel %vm1040, %v2066, %v2102
        %v2104 = vsel %vm1042, %v2069, %v2103
        %v2105 = vsel %vm1044, %v2072, %v2104
        %v2106 = vsel %vm1046, %v2075, %v2105
        %v2107 = vsel %vm1034, %v2081, %v2078
        %v2108 = vsel %vm1036, %v2084, %v2107
        %v2109 = vsel %vm1038, %v2087, %v2108
        %v2110 = vsel %vm1040, %v2090, %v2109
        %v2111 = vsel %vm1042, %v2093, %v2110
        %v2112 = vsel %vm1044, %v2096, %v2111
        %v2113 = vsel %vm1046, %v2099, %v2112
        %2116 = vst.msk [vmem:[%s417] sm:$0xff] %vm1057, %v2106
        %2117 = vst.msk [vmem:[%s417 + $0x8] sm:$0xff] %vm1057, %v2113
        %s2118 = sand.u32 %s195, 1
        %s2119 = scalar_lea.sflag [#allocation4], %s2118
        %s2120 = sand.u32 %s195, 1
        %s2121 = smul.addr %s2120, 16
        %s2122 = scalar_lea.vmem [#allocation10], %s2121
        %s2123 = smul.u32 2, %s30
        %p2124 = scmp.lt.s32.totalorder %s2123, 3
        %s2125 = scalar_select %p2124, %s2123, 3
        %s2126 = smul.addr %s2125, 8
        %s2127 = scalar_lea.vmem %s8, %s2126
        // Predicated region
        $region65: #{tpu_custom_call.1} parent=47 // pred_check
          %p2128 = pneg %p205
        $region66: #{tpu_custom_call.1} parent=47 // pred_check_branch
          %2130 = sbr.rel (%p2128) target = $region68
        $region67: #{tpu_custom_call.1} parent=47 // pred_region
          %s2131 = smul.u32 2, %s30
          %2133 = vsyncadd %s2119, 0
          %s2134 = smul.addr %s2131, 8
          %s2135 = scalar_lea.hbm %s7, %s2134
          %s2136 = sshll.u32 %s2122, 4
          %s2137 = int_to_ptr.vmem [resolvable:$true] %s2136
          %s2138 = sshll.u32 %s2135, 4
          %s2139 = int_to_ptr.hbm [resolvable:$true] %s2138
          %2144 = dma.vmem_to_hbm [thread:$0]  %s2137, 256, %s2139, %s2119, 128, 128, 8
        $region68: #{tpu_custom_call.1} parent=47 // pred_fallthru
          _
        // Predicated region
        $region69: #{tpu_custom_call.1} parent=47 // pred_check
          %p2145 = pneg %p231
        $region70: #{tpu_custom_call.1} parent=47 // pred_check_branch
          %2147 = sbr.rel (%p2145) target = $region72
        $region71: #{tpu_custom_call.1} parent=47 // pred_region
          %s2148 = smul.u32 2, %s30
        $region72: #{tpu_custom_call.1} parent=47 // pred_fallthru
          _
      $region48: #{tpu_custom_call.1} parent=5 // pred_fallthru
        _
      %p2149 = scmp.le.s32.totalorder 2, %s25
      // Predicated region
      $region73: #{tpu_custom_call.1} parent=5 // pred_check
        %p2150 = pneg %p2149
      $region74: #{tpu_custom_call.1} parent=5 // pred_check_branch
        %2152 = sbr.rel (%p2150) target = $region76
      $region75: #{tpu_custom_call.1} parent=5 // pred_region
        %s2153 = ssub.s32 %s25, 2
        // Predicated region
        $region77: #{tpu_custom_call.1} parent=75 // pred_check
          %p2154 = pneg %p211
        $region78: #{tpu_custom_call.1} parent=75 // pred_check_branch
          %2156 = sbr.rel (%p2154) target = $region80
        $region79: #{tpu_custom_call.1} parent=75 // pred_region
          %s2157 = sand.u32 %s196, 1
          %s2158 = scalar_lea.sflag [#allocation4], %s2157
          %s2159 = sand.u32 %s196, 1
          %s2160 = smul.addr %s2159, 16
          %s2161 = scalar_lea.vmem [#allocation10], %s2160
          %2163 = dma.done %s2158, 256
        $region80: #{tpu_custom_call.1} parent=75 // pred_fallthru
          _
        // Predicated region
        $region81: #{tpu_custom_call.1} parent=75 // pred_check
          %p2164 = pneg %p237
        $region82: #{tpu_custom_call.1} parent=75 // pred_check_branch
          %2166 = sbr.rel (%p2164) target = $region84
        $region83: #{tpu_custom_call.1} parent=75 // pred_region
          %s2167 = smul.u32 2, %s31
          %p2168 = scmp.lt.s32.totalorder %s2167, 3
          %s2169 = scalar_select %p2168, %s2167, 3
          %s2170 = smul.addr %s2169, 8
          %s2171 = scalar_lea.vmem %s8, %s2170
        $region84: #{tpu_custom_call.1} parent=75 // pred_fallthru
          _
      $region76: #{tpu_custom_call.1} parent=5 // pred_fallthru
        _
    $region6: #{tpu_custom_call.1} parent=1 // loop_footer
      %s29 = sadd.s32 1, %s25
    $region7: #{tpu_custom_call.1} parent=1 // loop_footer_branch
      %24 = sbr.rel target = $region3
    $region8: #{tpu_custom_call.1} parent=1 // loop_exit
      _
    %2172 = vsyncpa [#allocation3], 1
    %s2173 = scalar_lea.sflag [#allocation3], 1
    %2174 = vsyncpa %s2173, 1
    %2175 = vsyncpa [#allocation6], 1
    %s2176 = scalar_lea.sflag [#allocation6], 1
    %2177 = vsyncpa %s2176, 1
    %2178 = vsyncpa [#allocation9], 1
    %2179 = vsyncpa [#allocation4], 1
    %s2180 = scalar_lea.sflag [#allocation4], 1
    %2181 = vsyncpa %s2180, 1

</llo_original>
